<compile_context>
chip_gen: v7x
topology: tpu7x:2x2x1
jax: 0.10.0
libtpu: 0.0.40
codegen_flags: <defaults>
</compile_context>

<pallas_src>
import jax
import jax.numpy as jnp
from jax.experimental import pallas as pl
from jax.experimental.pallas import tpu as pltpu

# ----------------------------- config (small, lane-dense) -------------------
B = 2                    # batch
TSIG = 256               # raw signal length (time samples)
HOP = 8                  # frame hop / length for the synthetic "preprocessor"
FEAT = 16                # features per frame (stand-in for n_mels)
SUB = 4                  # total time subsampling factor (sampling_num=2 -> 4x)
D = 128                  # d_model (scaled 176 -> 128: lane-dense)
NH = 4                   # n_heads
DH = D // NH             # head dim (32)
FF = 4 * D               # ff_expansion_factor = 4
K = 7                    # conv_kernel_size (scaled from 31, odd)
PAD = (K - 1) // 2
NLAYERS = 2              # n_layers (scaled from 16)
NCLASSES = 16            # num_classes (scaled from 128)
VOCAB = NCLASSES + 1     # + CTC blank
LN_EPS = 1e-5
MATMUL_DTYPE = jnp.bfloat16   # MXU input dtype (f32 accumulate)

T0 = TSIG // HOP         # frames after preprocessing            (32)
TENC = T0 // SUB         # encoder time steps                    (8)
# Row batching (perf feedback): B_BLK sequences per grid step so every matmul
# sees B_BLK*TENC rows (target ~128).  At B=2 this trades v7x megacore batch
# parallelism for MXU row utilization; with realistic B you get both (the
# layer axis still gives every core a multi-step pipelined grid).
B_BLK = min(B, max(1, 128 // TENC))
BT = B_BLK * TENC
assert B % B_BLK == 0

# (name, per-layer shape, kind) in kernel argument order.  All arrays are
# stacked with a leading NLAYERS axis and streamed one layer per grid step.
LAYER_PARAM_SPECS = [
    ("ln1_g", (1, D), "ones"), ("ln1_b", (1, D), "zeros"),
    ("ff1_w1", (D, FF), "mm"), ("ff1_b1", (1, FF), "zeros"),
    ("ff1_w2", (FF, D), "mm"), ("ff1_b2", (1, D), "zeros"),
    ("lnA_g", (1, D), "ones"), ("lnA_b", (1, D), "zeros"),
    ("qkv_w", (D, 3 * D), "mm_qkv"), ("qkv_b", (1, 3 * D), "zeros"),
    ("att_o_w", (D, D), "mm"), ("att_o_b", (1, D), "zeros"),
    ("lnC_g", (1, D), "ones"), ("lnC_b", (1, D), "zeros"),
    ("pw1_w", (D, 2 * D), "mm"), ("pw1_b", (1, 2 * D), "zeros"),   # fused GLU
    ("dw_w", (K, D), "w_f32"),
    ("bn_g", (1, D), "ones"), ("bn_b", (1, D), "zeros"),
    ("pw2_w", (D, D), "mm"), ("pw2_b", (1, D), "zeros"),
    ("ln2_g", (1, D), "ones"), ("ln2_b", (1, D), "zeros"),
    ("ff2_w1", (D, FF), "mm"), ("ff2_b1", (1, FF), "zeros"),
    ("ff2_w2", (FF, D), "mm"), ("ff2_b2", (1, D), "zeros"),
    ("lnF_g", (1, D), "ones"), ("lnF_b", (1, D), "zeros"),
]


# ----------------------------- fused encoder kernel -------------------------
def _encoder_kernel(lens_ref, x_ref, pe_ref, *rest):
    """grid = (batch_block, layer).  One full Conformer block per invocation;
    activations live in the x_acc VMEM scratch across the whole layer axis."""
    *w_refs, o_ref, x_acc = rest
    p = {name: r for (name, _, _), r in zip(LAYER_PARAM_SPECS, w_refs)}
    bb = pl.program_id(0)
    l = pl.program_id(1)

    def W(name):
        return p[name][0]                                     # drop layer dim

    def ln(v, g, b):
        mean = jnp.mean(v, axis=-1, keepdims=True)
        var = jnp.mean((v - mean) ** 2, axis=-1, keepdims=True)
        return (v - mean) * jax.lax.rsqrt(var + LN_EPS) * W(g) + W(b)

    def mm(v, wname, bname):
        y = jnp.dot(v.astype(MATMUL_DTYPE), W(wname),
                    preferred_element_type=jnp.float32)
        return y + W(bname)

    def swish(v):
        return v * jax.nn.sigmoid(v)

    # ---- load activations + positional encoding into the resident scratch ----
    @pl.when(l == 0)
    def _():
        x0 = x_ref[...].astype(jnp.float32) + pe_ref[...][None, :, :]
        x_acc[...] = x0.reshape(BT, D)

    x = x_acc[...]                                            # (BT, D) f32

    # ---- per-sequence length masks (attention keys, conv taps) ----
    kidx = jax.lax.broadcasted_iota(jnp.int32, (TENC, TENC), 1)
    tidx = jax.lax.broadcasted_iota(jnp.int32, (TENC, 1), 0)
    att_bias_l, row_valid_l = [], []
    for b in range(B_BLK):
        L_b = lens_ref[bb * B_BLK + b]
        att_bias_l.append(jnp.where(kidx < L_b, 0.0, -1e9))
        row_valid_l.append((tidx < L_b).astype(jnp.float32))
    att_bias = jnp.stack(att_bias_l)                          # (B_BLK, T, T)
    row_valid = jnp.concatenate(row_valid_l, axis=0)          # (BT, 1)

    # ================= feed-forward module 1 (half residual) ================
    h = ln(x, "ln1_g", "ln1_b")
    h = swish(mm(h, "ff1_w1", "ff1_b1"))
    h = mm(h, "ff1_w2", "ff1_b2")
    x = x + 0.5 * h

    # ================= multi-head self-attention =============================
    h = ln(x, "lnA_g", "lnA_b")
    qkv = mm(h, "qkv_w", "qkv_b")        # (BT, 3D); 1/sqrt(DH) folded into Q
    o_heads = []
    for hh in range(NH):
        q = qkv[:, hh * DH:(hh + 1) * DH].reshape(B_BLK, TENC, DH)
        k = qkv[:, D + hh * DH:D + (hh + 1) * DH].reshape(B_BLK, TENC, DH)
        v = qkv[:, 2 * D + hh * DH:2 * D + (hh + 1) * DH].reshape(B_BLK, TENC, DH)
        s = jnp.einsum('bqd,bkd->bqk', q.astype(MATMUL_DTYPE),
                       k.astype(MATMUL_DTYPE),
                       preferred_element_type=jnp.float32)    # (B_BLK, T, T)
        s = s + att_bias
        m = jnp.max(s, axis=-1, keepdims=True)
        e = jnp.exp(s - m)
        prob = (e / jnp.sum(e, axis=-1, keepdims=True)).astype(MATMUL_DTYPE)
        o_heads.append(jnp.einsum('bqk,bkd->bqd', prob, v.astype(MATMUL_DTYPE),
                                  preferred_element_type=jnp.float32))
    o = jnp.concatenate(o_heads, axis=-1).reshape(BT, D)
    x = x + mm(o, "att_o_w", "att_o_b")

    # ================= convolution module =====================================
    h = ln(x, "lnC_g", "lnC_b")
    y = mm(h, "pw1_w", "pw1_b")                               # (BT, 2D) fused GLU
    hg = y[:, :D] * jax.nn.sigmoid(y[:, D:])                  # 128-lane-aligned split
    hg = hg * row_valid                                       # zero padded frames
    # depthwise 'same' conv: per-sequence sublane rolls + edge masks
    # (no VMEM pad-scratch round trip / misaligned masked stores).
    hg3 = hg.reshape(B_BLK, TENC, D)
    dw = W("dw_w")                                            # (K, D) f32
    tpos = jax.lax.broadcasted_iota(jnp.int32, (B_BLK, TENC, D), 1)
    acc = jnp.zeros((B_BLK, TENC, D), jnp.float32)
    for kk in range(K):
        off = kk - PAD                                        # -3 .. 3
        tap = hg3 if off == 0 else pltpu.roll(hg3, shift=(-off) % TENC, axis=1)
        valid = jnp.logical_and(tpos + off >= 0, tpos + off < TENC)
        acc = acc + jnp.where(valid, tap, 0.0) * dw[kk:kk + 1, :]
    h = acc.reshape(BT, D)
    # eval-mode BatchNorm (identity running stats) -> gamma*x + beta, then swish
    h = swish(h * W("bn_g") + W("bn_b"))
    h = mm(h, "pw2_w", "pw2_b")
    x = x + h

    # ================= feed-forward module 2 (half residual) ================
    h = ln(x, "ln2_g", "ln2_b")
    h = swish(mm(h, "ff2_w1", "ff2_b1"))
    h = mm(h, "ff2_w2", "ff2_b2")
    x = x + 0.5 * h

    # ================= final layernorm of the block ===========================
    x = ln(x, "lnF_g", "lnF_b")
    x_acc[...] = x

    @pl.when(l == pl.num_programs(1) - 1)
    def _():
        o_ref[...] = x.reshape(B_BLK, TENC, D).astype(o_ref.dtype)


def conformer_encoder(x, pe, enc_len, enc):
    """x: (B, TENC, D) f32 -> (B, TENC, D) f32.  ALL layers in one pallas_call."""
    Bn, T_, Dm = x.shape
    assert T_ == TENC and Dm == D and Bn % B_BLK == 0
    nbb = Bn // B_BLK

    in_specs = [
        pl.BlockSpec(memory_space=pltpu.MemorySpace.SMEM),          # enc_len
        pl.BlockSpec((B_BLK, T_, Dm), lambda bb, l: (bb, 0, 0)),    # x (resident over l)
        pl.BlockSpec((T_, Dm), lambda bb, l: (0, 0)),               # positional enc
    ]
    weight_vals = []
    for name, shape, _ in LAYER_PARAM_SPECS:
        weight_vals.append(enc[name])
        in_specs.append(pl.BlockSpec((1,) + shape, lambda bb, l: (l, 0, 0)))

    return pl.pallas_call(
        _encoder_kernel,
        grid=(nbb, NLAYERS),
        in_specs=in_specs,
        out_specs=pl.BlockSpec((B_BLK, T_, Dm), lambda bb, l: (bb, 0, 0)),
        out_shape=jax.ShapeDtypeStruct((Bn, T_, Dm), jnp.float32),
        scratch_shapes=[pltpu.VMEM((B_BLK * T_, Dm), jnp.float32)],
        compiler_params=pltpu.CompilerParams(
            dimension_semantics=("parallel", "arbitrary"),
            # explicit VMEM budget; re-derive (T-tiling / flash attention)
            # before scaling T on v7x's 64 MiB VMEM.
            vmem_limit_bytes=32 * 1024 * 1024),
    )(enc_len, x, pe, *weight_vals)


# ----------------------------- model (glue, plain XLA) ----------------------
def sinusoidal_pe(t, d):
    pos = jnp.arange(t, dtype=jnp.float32)[:, None]
    i = jnp.arange(d, dtype=jnp.float32)[None, :]
    angle = pos / jnp.power(10000.0, 2.0 * jnp.floor(i / 2.0) / d)
    return jnp.where((jnp.arange(d)[None, :] % 2) == 0, jnp.sin(angle), jnp.cos(angle))


def conformer_forward(params, signals, lengths):
    """signals: (B, TSIG) f32, lengths: (B,) int32 ->
       (log_probs (B,T,VOCAB), encoded_len (B,), greedy_predictions (B,T))."""
    Bn, Tsig = signals.shape

    # preprocessor: framing + learned projection (mel-spectrogram stand-in).
    # Tiny matmuls -> plain XLA (a pallas_call launch would dominate).
    t0 = Tsig // HOP
    frames = signals.reshape(Bn, t0, HOP)
    feat = jax.nn.relu(jnp.dot(frames, params["pre_w"]) + params["pre_b"])
    feat_len = lengths // HOP

    # pre-encoder subsampling (4x): frame stacking + projection (XLA).
    t_enc = t0 // SUB
    stacked = feat.reshape(Bn, t_enc, SUB * FEAT)
    x = jnp.dot(stacked, params["sub_w"]) + params["sub_b"]          # (B, T, D)
    encoded_len = (feat_len // SUB).astype(jnp.int32)

    # conformer encoder: ALL layers fused in a single Pallas kernel
    # (positional encoding added inside the kernel at layer 0).
    pe = sinusoidal_pe(t_enc, D)
    enc = conformer_encoder(x, pe, encoded_len, params["enc"])

    # decoder: 1x1 conv (= dense) + log_softmax + greedy argmax (XLA;
    # VOCAB=17 is lane-sparse, keeping it out of Pallas avoids masked stores).
    logits = jnp.dot(enc, params["dec_w"]) + params["dec_b"]
    log_probs = jax.nn.log_softmax(logits, axis=-1)
    greedy_predictions = jnp.argmax(log_probs, axis=-1)
    return log_probs, encoded_len, greedy_predictions


# ----------------------------- params ---------------------------------------
def init_params(key):
    ks = iter(jax.random.split(key, 256))

    def rnd(shape, scale=0.05):
        return scale * jax.random.normal(next(ks), shape, jnp.float32)

    enc = {}
    for name, shape, kind in LAYER_PARAM_SPECS:
        full = (NLAYERS,) + shape
        if kind == "mm":
            enc[name] = rnd(full).astype(MATMUL_DTYPE)
        elif kind == "mm_qkv":
            w = rnd(full)
            w = w.at[:, :, :D].multiply(1.0 / (DH ** 0.5))   # fold q-scale
            enc[name] = w.astype(MATMUL_DTYPE)
        elif kind == "w_f32":
            enc[name] = rnd(full)                            # depthwise (VPU) weight
        elif kind == "ones":
            enc[name] = jnp.ones(full, jnp.float32)
        else:
            enc[name] = jnp.zeros(full, jnp.float32)

    return {
        "enc": enc,
        "pre_w": rnd((HOP, FEAT)), "pre_b": jnp.zeros((FEAT,), jnp.float32),
        "sub_w": rnd((SUB * FEAT, D)), "sub_b": jnp.zeros((D,), jnp.float32),
        "dec_w": rnd((D, VOCAB)), "dec_b": jnp.zeros((VOCAB,), jnp.float32),
    }


# ----------------------------- main ------------------------------------------
if __name__ == "__main__":
    key = jax.random.PRNGKey(0)
    signals = jax.random.normal(key, (B, TSIG), jnp.float32)
    lengths = jnp.array([TSIG, TSIG - 56], jnp.int32)
    params = init_params(jax.random.PRNGKey(42))

    fwd = jax.jit(conformer_forward)
    log_probs, encoded_len, greedy = fwd(params, signals, lengths)
    jax.block_until_ready((log_probs, encoded_len, greedy))

    T_out = TSIG // HOP // SUB
    assert log_probs.shape == (B, T_out, VOCAB)
    assert encoded_len.shape == (B,)
    assert greedy.shape == (B, T_out)
    assert bool(jnp.all(jnp.isfinite(log_probs)))
    print("KERNEL_OK")
</pallas_src>

<mosaic_0001>
module attributes {stable_mosaic.version = 11 : i64} {
  func.func @_encoder_kernel(%arg0: i32, %arg1: i32, %arg2: memref<2xi32, #tpu.memory_space<smem>>, %arg3: memref<2x8x128xf32, #tpu.memory_space<vmem>>, %arg4: memref<8x128xf32, #tpu.memory_space<vmem>>, %arg5: memref<1x1x128xf32, #tpu.memory_space<vmem>>, %arg6: memref<1x1x128xf32, #tpu.memory_space<vmem>>, %arg7: memref<1x128x512xbf16, #tpu.memory_space<vmem>>, %arg8: memref<1x1x512xf32, #tpu.memory_space<vmem>>, %arg9: memref<1x512x128xbf16, #tpu.memory_space<vmem>>, %arg10: memref<1x1x128xf32, #tpu.memory_space<vmem>>, %arg11: memref<1x1x128xf32, #tpu.memory_space<vmem>>, %arg12: memref<1x1x128xf32, #tpu.memory_space<vmem>>, %arg13: memref<1x128x384xbf16, #tpu.memory_space<vmem>>, %arg14: memref<1x1x384xf32, #tpu.memory_space<vmem>>, %arg15: memref<1x128x128xbf16, #tpu.memory_space<vmem>>, %arg16: memref<1x1x128xf32, #tpu.memory_space<vmem>>, %arg17: memref<1x1x128xf32, #tpu.memory_space<vmem>>, %arg18: memref<1x1x128xf32, #tpu.memory_space<vmem>>, %arg19: memref<1x128x256xbf16, #tpu.memory_space<vmem>>, %arg20: memref<1x1x256xf32, #tpu.memory_space<vmem>>, %arg21: memref<1x7x128xf32, #tpu.memory_space<vmem>>, %arg22: memref<1x1x128xf32, #tpu.memory_space<vmem>>, %arg23: memref<1x1x128xf32, #tpu.memory_space<vmem>>, %arg24: memref<1x128x128xbf16, #tpu.memory_space<vmem>>, %arg25: memref<1x1x128xf32, #tpu.memory_space<vmem>>, %arg26: memref<1x1x128xf32, #tpu.memory_space<vmem>>, %arg27: memref<1x1x128xf32, #tpu.memory_space<vmem>>, %arg28: memref<1x128x512xbf16, #tpu.memory_space<vmem>>, %arg29: memref<1x1x512xf32, #tpu.memory_space<vmem>>, %arg30: memref<1x512x128xbf16, #tpu.memory_space<vmem>>, %arg31: memref<1x1x128xf32, #tpu.memory_space<vmem>>, %arg32: memref<1x1x128xf32, #tpu.memory_space<vmem>>, %arg33: memref<1x1x128xf32, #tpu.memory_space<vmem>>, %arg34: memref<2x8x128xf32, #tpu.memory_space<vmem>>, %arg35: memref<16x128xf32, #tpu.memory_space<vmem>>) attributes {dimension_semantics = [#tpu.dimension_semantics<parallel>, #tpu.dimension_semantics<arbitrary>], iteration_bounds = array<i64: 1, 2>, scalar_prefetch = 0 : i64, scratch_operands = 1 : i64, tpu.core_type = #tpu.core_type<tc>, window_params = [{transform_indices = @transform_0, window_bounds = array<i64: 2>}, {transform_indices = @transform_1, window_bounds = array<i64: 2, 8, 128>}, {pipeline_mode = #tpu.pipeline_mode<synchronous>, transform_indices = @transform_2, window_bounds = array<i64: 8, 128>}, {transform_indices = @transform_3, window_bounds = array<i64: 1, 1, 128>}, {transform_indices = @transform_4, window_bounds = array<i64: 1, 1, 128>}, {transform_indices = @transform_5, window_bounds = array<i64: 1, 128, 512>}, {transform_indices = @transform_6, window_bounds = array<i64: 1, 1, 512>}, {transform_indices = @transform_7, window_bounds = array<i64: 1, 512, 128>}, {transform_indices = @transform_8, window_bounds = array<i64: 1, 1, 128>}, {transform_indices = @transform_9, window_bounds = array<i64: 1, 1, 128>}, {transform_indices = @transform_10, window_bounds = array<i64: 1, 1, 128>}, {transform_indices = @transform_11, window_bounds = array<i64: 1, 128, 384>}, {transform_indices = @transform_12, window_bounds = array<i64: 1, 1, 384>}, {transform_indices = @transform_13, window_bounds = array<i64: 1, 128, 128>}, {transform_indices = @transform_14, window_bounds = array<i64: 1, 1, 128>}, {transform_indices = @transform_15, window_bounds = array<i64: 1, 1, 128>}, {transform_indices = @transform_16, window_bounds = array<i64: 1, 1, 128>}, {transform_indices = @transform_17, window_bounds = array<i64: 1, 128, 256>}, {transform_indices = @transform_18, window_bounds = array<i64: 1, 1, 256>}, {transform_indices = @transform_19, window_bounds = array<i64: 1, 7, 128>}, {transform_indices = @transform_20, window_bounds = array<i64: 1, 1, 128>}, {transform_indices = @transform_21, window_bounds = array<i64: 1, 1, 128>}, {transform_indices = @transform_22, window_bounds = array<i64: 1, 128, 128>}, {transform_indices = @transform_23, window_bounds = array<i64: 1, 1, 128>}, {transform_indices = @transform_24, window_bounds = array<i64: 1, 1, 128>}, {transform_indices = @transform_25, window_bounds = array<i64: 1, 1, 128>}, {transform_indices = @transform_26, window_bounds = array<i64: 1, 128, 512>}, {transform_indices = @transform_27, window_bounds = array<i64: 1, 1, 512>}, {transform_indices = @transform_28, window_bounds = array<i64: 1, 512, 128>}, {transform_indices = @transform_29, window_bounds = array<i64: 1, 1, 128>}, {transform_indices = @transform_30, window_bounds = array<i64: 1, 1, 128>}, {transform_indices = @transform_31, window_bounds = array<i64: 1, 1, 128>}, {transform_indices = @transform_32, window_bounds = array<i64: 2, 8, 128>}]} {
    %c0_i32 = arith.constant 0 : i32
    %0 = arith.cmpi eq, %arg1, %c0_i32 : i32
    %1 = arith.extui %0 : i1 to i32
    %c0_i32_0 = arith.constant 0 : i32
    %2 = arith.cmpi ne, %1, %c0_i32_0 : i32
    scf.if %2 {
      %c0_187 = arith.constant 0 : index
      %c0_188 = arith.constant 0 : index
      %c0_189 = arith.constant 0 : index
      %492 = vector.load %arg3[%c0_187, %c0_188, %c0_189] : memref<2x8x128xf32, #tpu.memory_space<vmem>>, vector<2x8x128xf32>
      %c0_190 = arith.constant 0 : index
      %c0_191 = arith.constant 0 : index
      %493 = vector.load %arg4[%c0_190, %c0_191] : memref<8x128xf32, #tpu.memory_space<vmem>>, vector<8x128xf32>
      %494 = vector.shape_cast %493 : vector<8x128xf32> to vector<1x8x128xf32>
      %495 = vector.broadcast %494 : vector<1x8x128xf32> to vector<2x8x128xf32>
      %496 = arith.addf %492, %495 : vector<2x8x128xf32>
      %497 = vector.shape_cast %496 : vector<2x8x128xf32> to vector<16x128xf32>
      %c0_192 = arith.constant 0 : index
      %c0_193 = arith.constant 0 : index
      %498 = vector.load %arg35[%c0_192, %c0_193] : memref<16x128xf32, #tpu.memory_space<vmem>>, vector<16x128xf32>
      tpu.vector_store %arg35[%c0_192, %c0_193], %497 {strides = array<i32>} : memref<16x128xf32, #tpu.memory_space<vmem>>, vector<16x128xf32>,
    } else {
    }
    %c0 = arith.constant 0 : index
    %c0_1 = arith.constant 0 : index
    %3 = vector.load %arg35[%c0, %c0_1] : memref<16x128xf32, #tpu.memory_space<vmem>>, vector<16x128xf32>
    %4 = tpu.iota {dimensions = array<i32: 1>} : vector<8x8xi32>
    %5 = tpu.iota {dimensions = array<i32: 0>} : vector<8x1xi32>
    %c2_i32 = arith.constant 2 : i32
    %6 = arith.muli %arg0, %c2_i32 : i32
    %c0_i32_2 = arith.constant 0 : i32
    %7 = arith.addi %6, %c0_i32_2 : i32
    %8 = arith.index_cast %7 : i32 to index
    %9 = memref.load %arg2[%8] : memref<2xi32, #tpu.memory_space<smem>>
    %10 = vector.broadcast %9 : i32 to vector<8x8xi32>
    %11 = arith.cmpi slt, %4, %10 : vector<8x8xi32>
    %cst = arith.constant 0.000000e+00 : f32
    %cst_3 = arith.constant -1.000000e+09 : f32
    %12 = vector.broadcast %cst : f32 to vector<8x8xf32>
    %13 = vector.broadcast %cst_3 : f32 to vector<8x8xf32>
    %14 = arith.select %11, %12, %13 : vector<8x8xi1>, vector<8x8xf32>
    %15 = vector.broadcast %9 : i32 to vector<8x1xi32>
    %16 = arith.cmpi slt, %5, %15 : vector<8x1xi32>
    %17 = arith.extui %16 : vector<8x1xi1> to vector<8x1xi32>
    %18 = arith.sitofp %17 : vector<8x1xi32> to vector<8x1xf32>
    %c2_i32_4 = arith.constant 2 : i32
    %19 = arith.muli %arg0, %c2_i32_4 : i32
    %c1_i32 = arith.constant 1 : i32
    %20 = arith.addi %19, %c1_i32 : i32
    %21 = arith.index_cast %20 : i32 to index
    %22 = memref.load %arg2[%21] : memref<2xi32, #tpu.memory_space<smem>>
    %23 = vector.broadcast %22 : i32 to vector<8x8xi32>
    %24 = arith.cmpi slt, %4, %23 : vector<8x8xi32>
    %cst_5 = arith.constant 0.000000e+00 : f32
    %cst_6 = arith.constant -1.000000e+09 : f32
    %25 = vector.broadcast %cst_5 : f32 to vector<8x8xf32>
    %26 = vector.broadcast %cst_6 : f32 to vector<8x8xf32>
    %27 = arith.select %24, %25, %26 : vector<8x8xi1>, vector<8x8xf32>
    %28 = vector.broadcast %22 : i32 to vector<8x1xi32>
    %29 = arith.cmpi slt, %5, %28 : vector<8x1xi32>
    %30 = arith.extui %29 : vector<8x1xi1> to vector<8x1xi32>
    %31 = arith.sitofp %30 : vector<8x1xi32> to vector<8x1xf32>
    %32 = vector.shape_cast %14 : vector<8x8xf32> to vector<1x8x8xf32>
    %33 = vector.shape_cast %27 : vector<8x8xf32> to vector<1x8x8xf32>
    %34 = tpu.concatenate %32, %33 in 0 : vector<1x8x8xf32>, vector<1x8x8xf32> -> vector<2x8x8xf32>
    %35 = tpu.concatenate %18, %31 in 0 : vector<8x1xf32>, vector<8x1xf32> -> vector<16x1xf32>
    %cst_7 = arith.constant dense<0.000000e+00> : vector<16xf32>
    %36 = vector.multi_reduction <add>, %3, %cst_7 [1] : vector<16x128xf32> to vector<16xf32>
    %37 = vector.shape_cast %36 : vector<16xf32> to vector<16x1xf32>
    %cst_8 = arith.constant 1.280000e+02 : f32
    %38 = vector.broadcast %cst_8 : f32 to vector<16x1xf32>
    %39 = arith.divf %37, %38 : vector<16x1xf32>
    %40 = vector.broadcast %39 : vector<16x1xf32> to vector<16x128xf32>
    %41 = arith.subf %3, %40 : vector<16x128xf32>
    %42 = arith.mulf %41, %41 : vector<16x128xf32>
    %cst_9 = arith.constant dense<0.000000e+00> : vector<16xf32>
    %43 = vector.multi_reduction <add>, %42, %cst_9 [1] : vector<16x128xf32> to vector<16xf32>
    %44 = vector.shape_cast %43 : vector<16xf32> to vector<16x1xf32>
    %cst_10 = arith.constant 1.280000e+02 : f32
    %45 = vector.broadcast %cst_10 : f32 to vector<16x1xf32>
    %46 = arith.divf %44, %45 : vector<16x1xf32>
    %47 = vector.broadcast %39 : vector<16x1xf32> to vector<16x128xf32>
    %48 = arith.subf %3, %47 : vector<16x128xf32>
    %cst_11 = arith.constant 9.99999974E-6 : f32
    %49 = vector.broadcast %cst_11 : f32 to vector<16x1xf32>
    %50 = arith.addf %46, %49 : vector<16x1xf32>
    %51 = math.rsqrt %50 : vector<16x1xf32>
    %52 = vector.broadcast %51 : vector<16x1xf32> to vector<16x128xf32>
    %53 = arith.mulf %48, %52 : vector<16x128xf32>
    %c0_12 = arith.constant 0 : index
    %c0_13 = arith.constant 0 : index
    %c0_14 = arith.constant 0 : index
    %54 = vector.load %arg5[%c0_12, %c0_13, %c0_14] : memref<1x1x128xf32, #tpu.memory_space<vmem>>, vector<1x1x128xf32>
    %55 = vector.shape_cast %54 : vector<1x1x128xf32> to vector<1x128xf32>
    %56 = vector.broadcast %55 : vector<1x128xf32> to vector<16x128xf32>
    %57 = arith.mulf %53, %56 : vector<16x128xf32>
    %c0_15 = arith.constant 0 : index
    %c0_16 = arith.constant 0 : index
    %c0_17 = arith.constant 0 : index
    %58 = vector.load %arg6[%c0_15, %c0_16, %c0_17] : memref<1x1x128xf32, #tpu.memory_space<vmem>>, vector<1x1x128xf32>
    %59 = vector.shape_cast %58 : vector<1x1x128xf32> to vector<1x128xf32>
    %60 = vector.broadcast %59 : vector<1x128xf32> to vector<16x128xf32>
    %61 = arith.addf %57, %60 : vector<16x128xf32>
    %62 = arith.truncf %61 : vector<16x128xf32> to vector<16x128xbf16>
    %c0_18 = arith.constant 0 : index
    %c0_19 = arith.constant 0 : index
    %c0_20 = arith.constant 0 : index
    %63 = vector.load %arg7[%c0_18, %c0_19, %c0_20] : memref<1x128x512xbf16, #tpu.memory_space<vmem>>, vector<1x128x512xbf16>
    %64 = vector.shape_cast %63 : vector<1x128x512xbf16> to vector<128x512xbf16>
    %cst_21 = arith.constant dense<0.000000e+00> : vector<16x512xf32>
    %65 = tpu.matmul %62, %64, %cst_21 {dimension_numbers = #tpu.dot_dimension_numbers<[1], [0], [0], [1], [0, 0, 1, 1], [], []>} : vector<16x128xbf16>, vector<128x512xbf16>, vector<16x512xf32> -> vector<16x512xf32>
    %c0_22 = arith.constant 0 : index
    %c0_23 = arith.constant 0 : index
    %c0_24 = arith.constant 0 : index
    %66 = vector.load %arg8[%c0_22, %c0_23, %c0_24] : memref<1x1x512xf32, #tpu.memory_space<vmem>>, vector<1x1x512xf32>
    %67 = vector.shape_cast %66 : vector<1x1x512xf32> to vector<1x512xf32>
    %68 = vector.broadcast %67 : vector<1x512xf32> to vector<16x512xf32>
    %69 = arith.addf %65, %68 : vector<16x512xf32>
    %70 = arith.negf %69 : vector<16x512xf32>
    %71 = math.exp %70 : vector<16x512xf32>
    %cst_25 = arith.constant 1.000000e+00 : f32
    %72 = vector.broadcast %cst_25 : f32 to vector<16x512xf32>
    %73 = arith.addf %72, %71 : vector<16x512xf32>
    %74 = arith.divf %72, %73 : vector<16x512xf32>
    %75 = arith.mulf %69, %74 : vector<16x512xf32>
    %76 = arith.truncf %75 : vector<16x512xf32> to vector<16x512xbf16>
    %c0_26 = arith.constant 0 : index
    %c0_27 = arith.constant 0 : index
    %c0_28 = arith.constant 0 : index
    %77 = vector.load %arg9[%c0_26, %c0_27, %c0_28] : memref<1x512x128xbf16, #tpu.memory_space<vmem>>, vector<1x512x128xbf16>
    %78 = vector.shape_cast %77 : vector<1x512x128xbf16> to vector<512x128xbf16>
    %cst_29 = arith.constant dense<0.000000e+00> : vector<16x128xf32>
    %79 = tpu.matmul %76, %78, %cst_29 {dimension_numbers = #tpu.dot_dimension_numbers<[1], [0], [0], [1], [0, 0, 1, 1], [], []>} : vector<16x512xbf16>, vector<512x128xbf16>, vector<16x128xf32> -> vector<16x128xf32>
    %c0_30 = arith.constant 0 : index
    %c0_31 = arith.constant 0 : index
    %c0_32 = arith.constant 0 : index
    %80 = vector.load %arg10[%c0_30, %c0_31, %c0_32] : memref<1x1x128xf32, #tpu.memory_space<vmem>>, vector<1x1x128xf32>
    %81 = vector.shape_cast %80 : vector<1x1x128xf32> to vector<1x128xf32>
    %82 = vector.broadcast %81 : vector<1x128xf32> to vector<16x128xf32>
    %83 = arith.addf %79, %82 : vector<16x128xf32>
    %cst_33 = arith.constant 5.000000e-01 : f32
    %84 = vector.broadcast %cst_33 : f32 to vector<16x128xf32>
    %85 = arith.mulf %84, %83 : vector<16x128xf32>
    %86 = arith.addf %3, %85 : vector<16x128xf32>
    %cst_34 = arith.constant dense<0.000000e+00> : vector<16xf32>
    %87 = vector.multi_reduction <add>, %86, %cst_34 [1] : vector<16x128xf32> to vector<16xf32>
    %88 = vector.shape_cast %87 : vector<16xf32> to vector<16x1xf32>
    %cst_35 = arith.constant 1.280000e+02 : f32
    %89 = vector.broadcast %cst_35 : f32 to vector<16x1xf32>
    %90 = arith.divf %88, %89 : vector<16x1xf32>
    %91 = vector.broadcast %90 : vector<16x1xf32> to vector<16x128xf32>
    %92 = arith.subf %86, %91 : vector<16x128xf32>
    %93 = arith.mulf %92, %92 : vector<16x128xf32>
    %cst_36 = arith.constant dense<0.000000e+00> : vector<16xf32>
    %94 = vector.multi_reduction <add>, %93, %cst_36 [1] : vector<16x128xf32> to vector<16xf32>
    %95 = vector.shape_cast %94 : vector<16xf32> to vector<16x1xf32>
    %cst_37 = arith.constant 1.280000e+02 : f32
    %96 = vector.broadcast %cst_37 : f32 to vector<16x1xf32>
    %97 = arith.divf %95, %96 : vector<16x1xf32>
    %98 = vector.broadcast %90 : vector<16x1xf32> to vector<16x128xf32>
    %99 = arith.subf %86, %98 : vector<16x128xf32>
    %cst_38 = arith.constant 9.99999974E-6 : f32
    %100 = vector.broadcast %cst_38 : f32 to vector<16x1xf32>
    %101 = arith.addf %97, %100 : vector<16x1xf32>
    %102 = math.rsqrt %101 : vector<16x1xf32>
    %103 = vector.broadcast %102 : vector<16x1xf32> to vector<16x128xf32>
    %104 = arith.mulf %99, %103 : vector<16x128xf32>
    %c0_39 = arith.constant 0 : index
    %c0_40 = arith.constant 0 : index
    %c0_41 = arith.constant 0 : index
    %105 = vector.load %arg11[%c0_39, %c0_40, %c0_41] : memref<1x1x128xf32, #tpu.memory_space<vmem>>, vector<1x1x128xf32>
    %106 = vector.shape_cast %105 : vector<1x1x128xf32> to vector<1x128xf32>
    %107 = vector.broadcast %106 : vector<1x128xf32> to vector<16x128xf32>
    %108 = arith.mulf %104, %107 : vector<16x128xf32>
    %c0_42 = arith.constant 0 : index
    %c0_43 = arith.constant 0 : index
    %c0_44 = arith.constant 0 : index
    %109 = vector.load %arg12[%c0_42, %c0_43, %c0_44] : memref<1x1x128xf32, #tpu.memory_space<vmem>>, vector<1x1x128xf32>
    %110 = vector.shape_cast %109 : vector<1x1x128xf32> to vector<1x128xf32>
    %111 = vector.broadcast %110 : vector<1x128xf32> to vector<16x128xf32>
    %112 = arith.addf %108, %111 : vector<16x128xf32>
    %113 = arith.truncf %112 : vector<16x128xf32> to vector<16x128xbf16>
    %c0_45 = arith.constant 0 : index
    %c0_46 = arith.constant 0 : index
    %c0_47 = arith.constant 0 : index
    %114 = vector.load %arg13[%c0_45, %c0_46, %c0_47] : memref<1x128x384xbf16, #tpu.memory_space<vmem>>, vector<1x128x384xbf16>
    %115 = vector.shape_cast %114 : vector<1x128x384xbf16> to vector<128x384xbf16>
    %cst_48 = arith.constant dense<0.000000e+00> : vector<16x384xf32>
    %116 = tpu.matmul %113, %115, %cst_48 {dimension_numbers = #tpu.dot_dimension_numbers<[1], [0], [0], [1], [0, 0, 1, 1], [], []>} : vector<16x128xbf16>, vector<128x384xbf16>, vector<16x384xf32> -> vector<16x384xf32>
    %c0_49 = arith.constant 0 : index
    %c0_50 = arith.constant 0 : index
    %c0_51 = arith.constant 0 : index
    %117 = vector.load %arg14[%c0_49, %c0_50, %c0_51] : memref<1x1x384xf32, #tpu.memory_space<vmem>>, vector<1x1x384xf32>
    %118 = vector.shape_cast %117 : vector<1x1x384xf32> to vector<1x384xf32>
    %119 = vector.broadcast %118 : vector<1x384xf32> to vector<16x384xf32>
    %120 = arith.addf %116, %119 : vector<16x384xf32>
    %121 = vector.extract_strided_slice %120 {offsets = [0, 0], sizes = [16, 32], strides = [1, 1]} : vector<16x384xf32> to vector<16x32xf32>
    %122 = vector.shape_cast %121 : vector<16x32xf32> to vector<2x8x32xf32>
    %123 = vector.extract_strided_slice %120 {offsets = [0, 128], sizes = [16, 32], strides = [1, 1]} : vector<16x384xf32> to vector<16x32xf32>
    %124 = vector.shape_cast %123 : vector<16x32xf32> to vector<2x8x32xf32>
    %125 = vector.extract_strided_slice %120 {offsets = [0, 256], sizes = [16, 32], strides = [1, 1]} : vector<16x384xf32> to vector<16x32xf32>
    %126 = vector.shape_cast %125 : vector<16x32xf32> to vector<2x8x32xf32>
    %127 = arith.truncf %122 : vector<2x8x32xf32> to vector<2x8x32xbf16>
    %128 = arith.truncf %124 : vector<2x8x32xf32> to vector<2x8x32xbf16>
    "tpu.trace_start"() <{level = 10 : i32, message = "bqd,bkd->bqk"}> : () -> ()
    %cst_52 = arith.constant dense<0.000000e+00> : vector<2x8x8xf32>
    %129 = tpu.matmul %127, %128, %cst_52 {dimension_numbers = #tpu.dot_dimension_numbers<[2], [2], [1], [1], [0, 0, 0, 1, 1, 1], [0], [0]>} : vector<2x8x32xbf16>, vector<2x8x32xbf16>, vector<2x8x8xf32> -> vector<2x8x8xf32>
    "tpu.trace_stop"() : () -> ()
    %130 = arith.addf %129, %34 : vector<2x8x8xf32>
    %cst_53 = arith.constant dense<0xFF800000> : vector<2x8xf32>
    %131 = vector.multi_reduction <maximumf>, %130, %cst_53 [2] : vector<2x8x8xf32> to vector<2x8xf32>
    %132 = vector.shape_cast %131 : vector<2x8xf32> to vector<2x8x1xf32>
    %133 = vector.broadcast %132 : vector<2x8x1xf32> to vector<2x8x8xf32>
    %134 = arith.subf %130, %133 : vector<2x8x8xf32>
    %135 = math.exp %134 : vector<2x8x8xf32>
    %cst_54 = arith.constant dense<0.000000e+00> : vector<2x8xf32>
    %136 = vector.multi_reduction <add>, %135, %cst_54 [2] : vector<2x8x8xf32> to vector<2x8xf32>
    %137 = vector.shape_cast %136 : vector<2x8xf32> to vector<2x8x1xf32>
    %138 = vector.broadcast %137 : vector<2x8x1xf32> to vector<2x8x8xf32>
    %139 = arith.divf %135, %138 : vector<2x8x8xf32>
    %140 = arith.truncf %139 : vector<2x8x8xf32> to vector<2x8x8xbf16>
    %141 = arith.truncf %126 : vector<2x8x32xf32> to vector<2x8x32xbf16>
    "tpu.trace_start"() <{level = 10 : i32, message = "bqk,bkd->bqd"}> : () -> ()
    %cst_55 = arith.constant dense<0.000000e+00> : vector<2x8x32xf32>
    %142 = tpu.matmul %140, %141, %cst_55 {dimension_numbers = #tpu.dot_dimension_numbers<[2], [1], [1], [2], [0, 0, 0, 1, 1, 2], [0], [0]>} : vector<2x8x8xbf16>, vector<2x8x32xbf16>, vector<2x8x32xf32> -> vector<2x8x32xf32>
    "tpu.trace_stop"() : () -> ()
    %143 = vector.extract_strided_slice %120 {offsets = [0, 32], sizes = [16, 32], strides = [1, 1]} : vector<16x384xf32> to vector<16x32xf32>
    %144 = vector.shape_cast %143 : vector<16x32xf32> to vector<2x8x32xf32>
    %145 = vector.extract_strided_slice %120 {offsets = [0, 160], sizes = [16, 32], strides = [1, 1]} : vector<16x384xf32> to vector<16x32xf32>
    %146 = vector.shape_cast %145 : vector<16x32xf32> to vector<2x8x32xf32>
    %147 = vector.extract_strided_slice %120 {offsets = [0, 288], sizes = [16, 32], strides = [1, 1]} : vector<16x384xf32> to vector<16x32xf32>
    %148 = vector.shape_cast %147 : vector<16x32xf32> to vector<2x8x32xf32>
    %149 = arith.truncf %144 : vector<2x8x32xf32> to vector<2x8x32xbf16>
    %150 = arith.truncf %146 : vector<2x8x32xf32> to vector<2x8x32xbf16>
    "tpu.trace_start"() <{level = 10 : i32, message = "bqd,bkd->bqk"}> : () -> ()
    %cst_56 = arith.constant dense<0.000000e+00> : vector<2x8x8xf32>
    %151 = tpu.matmul %149, %150, %cst_56 {dimension_numbers = #tpu.dot_dimension_numbers<[2], [2], [1], [1], [0, 0, 0, 1, 1, 1], [0], [0]>} : vector<2x8x32xbf16>, vector<2x8x32xbf16>, vector<2x8x8xf32> -> vector<2x8x8xf32>
    "tpu.trace_stop"() : () -> ()
    %152 = arith.addf %151, %34 : vector<2x8x8xf32>
    %cst_57 = arith.constant dense<0xFF800000> : vector<2x8xf32>
    %153 = vector.multi_reduction <maximumf>, %152, %cst_57 [2] : vector<2x8x8xf32> to vector<2x8xf32>
    %154 = vector.shape_cast %153 : vector<2x8xf32> to vector<2x8x1xf32>
    %155 = vector.broadcast %154 : vector<2x8x1xf32> to vector<2x8x8xf32>
    %156 = arith.subf %152, %155 : vector<2x8x8xf32>
    %157 = math.exp %156 : vector<2x8x8xf32>
    %cst_58 = arith.constant dense<0.000000e+00> : vector<2x8xf32>
    %158 = vector.multi_reduction <add>, %157, %cst_58 [2] : vector<2x8x8xf32> to vector<2x8xf32>
    %159 = vector.shape_cast %158 : vector<2x8xf32> to vector<2x8x1xf32>
    %160 = vector.broadcast %159 : vector<2x8x1xf32> to vector<2x8x8xf32>
    %161 = arith.divf %157, %160 : vector<2x8x8xf32>
    %162 = arith.truncf %161 : vector<2x8x8xf32> to vector<2x8x8xbf16>
    %163 = arith.truncf %148 : vector<2x8x32xf32> to vector<2x8x32xbf16>
    "tpu.trace_start"() <{level = 10 : i32, message = "bqk,bkd->bqd"}> : () -> ()
    %cst_59 = arith.constant dense<0.000000e+00> : vector<2x8x32xf32>
    %164 = tpu.matmul %162, %163, %cst_59 {dimension_numbers = #tpu.dot_dimension_numbers<[2], [1], [1], [2], [0, 0, 0, 1, 1, 2], [0], [0]>} : vector<2x8x8xbf16>, vector<2x8x32xbf16>, vector<2x8x32xf32> -> vector<2x8x32xf32>
    "tpu.trace_stop"() : () -> ()
    %165 = vector.extract_strided_slice %120 {offsets = [0, 64], sizes = [16, 32], strides = [1, 1]} : vector<16x384xf32> to vector<16x32xf32>
    %166 = vector.shape_cast %165 : vector<16x32xf32> to vector<2x8x32xf32>
    %167 = vector.extract_strided_slice %120 {offsets = [0, 192], sizes = [16, 32], strides = [1, 1]} : vector<16x384xf32> to vector<16x32xf32>
    %168 = vector.shape_cast %167 : vector<16x32xf32> to vector<2x8x32xf32>
    %169 = vector.extract_strided_slice %120 {offsets = [0, 320], sizes = [16, 32], strides = [1, 1]} : vector<16x384xf32> to vector<16x32xf32>
    %170 = vector.shape_cast %169 : vector<16x32xf32> to vector<2x8x32xf32>
    %171 = arith.truncf %166 : vector<2x8x32xf32> to vector<2x8x32xbf16>
    %172 = arith.truncf %168 : vector<2x8x32xf32> to vector<2x8x32xbf16>
    "tpu.trace_start"() <{level = 10 : i32, message = "bqd,bkd->bqk"}> : () -> ()
    %cst_60 = arith.constant dense<0.000000e+00> : vector<2x8x8xf32>
    %173 = tpu.matmul %171, %172, %cst_60 {dimension_numbers = #tpu.dot_dimension_numbers<[2], [2], [1], [1], [0, 0, 0, 1, 1, 1], [0], [0]>} : vector<2x8x32xbf16>, vector<2x8x32xbf16>, vector<2x8x8xf32> -> vector<2x8x8xf32>
    "tpu.trace_stop"() : () -> ()
    %174 = arith.addf %173, %34 : vector<2x8x8xf32>
    %cst_61 = arith.constant dense<0xFF800000> : vector<2x8xf32>
    %175 = vector.multi_reduction <maximumf>, %174, %cst_61 [2] : vector<2x8x8xf32> to vector<2x8xf32>
    %176 = vector.shape_cast %175 : vector<2x8xf32> to vector<2x8x1xf32>
    %177 = vector.broadcast %176 : vector<2x8x1xf32> to vector<2x8x8xf32>
    %178 = arith.subf %174, %177 : vector<2x8x8xf32>
    %179 = math.exp %178 : vector<2x8x8xf32>
    %cst_62 = arith.constant dense<0.000000e+00> : vector<2x8xf32>
    %180 = vector.multi_reduction <add>, %179, %cst_62 [2] : vector<2x8x8xf32> to vector<2x8xf32>
    %181 = vector.shape_cast %180 : vector<2x8xf32> to vector<2x8x1xf32>
    %182 = vector.broadcast %181 : vector<2x8x1xf32> to vector<2x8x8xf32>
    %183 = arith.divf %179, %182 : vector<2x8x8xf32>
    %184 = arith.truncf %183 : vector<2x8x8xf32> to vector<2x8x8xbf16>
    %185 = arith.truncf %170 : vector<2x8x32xf32> to vector<2x8x32xbf16>
    "tpu.trace_start"() <{level = 10 : i32, message = "bqk,bkd->bqd"}> : () -> ()
    %cst_63 = arith.constant dense<0.000000e+00> : vector<2x8x32xf32>
    %186 = tpu.matmul %184, %185, %cst_63 {dimension_numbers = #tpu.dot_dimension_numbers<[2], [1], [1], [2], [0, 0, 0, 1, 1, 2], [0], [0]>} : vector<2x8x8xbf16>, vector<2x8x32xbf16>, vector<2x8x32xf32> -> vector<2x8x32xf32>
    "tpu.trace_stop"() : () -> ()
    %187 = vector.extract_strided_slice %120 {offsets = [0, 96], sizes = [16, 32], strides = [1, 1]} : vector<16x384xf32> to vector<16x32xf32>
    %188 = vector.shape_cast %187 : vector<16x32xf32> to vector<2x8x32xf32>
    %189 = vector.extract_strided_slice %120 {offsets = [0, 224], sizes = [16, 32], strides = [1, 1]} : vector<16x384xf32> to vector<16x32xf32>
    %190 = vector.shape_cast %189 : vector<16x32xf32> to vector<2x8x32xf32>
    %191 = vector.extract_strided_slice %120 {offsets = [0, 352], sizes = [16, 32], strides = [1, 1]} : vector<16x384xf32> to vector<16x32xf32>
    %192 = vector.shape_cast %191 : vector<16x32xf32> to vector<2x8x32xf32>
    %193 = arith.truncf %188 : vector<2x8x32xf32> to vector<2x8x32xbf16>
    %194 = arith.truncf %190 : vector<2x8x32xf32> to vector<2x8x32xbf16>
    "tpu.trace_start"() <{level = 10 : i32, message = "bqd,bkd->bqk"}> : () -> ()
    %cst_64 = arith.constant dense<0.000000e+00> : vector<2x8x8xf32>
    %195 = tpu.matmul %193, %194, %cst_64 {dimension_numbers = #tpu.dot_dimension_numbers<[2], [2], [1], [1], [0, 0, 0, 1, 1, 1], [0], [0]>} : vector<2x8x32xbf16>, vector<2x8x32xbf16>, vector<2x8x8xf32> -> vector<2x8x8xf32>
    "tpu.trace_stop"() : () -> ()
    %196 = arith.addf %195, %34 : vector<2x8x8xf32>
    %cst_65 = arith.constant dense<0xFF800000> : vector<2x8xf32>
    %197 = vector.multi_reduction <maximumf>, %196, %cst_65 [2] : vector<2x8x8xf32> to vector<2x8xf32>
    %198 = vector.shape_cast %197 : vector<2x8xf32> to vector<2x8x1xf32>
    %199 = vector.broadcast %198 : vector<2x8x1xf32> to vector<2x8x8xf32>
    %200 = arith.subf %196, %199 : vector<2x8x8xf32>
    %201 = math.exp %200 : vector<2x8x8xf32>
    %cst_66 = arith.constant dense<0.000000e+00> : vector<2x8xf32>
    %202 = vector.multi_reduction <add>, %201, %cst_66 [2] : vector<2x8x8xf32> to vector<2x8xf32>
    %203 = vector.shape_cast %202 : vector<2x8xf32> to vector<2x8x1xf32>
    %204 = vector.broadcast %203 : vector<2x8x1xf32> to vector<2x8x8xf32>
    %205 = arith.divf %201, %204 : vector<2x8x8xf32>
    %206 = arith.truncf %205 : vector<2x8x8xf32> to vector<2x8x8xbf16>
    %207 = arith.truncf %192 : vector<2x8x32xf32> to vector<2x8x32xbf16>
    "tpu.trace_start"() <{level = 10 : i32, message = "bqk,bkd->bqd"}> : () -> ()
    %cst_67 = arith.constant dense<0.000000e+00> : vector<2x8x32xf32>
    %208 = tpu.matmul %206, %207, %cst_67 {dimension_numbers = #tpu.dot_dimension_numbers<[2], [1], [1], [2], [0, 0, 0, 1, 1, 2], [0], [0]>} : vector<2x8x8xbf16>, vector<2x8x32xbf16>, vector<2x8x32xf32> -> vector<2x8x32xf32>
    "tpu.trace_stop"() : () -> ()
    %209 = tpu.concatenate %142, %164, %186, %208 in 2 : vector<2x8x32xf32>, vector<2x8x32xf32>, vector<2x8x32xf32>, vector<2x8x32xf32> -> vector<2x8x128xf32>
    %210 = vector.shape_cast %209 : vector<2x8x128xf32> to vector<16x128xf32>
    %211 = arith.truncf %210 : vector<16x128xf32> to vector<16x128xbf16>
    %c0_68 = arith.constant 0 : index
    %c0_69 = arith.constant 0 : index
    %c0_70 = arith.constant 0 : index
    %212 = vector.load %arg15[%c0_68, %c0_69, %c0_70] : memref<1x128x128xbf16, #tpu.memory_space<vmem>>, vector<1x128x128xbf16>
    %213 = vector.shape_cast %212 : vector<1x128x128xbf16> to vector<128x128xbf16>
    %cst_71 = arith.constant dense<0.000000e+00> : vector<16x128xf32>
    %214 = tpu.matmul %211, %213, %cst_71 {dimension_numbers = #tpu.dot_dimension_numbers<[1], [0], [0], [1], [0, 0, 1, 1], [], []>} : vector<16x128xbf16>, vector<128x128xbf16>, vector<16x128xf32> -> vector<16x128xf32>
    %c0_72 = arith.constant 0 : index
    %c0_73 = arith.constant 0 : index
    %c0_74 = arith.constant 0 : index
    %215 = vector.load %arg16[%c0_72, %c0_73, %c0_74] : memref<1x1x128xf32, #tpu.memory_space<vmem>>, vector<1x1x128xf32>
    %216 = vector.shape_cast %215 : vector<1x1x128xf32> to vector<1x128xf32>
    %217 = vector.broadcast %216 : vector<1x128xf32> to vector<16x128xf32>
    %218 = arith.addf %214, %217 : vector<16x128xf32>
    %219 = arith.addf %86, %218 : vector<16x128xf32>
    %cst_75 = arith.constant dense<0.000000e+00> : vector<16xf32>
    %220 = vector.multi_reduction <add>, %219, %cst_75 [1] : vector<16x128xf32> to vector<16xf32>
    %221 = vector.shape_cast %220 : vector<16xf32> to vector<16x1xf32>
    %cst_76 = arith.constant 1.280000e+02 : f32
    %222 = vector.broadcast %cst_76 : f32 to vector<16x1xf32>
    %223 = arith.divf %221, %222 : vector<16x1xf32>
    %224 = vector.broadcast %223 : vector<16x1xf32> to vector<16x128xf32>
    %225 = arith.subf %219, %224 : vector<16x128xf32>
    %226 = arith.mulf %225, %225 : vector<16x128xf32>
    %cst_77 = arith.constant dense<0.000000e+00> : vector<16xf32>
    %227 = vector.multi_reduction <add>, %226, %cst_77 [1] : vector<16x128xf32> to vector<16xf32>
    %228 = vector.shape_cast %227 : vector<16xf32> to vector<16x1xf32>
    %cst_78 = arith.constant 1.280000e+02 : f32
    %229 = vector.broadcast %cst_78 : f32 to vector<16x1xf32>
    %230 = arith.divf %228, %229 : vector<16x1xf32>
    %231 = vector.broadcast %223 : vector<16x1xf32> to vector<16x128xf32>
    %232 = arith.subf %219, %231 : vector<16x128xf32>
    %cst_79 = arith.constant 9.99999974E-6 : f32
    %233 = vector.broadcast %cst_79 : f32 to vector<16x1xf32>
    %234 = arith.addf %230, %233 : vector<16x1xf32>
    %235 = math.rsqrt %234 : vector<16x1xf32>
    %236 = vector.broadcast %235 : vector<16x1xf32> to vector<16x128xf32>
    %237 = arith.mulf %232, %236 : vector<16x128xf32>
    %c0_80 = arith.constant 0 : index
    %c0_81 = arith.constant 0 : index
    %c0_82 = arith.constant 0 : index
    %238 = vector.load %arg17[%c0_80, %c0_81, %c0_82] : memref<1x1x128xf32, #tpu.memory_space<vmem>>, vector<1x1x128xf32>
    %239 = vector.shape_cast %238 : vector<1x1x128xf32> to vector<1x128xf32>
    %240 = vector.broadcast %239 : vector<1x128xf32> to vector<16x128xf32>
    %241 = arith.mulf %237, %240 : vector<16x128xf32>
    %c0_83 = arith.constant 0 : index
    %c0_84 = arith.constant 0 : index
    %c0_85 = arith.constant 0 : index
    %242 = vector.load %arg18[%c0_83, %c0_84, %c0_85] : memref<1x1x128xf32, #tpu.memory_space<vmem>>, vector<1x1x128xf32>
    %243 = vector.shape_cast %242 : vector<1x1x128xf32> to vector<1x128xf32>
    %244 = vector.broadcast %243 : vector<1x128xf32> to vector<16x128xf32>
    %245 = arith.addf %241, %244 : vector<16x128xf32>
    %246 = arith.truncf %245 : vector<16x128xf32> to vector<16x128xbf16>
    %c0_86 = arith.constant 0 : index
    %c0_87 = arith.constant 0 : index
    %c0_88 = arith.constant 0 : index
    %247 = vector.load %arg19[%c0_86, %c0_87, %c0_88] : memref<1x128x256xbf16, #tpu.memory_space<vmem>>, vector<1x128x256xbf16>
    %248 = vector.shape_cast %247 : vector<1x128x256xbf16> to vector<128x256xbf16>
    %cst_89 = arith.constant dense<0.000000e+00> : vector<16x256xf32>
    %249 = tpu.matmul %246, %248, %cst_89 {dimension_numbers = #tpu.dot_dimension_numbers<[1], [0], [0], [1], [0, 0, 1, 1], [], []>} : vector<16x128xbf16>, vector<128x256xbf16>, vector<16x256xf32> -> vector<16x256xf32>
    %c0_90 = arith.constant 0 : index
    %c0_91 = arith.constant 0 : index
    %c0_92 = arith.constant 0 : index
    %250 = vector.load %arg20[%c0_90, %c0_91, %c0_92] : memref<1x1x256xf32, #tpu.memory_space<vmem>>, vector<1x1x256xf32>
    %251 = vector.shape_cast %250 : vector<1x1x256xf32> to vector<1x256xf32>
    %252 = vector.broadcast %251 : vector<1x256xf32> to vector<16x256xf32>
    %253 = arith.addf %249, %252 : vector<16x256xf32>
    %254 = vector.extract_strided_slice %253 {offsets = [0, 0], sizes = [16, 128], strides = [1, 1]} : vector<16x256xf32> to vector<16x128xf32>
    %255 = vector.extract_strided_slice %253 {offsets = [0, 128], sizes = [16, 128], strides = [1, 1]} : vector<16x256xf32> to vector<16x128xf32>
    %256 = arith.negf %255 : vector<16x128xf32>
    %257 = math.exp %256 : vector<16x128xf32>
    %cst_93 = arith.constant 1.000000e+00 : f32
    %258 = vector.broadcast %cst_93 : f32 to vector<16x128xf32>
    %259 = arith.addf %258, %257 : vector<16x128xf32>
    %260 = arith.divf %258, %259 : vector<16x128xf32>
    %261 = arith.mulf %254, %260 : vector<16x128xf32>
    %262 = vector.broadcast %35 : vector<16x1xf32> to vector<16x128xf32>
    %263 = arith.mulf %261, %262 : vector<16x128xf32>
    %264 = vector.shape_cast %263 : vector<16x128xf32> to vector<2x8x128xf32>
    %c0_94 = arith.constant 0 : index
    %c0_95 = arith.constant 0 : index
    %c0_96 = arith.constant 0 : index
    %265 = vector.load %arg21[%c0_94, %c0_95, %c0_96] : memref<1x7x128xf32, #tpu.memory_space<vmem>>, vector<1x7x128xf32>
    %266 = vector.shape_cast %265 : vector<1x7x128xf32> to vector<7x128xf32>
    %267 = tpu.iota {dimensions = array<i32: 1>} : vector<2x8x128xi32>
    %cst_97 = arith.constant 0.000000e+00 : f32
    %268 = vector.broadcast %cst_97 : f32 to vector<2x8x128xf32>
    %c3_i32 = arith.constant 3 : i32
    %269 = tpu.dynamic_rotate %264 by %c3_i32 dim 1 : vector<2x8x128xf32>, i32 -> vector<2x8x128xf32>
    %c-3_i32 = arith.constant -3 : i32
    %270 = vector.broadcast %c-3_i32 : i32 to vector<2x8x128xi32>
    %271 = arith.addi %267, %270 : vector<2x8x128xi32>
    %c0_i32_98 = arith.constant 0 : i32
    %272 = vector.broadcast %c0_i32_98 : i32 to vector<2x8x128xi32>
    %273 = arith.cmpi sge, %271, %272 : vector<2x8x128xi32>
    %c-3_i32_99 = arith.constant -3 : i32
    %274 = vector.broadcast %c-3_i32_99 : i32 to vector<2x8x128xi32>
    %275 = arith.addi %267, %274 : vector<2x8x128xi32>
    %c8_i32 = arith.constant 8 : i32
    %276 = vector.broadcast %c8_i32 : i32 to vector<2x8x128xi32>
    %277 = arith.cmpi slt, %275, %276 : vector<2x8x128xi32>
    %278 = arith.andi %273, %277 : vector<2x8x128xi1>
    %cst_100 = arith.constant 0.000000e+00 : f32
    %279 = vector.broadcast %cst_100 : f32 to vector<2x8x128xf32>
    %280 = arith.select %278, %269, %279 : vector<2x8x128xi1>, vector<2x8x128xf32>
    %281 = vector.extract_strided_slice %266 {offsets = [0, 0], sizes = [1, 128], strides = [1, 1]} : vector<7x128xf32> to vector<1x128xf32>
    %282 = vector.shape_cast %281 : vector<1x128xf32> to vector<1x1x128xf32>
    %283 = vector.broadcast %282 : vector<1x1x128xf32> to vector<2x8x128xf32>
    %284 = arith.mulf %280, %283 : vector<2x8x128xf32>
    %285 = arith.addf %268, %284 : vector<2x8x128xf32>
    %c2_i32_101 = arith.constant 2 : i32
    %286 = tpu.dynamic_rotate %264 by %c2_i32_101 dim 1 : vector<2x8x128xf32>, i32 -> vector<2x8x128xf32>
    %c-2_i32 = arith.constant -2 : i32
    %287 = vector.broadcast %c-2_i32 : i32 to vector<2x8x128xi32>
    %288 = arith.addi %267, %287 : vector<2x8x128xi32>
    %c0_i32_102 = arith.constant 0 : i32
    %289 = vector.broadcast %c0_i32_102 : i32 to vector<2x8x128xi32>
    %290 = arith.cmpi sge, %288, %289 : vector<2x8x128xi32>
    %c-2_i32_103 = arith.constant -2 : i32
    %291 = vector.broadcast %c-2_i32_103 : i32 to vector<2x8x128xi32>
    %292 = arith.addi %267, %291 : vector<2x8x128xi32>
    %c8_i32_104 = arith.constant 8 : i32
    %293 = vector.broadcast %c8_i32_104 : i32 to vector<2x8x128xi32>
    %294 = arith.cmpi slt, %292, %293 : vector<2x8x128xi32>
    %295 = arith.andi %290, %294 : vector<2x8x128xi1>
    %cst_105 = arith.constant 0.000000e+00 : f32
    %296 = vector.broadcast %cst_105 : f32 to vector<2x8x128xf32>
    %297 = arith.select %295, %286, %296 : vector<2x8x128xi1>, vector<2x8x128xf32>
    %298 = vector.extract_strided_slice %266 {offsets = [1, 0], sizes = [1, 128], strides = [1, 1]} : vector<7x128xf32> to vector<1x128xf32>
    %299 = vector.shape_cast %298 : vector<1x128xf32> to vector<1x1x128xf32>
    %300 = vector.broadcast %299 : vector<1x1x128xf32> to vector<2x8x128xf32>
    %301 = arith.mulf %297, %300 : vector<2x8x128xf32>
    %302 = arith.addf %285, %301 : vector<2x8x128xf32>
    %c1_i32_106 = arith.constant 1 : i32
    %303 = tpu.dynamic_rotate %264 by %c1_i32_106 dim 1 : vector<2x8x128xf32>, i32 -> vector<2x8x128xf32>
    %c-1_i32 = arith.constant -1 : i32
    %304 = vector.broadcast %c-1_i32 : i32 to vector<2x8x128xi32>
    %305 = arith.addi %267, %304 : vector<2x8x128xi32>
    %c0_i32_107 = arith.constant 0 : i32
    %306 = vector.broadcast %c0_i32_107 : i32 to vector<2x8x128xi32>
    %307 = arith.cmpi sge, %305, %306 : vector<2x8x128xi32>
    %c-1_i32_108 = arith.constant -1 : i32
    %308 = vector.broadcast %c-1_i32_108 : i32 to vector<2x8x128xi32>
    %309 = arith.addi %267, %308 : vector<2x8x128xi32>
    %c8_i32_109 = arith.constant 8 : i32
    %310 = vector.broadcast %c8_i32_109 : i32 to vector<2x8x128xi32>
    %311 = arith.cmpi slt, %309, %310 : vector<2x8x128xi32>
    %312 = arith.andi %307, %311 : vector<2x8x128xi1>
    %cst_110 = arith.constant 0.000000e+00 : f32
    %313 = vector.broadcast %cst_110 : f32 to vector<2x8x128xf32>
    %314 = arith.select %312, %303, %313 : vector<2x8x128xi1>, vector<2x8x128xf32>
    %315 = vector.extract_strided_slice %266 {offsets = [2, 0], sizes = [1, 128], strides = [1, 1]} : vector<7x128xf32> to vector<1x128xf32>
    %316 = vector.shape_cast %315 : vector<1x128xf32> to vector<1x1x128xf32>
    %317 = vector.broadcast %316 : vector<1x1x128xf32> to vector<2x8x128xf32>
    %318 = arith.mulf %314, %317 : vector<2x8x128xf32>
    %319 = arith.addf %302, %318 : vector<2x8x128xf32>
    %c0_i32_111 = arith.constant 0 : i32
    %320 = vector.broadcast %c0_i32_111 : i32 to vector<2x8x128xi32>
    %321 = arith.addi %267, %320 : vector<2x8x128xi32>
    %c0_i32_112 = arith.constant 0 : i32
    %322 = vector.broadcast %c0_i32_112 : i32 to vector<2x8x128xi32>
    %323 = arith.cmpi sge, %321, %322 : vector<2x8x128xi32>
    %c0_i32_113 = arith.constant 0 : i32
    %324 = vector.broadcast %c0_i32_113 : i32 to vector<2x8x128xi32>
    %325 = arith.addi %267, %324 : vector<2x8x128xi32>
    %c8_i32_114 = arith.constant 8 : i32
    %326 = vector.broadcast %c8_i32_114 : i32 to vector<2x8x128xi32>
    %327 = arith.cmpi slt, %325, %326 : vector<2x8x128xi32>
    %328 = arith.andi %323, %327 : vector<2x8x128xi1>
    %cst_115 = arith.constant 0.000000e+00 : f32
    %329 = vector.broadcast %cst_115 : f32 to vector<2x8x128xf32>
    %330 = arith.select %328, %264, %329 : vector<2x8x128xi1>, vector<2x8x128xf32>
    %331 = vector.extract_strided_slice %266 {offsets = [3, 0], sizes = [1, 128], strides = [1, 1]} : vector<7x128xf32> to vector<1x128xf32>
    %332 = vector.shape_cast %331 : vector<1x128xf32> to vector<1x1x128xf32>
    %333 = vector.broadcast %332 : vector<1x1x128xf32> to vector<2x8x128xf32>
    %334 = arith.mulf %330, %333 : vector<2x8x128xf32>
    %335 = arith.addf %319, %334 : vector<2x8x128xf32>
    %c7_i32 = arith.constant 7 : i32
    %336 = tpu.dynamic_rotate %264 by %c7_i32 dim 1 : vector<2x8x128xf32>, i32 -> vector<2x8x128xf32>
    %c1_i32_116 = arith.constant 1 : i32
    %337 = vector.broadcast %c1_i32_116 : i32 to vector<2x8x128xi32>
    %338 = arith.addi %267, %337 : vector<2x8x128xi32>
    %c0_i32_117 = arith.constant 0 : i32
    %339 = vector.broadcast %c0_i32_117 : i32 to vector<2x8x128xi32>
    %340 = arith.cmpi sge, %338, %339 : vector<2x8x128xi32>
    %c1_i32_118 = arith.constant 1 : i32
    %341 = vector.broadcast %c1_i32_118 : i32 to vector<2x8x128xi32>
    %342 = arith.addi %267, %341 : vector<2x8x128xi32>
    %c8_i32_119 = arith.constant 8 : i32
    %343 = vector.broadcast %c8_i32_119 : i32 to vector<2x8x128xi32>
    %344 = arith.cmpi slt, %342, %343 : vector<2x8x128xi32>
    %345 = arith.andi %340, %344 : vector<2x8x128xi1>
    %cst_120 = arith.constant 0.000000e+00 : f32
    %346 = vector.broadcast %cst_120 : f32 to vector<2x8x128xf32>
    %347 = arith.select %345, %336, %346 : vector<2x8x128xi1>, vector<2x8x128xf32>
    %348 = vector.extract_strided_slice %266 {offsets = [4, 0], sizes = [1, 128], strides = [1, 1]} : vector<7x128xf32> to vector<1x128xf32>
    %349 = vector.shape_cast %348 : vector<1x128xf32> to vector<1x1x128xf32>
    %350 = vector.broadcast %349 : vector<1x1x128xf32> to vector<2x8x128xf32>
    %351 = arith.mulf %347, %350 : vector<2x8x128xf32>
    %352 = arith.addf %335, %351 : vector<2x8x128xf32>
    %c6_i32 = arith.constant 6 : i32
    %353 = tpu.dynamic_rotate %264 by %c6_i32 dim 1 : vector<2x8x128xf32>, i32 -> vector<2x8x128xf32>
    %c2_i32_121 = arith.constant 2 : i32
    %354 = vector.broadcast %c2_i32_121 : i32 to vector<2x8x128xi32>
    %355 = arith.addi %267, %354 : vector<2x8x128xi32>
    %c0_i32_122 = arith.constant 0 : i32
    %356 = vector.broadcast %c0_i32_122 : i32 to vector<2x8x128xi32>
    %357 = arith.cmpi sge, %355, %356 : vector<2x8x128xi32>
    %c2_i32_123 = arith.constant 2 : i32
    %358 = vector.broadcast %c2_i32_123 : i32 to vector<2x8x128xi32>
    %359 = arith.addi %267, %358 : vector<2x8x128xi32>
    %c8_i32_124 = arith.constant 8 : i32
    %360 = vector.broadcast %c8_i32_124 : i32 to vector<2x8x128xi32>
    %361 = arith.cmpi slt, %359, %360 : vector<2x8x128xi32>
    %362 = arith.andi %357, %361 : vector<2x8x128xi1>
    %cst_125 = arith.constant 0.000000e+00 : f32
    %363 = vector.broadcast %cst_125 : f32 to vector<2x8x128xf32>
    %364 = arith.select %362, %353, %363 : vector<2x8x128xi1>, vector<2x8x128xf32>
    %365 = vector.extract_strided_slice %266 {offsets = [5, 0], sizes = [1, 128], strides = [1, 1]} : vector<7x128xf32> to vector<1x128xf32>
    %366 = vector.shape_cast %365 : vector<1x128xf32> to vector<1x1x128xf32>
    %367 = vector.broadcast %366 : vector<1x1x128xf32> to vector<2x8x128xf32>
    %368 = arith.mulf %364, %367 : vector<2x8x128xf32>
    %369 = arith.addf %352, %368 : vector<2x8x128xf32>
    %c5_i32 = arith.constant 5 : i32
    %370 = tpu.dynamic_rotate %264 by %c5_i32 dim 1 : vector<2x8x128xf32>, i32 -> vector<2x8x128xf32>
    %c3_i32_126 = arith.constant 3 : i32
    %371 = vector.broadcast %c3_i32_126 : i32 to vector<2x8x128xi32>
    %372 = arith.addi %267, %371 : vector<2x8x128xi32>
    %c0_i32_127 = arith.constant 0 : i32
    %373 = vector.broadcast %c0_i32_127 : i32 to vector<2x8x128xi32>
    %374 = arith.cmpi sge, %372, %373 : vector<2x8x128xi32>
    %c3_i32_128 = arith.constant 3 : i32
    %375 = vector.broadcast %c3_i32_128 : i32 to vector<2x8x128xi32>
    %376 = arith.addi %267, %375 : vector<2x8x128xi32>
    %c8_i32_129 = arith.constant 8 : i32
    %377 = vector.broadcast %c8_i32_129 : i32 to vector<2x8x128xi32>
    %378 = arith.cmpi slt, %376, %377 : vector<2x8x128xi32>
    %379 = arith.andi %374, %378 : vector<2x8x128xi1>
    %cst_130 = arith.constant 0.000000e+00 : f32
    %380 = vector.broadcast %cst_130 : f32 to vector<2x8x128xf32>
    %381 = arith.select %379, %370, %380 : vector<2x8x128xi1>, vector<2x8x128xf32>
    %382 = vector.extract_strided_slice %266 {offsets = [6, 0], sizes = [1, 128], strides = [1, 1]} : vector<7x128xf32> to vector<1x128xf32>
    %383 = vector.shape_cast %382 : vector<1x128xf32> to vector<1x1x128xf32>
    %384 = vector.broadcast %383 : vector<1x1x128xf32> to vector<2x8x128xf32>
    %385 = arith.mulf %381, %384 : vector<2x8x128xf32>
    %386 = arith.addf %369, %385 : vector<2x8x128xf32>
    %387 = vector.shape_cast %386 : vector<2x8x128xf32> to vector<16x128xf32>
    %c0_131 = arith.constant 0 : index
    %c0_132 = arith.constant 0 : index
    %c0_133 = arith.constant 0 : index
    %388 = vector.load %arg22[%c0_131, %c0_132, %c0_133] : memref<1x1x128xf32, #tpu.memory_space<vmem>>, vector<1x1x128xf32>
    %389 = vector.shape_cast %388 : vector<1x1x128xf32> to vector<1x128xf32>
    %390 = vector.broadcast %389 : vector<1x128xf32> to vector<16x128xf32>
    %391 = arith.mulf %387, %390 : vector<16x128xf32>
    %c0_134 = arith.constant 0 : index
    %c0_135 = arith.constant 0 : index
    %c0_136 = arith.constant 0 : index
    %392 = vector.load %arg23[%c0_134, %c0_135, %c0_136] : memref<1x1x128xf32, #tpu.memory_space<vmem>>, vector<1x1x128xf32>
    %393 = vector.shape_cast %392 : vector<1x1x128xf32> to vector<1x128xf32>
    %394 = vector.broadcast %393 : vector<1x128xf32> to vector<16x128xf32>
    %395 = arith.addf %391, %394 : vector<16x128xf32>
    %396 = arith.negf %395 : vector<16x128xf32>
    %397 = math.exp %396 : vector<16x128xf32>
    %cst_137 = arith.constant 1.000000e+00 : f32
    %398 = vector.broadcast %cst_137 : f32 to vector<16x128xf32>
    %399 = arith.addf %398, %397 : vector<16x128xf32>
    %400 = arith.divf %398, %399 : vector<16x128xf32>
    %401 = arith.mulf %395, %400 : vector<16x128xf32>
    %402 = arith.truncf %401 : vector<16x128xf32> to vector<16x128xbf16>
    %c0_138 = arith.constant 0 : index
    %c0_139 = arith.constant 0 : index
    %c0_140 = arith.constant 0 : index
    %403 = vector.load %arg24[%c0_138, %c0_139, %c0_140] : memref<1x128x128xbf16, #tpu.memory_space<vmem>>, vector<1x128x128xbf16>
    %404 = vector.shape_cast %403 : vector<1x128x128xbf16> to vector<128x128xbf16>
    %cst_141 = arith.constant dense<0.000000e+00> : vector<16x128xf32>
    %405 = tpu.matmul %402, %404, %cst_141 {dimension_numbers = #tpu.dot_dimension_numbers<[1], [0], [0], [1], [0, 0, 1, 1], [], []>} : vector<16x128xbf16>, vector<128x128xbf16>, vector<16x128xf32> -> vector<16x128xf32>
    %c0_142 = arith.constant 0 : index
    %c0_143 = arith.constant 0 : index
    %c0_144 = arith.constant 0 : index
    %406 = vector.load %arg25[%c0_142, %c0_143, %c0_144] : memref<1x1x128xf32, #tpu.memory_space<vmem>>, vector<1x1x128xf32>
    %407 = vector.shape_cast %406 : vector<1x1x128xf32> to vector<1x128xf32>
    %408 = vector.broadcast %407 : vector<1x128xf32> to vector<16x128xf32>
    %409 = arith.addf %405, %408 : vector<16x128xf32>
    %410 = arith.addf %219, %409 : vector<16x128xf32>
    %cst_145 = arith.constant dense<0.000000e+00> : vector<16xf32>
    %411 = vector.multi_reduction <add>, %410, %cst_145 [1] : vector<16x128xf32> to vector<16xf32>
    %412 = vector.shape_cast %411 : vector<16xf32> to vector<16x1xf32>
    %cst_146 = arith.constant 1.280000e+02 : f32
    %413 = vector.broadcast %cst_146 : f32 to vector<16x1xf32>
    %414 = arith.divf %412, %413 : vector<16x1xf32>
    %415 = vector.broadcast %414 : vector<16x1xf32> to vector<16x128xf32>
    %416 = arith.subf %410, %415 : vector<16x128xf32>
    %417 = arith.mulf %416, %416 : vector<16x128xf32>
    %cst_147 = arith.constant dense<0.000000e+00> : vector<16xf32>
    %418 = vector.multi_reduction <add>, %417, %cst_147 [1] : vector<16x128xf32> to vector<16xf32>
    %419 = vector.shape_cast %418 : vector<16xf32> to vector<16x1xf32>
    %cst_148 = arith.constant 1.280000e+02 : f32
    %420 = vector.broadcast %cst_148 : f32 to vector<16x1xf32>
    %421 = arith.divf %419, %420 : vector<16x1xf32>
    %422 = vector.broadcast %414 : vector<16x1xf32> to vector<16x128xf32>
    %423 = arith.subf %410, %422 : vector<16x128xf32>
    %cst_149 = arith.constant 9.99999974E-6 : f32
    %424 = vector.broadcast %cst_149 : f32 to vector<16x1xf32>
    %425 = arith.addf %421, %424 : vector<16x1xf32>
    %426 = math.rsqrt %425 : vector<16x1xf32>
    %427 = vector.broadcast %426 : vector<16x1xf32> to vector<16x128xf32>
    %428 = arith.mulf %423, %427 : vector<16x128xf32>
    %c0_150 = arith.constant 0 : index
    %c0_151 = arith.constant 0 : index
    %c0_152 = arith.constant 0 : index
    %429 = vector.load %arg26[%c0_150, %c0_151, %c0_152] : memref<1x1x128xf32, #tpu.memory_space<vmem>>, vector<1x1x128xf32>
    %430 = vector.shape_cast %429 : vector<1x1x128xf32> to vector<1x128xf32>
    %431 = vector.broadcast %430 : vector<1x128xf32> to vector<16x128xf32>
    %432 = arith.mulf %428, %431 : vector<16x128xf32>
    %c0_153 = arith.constant 0 : index
    %c0_154 = arith.constant 0 : index
    %c0_155 = arith.constant 0 : index
    %433 = vector.load %arg27[%c0_153, %c0_154, %c0_155] : memref<1x1x128xf32, #tpu.memory_space<vmem>>, vector<1x1x128xf32>
    %434 = vector.shape_cast %433 : vector<1x1x128xf32> to vector<1x128xf32>
    %435 = vector.broadcast %434 : vector<1x128xf32> to vector<16x128xf32>
    %436 = arith.addf %432, %435 : vector<16x128xf32>
    %437 = arith.truncf %436 : vector<16x128xf32> to vector<16x128xbf16>
    %c0_156 = arith.constant 0 : index
    %c0_157 = arith.constant 0 : index
    %c0_158 = arith.constant 0 : index
    %438 = vector.load %arg28[%c0_156, %c0_157, %c0_158] : memref<1x128x512xbf16, #tpu.memory_space<vmem>>, vector<1x128x512xbf16>
    %439 = vector.shape_cast %438 : vector<1x128x512xbf16> to vector<128x512xbf16>
    %cst_159 = arith.constant dense<0.000000e+00> : vector<16x512xf32>
    %440 = tpu.matmul %437, %439, %cst_159 {dimension_numbers = #tpu.dot_dimension_numbers<[1], [0], [0], [1], [0, 0, 1, 1], [], []>} : vector<16x128xbf16>, vector<128x512xbf16>, vector<16x512xf32> -> vector<16x512xf32>
    %c0_160 = arith.constant 0 : index
    %c0_161 = arith.constant 0 : index
    %c0_162 = arith.constant 0 : index
    %441 = vector.load %arg29[%c0_160, %c0_161, %c0_162] : memref<1x1x512xf32, #tpu.memory_space<vmem>>, vector<1x1x512xf32>
    %442 = vector.shape_cast %441 : vector<1x1x512xf32> to vector<1x512xf32>
    %443 = vector.broadcast %442 : vector<1x512xf32> to vector<16x512xf32>
    %444 = arith.addf %440, %443 : vector<16x512xf32>
    %445 = arith.negf %444 : vector<16x512xf32>
    %446 = math.exp %445 : vector<16x512xf32>
    %cst_163 = arith.constant 1.000000e+00 : f32
    %447 = vector.broadcast %cst_163 : f32 to vector<16x512xf32>
    %448 = arith.addf %447, %446 : vector<16x512xf32>
    %449 = arith.divf %447, %448 : vector<16x512xf32>
    %450 = arith.mulf %444, %449 : vector<16x512xf32>
    %451 = arith.truncf %450 : vector<16x512xf32> to vector<16x512xbf16>
    %c0_164 = arith.constant 0 : index
    %c0_165 = arith.constant 0 : index
    %c0_166 = arith.constant 0 : index
    %452 = vector.load %arg30[%c0_164, %c0_165, %c0_166] : memref<1x512x128xbf16, #tpu.memory_space<vmem>>, vector<1x512x128xbf16>
    %453 = vector.shape_cast %452 : vector<1x512x128xbf16> to vector<512x128xbf16>
    %cst_167 = arith.constant dense<0.000000e+00> : vector<16x128xf32>
    %454 = tpu.matmul %451, %453, %cst_167 {dimension_numbers = #tpu.dot_dimension_numbers<[1], [0], [0], [1], [0, 0, 1, 1], [], []>} : vector<16x512xbf16>, vector<512x128xbf16>, vector<16x128xf32> -> vector<16x128xf32>
    %c0_168 = arith.constant 0 : index
    %c0_169 = arith.constant 0 : index
    %c0_170 = arith.constant 0 : index
    %455 = vector.load %arg31[%c0_168, %c0_169, %c0_170] : memref<1x1x128xf32, #tpu.memory_space<vmem>>, vector<1x1x128xf32>
    %456 = vector.shape_cast %455 : vector<1x1x128xf32> to vector<1x128xf32>
    %457 = vector.broadcast %456 : vector<1x128xf32> to vector<16x128xf32>
    %458 = arith.addf %454, %457 : vector<16x128xf32>
    %cst_171 = arith.constant 5.000000e-01 : f32
    %459 = vector.broadcast %cst_171 : f32 to vector<16x128xf32>
    %460 = arith.mulf %459, %458 : vector<16x128xf32>
    %461 = arith.addf %410, %460 : vector<16x128xf32>
    %cst_172 = arith.constant dense<0.000000e+00> : vector<16xf32>
    %462 = vector.multi_reduction <add>, %461, %cst_172 [1] : vector<16x128xf32> to vector<16xf32>
    %463 = vector.shape_cast %462 : vector<16xf32> to vector<16x1xf32>
    %cst_173 = arith.constant 1.280000e+02 : f32
    %464 = vector.broadcast %cst_173 : f32 to vector<16x1xf32>
    %465 = arith.divf %463, %464 : vector<16x1xf32>
    %466 = vector.broadcast %465 : vector<16x1xf32> to vector<16x128xf32>
    %467 = arith.subf %461, %466 : vector<16x128xf32>
    %468 = arith.mulf %467, %467 : vector<16x128xf32>
    %cst_174 = arith.constant dense<0.000000e+00> : vector<16xf32>
    %469 = vector.multi_reduction <add>, %468, %cst_174 [1] : vector<16x128xf32> to vector<16xf32>
    %470 = vector.shape_cast %469 : vector<16xf32> to vector<16x1xf32>
    %cst_175 = arith.constant 1.280000e+02 : f32
    %471 = vector.broadcast %cst_175 : f32 to vector<16x1xf32>
    %472 = arith.divf %470, %471 : vector<16x1xf32>
    %473 = vector.broadcast %465 : vector<16x1xf32> to vector<16x128xf32>
    %474 = arith.subf %461, %473 : vector<16x128xf32>
    %cst_176 = arith.constant 9.99999974E-6 : f32
    %475 = vector.broadcast %cst_176 : f32 to vector<16x1xf32>
    %476 = arith.addf %472, %475 : vector<16x1xf32>
    %477 = math.rsqrt %476 : vector<16x1xf32>
    %478 = vector.broadcast %477 : vector<16x1xf32> to vector<16x128xf32>
    %479 = arith.mulf %474, %478 : vector<16x128xf32>
    %c0_177 = arith.constant 0 : index
    %c0_178 = arith.constant 0 : index
    %c0_179 = arith.constant 0 : index
    %480 = vector.load %arg32[%c0_177, %c0_178, %c0_179] : memref<1x1x128xf32, #tpu.memory_space<vmem>>, vector<1x1x128xf32>
    %481 = vector.shape_cast %480 : vector<1x1x128xf32> to vector<1x128xf32>
    %482 = vector.broadcast %481 : vector<1x128xf32> to vector<16x128xf32>
    %483 = arith.mulf %479, %482 : vector<16x128xf32>
    %c0_180 = arith.constant 0 : index
    %c0_181 = arith.constant 0 : index
    %c0_182 = arith.constant 0 : index
    %484 = vector.load %arg33[%c0_180, %c0_181, %c0_182] : memref<1x1x128xf32, #tpu.memory_space<vmem>>, vector<1x1x128xf32>
    %485 = vector.shape_cast %484 : vector<1x1x128xf32> to vector<1x128xf32>
    %486 = vector.broadcast %485 : vector<1x128xf32> to vector<16x128xf32>
    %487 = arith.addf %483, %486 : vector<16x128xf32>
    %c0_183 = arith.constant 0 : index
    %c0_184 = arith.constant 0 : index
    %488 = vector.load %arg35[%c0_183, %c0_184] : memref<16x128xf32, #tpu.memory_space<vmem>>, vector<16x128xf32>
    tpu.vector_store %arg35[%c0_183, %c0_184], %487 {strides = array<i32>} : memref<16x128xf32, #tpu.memory_space<vmem>>, vector<16x128xf32>,
    %c1_i32_185 = arith.constant 1 : i32
    %489 = arith.cmpi eq, %arg1, %c1_i32_185 : i32
    %490 = arith.extui %489 : i1 to i32
    %c0_i32_186 = arith.constant 0 : i32
    %491 = arith.cmpi ne, %490, %c0_i32_186 : i32
    scf.if %491 {
      %492 = vector.shape_cast %487 : vector<16x128xf32> to vector<2x8x128xf32>
      %c0_187 = arith.constant 0 : index
      %c0_188 = arith.constant 0 : index
      %c0_189 = arith.constant 0 : index
      %493 = vector.load %arg34[%c0_187, %c0_188, %c0_189] : memref<2x8x128xf32, #tpu.memory_space<vmem>>, vector<2x8x128xf32>
      tpu.vector_store %arg34[%c0_187, %c0_188, %c0_189], %492 {strides = array<i32>} : memref<2x8x128xf32, #tpu.memory_space<vmem>>, vector<2x8x128xf32>,
    } else {
    }
    return
  }
  func.func @transform_0(%arg0: i32, %arg1: i32) -> i32 {
    %c0_i32 = arith.constant 0 : i32
    %c0_i32_0 = arith.constant 0 : i32
    return %c0_i32 : i32
  }
  func.func @transform_1(%arg0: i32, %arg1: i32) -> (i32, i32, i32) {
    %c0_i32 = arith.constant 0 : i32
    %c0_i32_0 = arith.constant 0 : i32
    %c0_i32_1 = arith.constant 0 : i32
    return %arg0, %c0_i32, %c0_i32_0 : i32, i32, i32
  }
  func.func @transform_2(%arg0: i32, %arg1: i32) -> (i32, i32) {
    %c0_i32 = arith.constant 0 : i32
    %c0_i32_0 = arith.constant 0 : i32
    %c0_i32_1 = arith.constant 0 : i32
    return %c0_i32, %c0_i32_0 : i32, i32
  }
  func.func @transform_3(%arg0: i32, %arg1: i32) -> (i32, i32, i32) {
    %c0_i32 = arith.constant 0 : i32
    %c0_i32_0 = arith.constant 0 : i32
    %c0_i32_1 = arith.constant 0 : i32
    return %arg1, %c0_i32, %c0_i32_0 : i32, i32, i32
  }
  func.func @transform_4(%arg0: i32, %arg1: i32) -> (i32, i32, i32) {
    %c0_i32 = arith.constant 0 : i32
    %c0_i32_0 = arith.constant 0 : i32
    %c0_i32_1 = arith.constant 0 : i32
    return %arg1, %c0_i32, %c0_i32_0 : i32, i32, i32
  }
  func.func @transform_5(%arg0: i32, %arg1: i32) -> (i32, i32, i32) {
    %c0_i32 = arith.constant 0 : i32
    %c0_i32_0 = arith.constant 0 : i32
    %c0_i32_1 = arith.constant 0 : i32
    return %arg1, %c0_i32, %c0_i32_0 : i32, i32, i32
  }
  func.func @transform_6(%arg0: i32, %arg1: i32) -> (i32, i32, i32) {
    %c0_i32 = arith.constant 0 : i32
    %c0_i32_0 = arith.constant 0 : i32
    %c0_i32_1 = arith.constant 0 : i32
    return %arg1, %c0_i32, %c0_i32_0 : i32, i32, i32
  }
  func.func @transform_7(%arg0: i32, %arg1: i32) -> (i32, i32, i32) {
    %c0_i32 = arith.constant 0 : i32
    %c0_i32_0 = arith.constant 0 : i32
    %c0_i32_1 = arith.constant 0 : i32
    return %arg1, %c0_i32, %c0_i32_0 : i32, i32, i32
  }
  func.func @transform_8(%arg0: i32, %arg1: i32) -> (i32, i32, i32) {
    %c0_i32 = arith.constant 0 : i32
    %c0_i32_0 = arith.constant 0 : i32
    %c0_i32_1 = arith.constant 0 : i32
    return %arg1, %c0_i32, %c0_i32_0 : i32, i32, i32
  }
  func.func @transform_9(%arg0: i32, %arg1: i32) -> (i32, i32, i32) {
    %c0_i32 = arith.constant 0 : i32
    %c0_i32_0 = arith.constant 0 : i32
    %c0_i32_1 = arith.constant 0 : i32
    return %arg1, %c0_i32, %c0_i32_0 : i32, i32, i32
  }
  func.func @transform_10(%arg0: i32, %arg1: i32) -> (i32, i32, i32) {
    %c0_i32 = arith.constant 0 : i32
    %c0_i32_0 = arith.constant 0 : i32
    %c0_i32_1 = arith.constant 0 : i32
    return %arg1, %c0_i32, %c0_i32_0 : i32, i32, i32
  }
  func.func @transform_11(%arg0: i32, %arg1: i32) -> (i32, i32, i32) {
    %c0_i32 = arith.constant 0 : i32
    %c0_i32_0 = arith.constant 0 : i32
    %c0_i32_1 = arith.constant 0 : i32
    return %arg1, %c0_i32, %c0_i32_0 : i32, i32, i32
  }
  func.func @transform_12(%arg0: i32, %arg1: i32) -> (i32, i32, i32) {
    %c0_i32 = arith.constant 0 : i32
    %c0_i32_0 = arith.constant 0 : i32
    %c0_i32_1 = arith.constant 0 : i32
    return %arg1, %c0_i32, %c0_i32_0 : i32, i32, i32
  }
  func.func @transform_13(%arg0: i32, %arg1: i32) -> (i32, i32, i32) {
    %c0_i32 = arith.constant 0 : i32
    %c0_i32_0 = arith.constant 0 : i32
    %c0_i32_1 = arith.constant 0 : i32
    return %arg1, %c0_i32, %c0_i32_0 : i32, i32, i32
  }
  func.func @transform_14(%arg0: i32, %arg1: i32) -> (i32, i32, i32) {
    %c0_i32 = arith.constant 0 : i32
    %c0_i32_0 = arith.constant 0 : i32
    %c0_i32_1 = arith.constant 0 : i32
    return %arg1, %c0_i32, %c0_i32_0 : i32, i32, i32
  }
  func.func @transform_15(%arg0: i32, %arg1: i32) -> (i32, i32, i32) {
    %c0_i32 = arith.constant 0 : i32
    %c0_i32_0 = arith.constant 0 : i32
    %c0_i32_1 = arith.constant 0 : i32
    return %arg1, %c0_i32, %c0_i32_0 : i32, i32, i32
  }
  func.func @transform_16(%arg0: i32, %arg1: i32) -> (i32, i32, i32) {
    %c0_i32 = arith.constant 0 : i32
    %c0_i32_0 = arith.constant 0 : i32
    %c0_i32_1 = arith.constant 0 : i32
    return %arg1, %c0_i32, %c0_i32_0 : i32, i32, i32
  }
  func.func @transform_17(%arg0: i32, %arg1: i32) -> (i32, i32, i32) {
    %c0_i32 = arith.constant 0 : i32
    %c0_i32_0 = arith.constant 0 : i32
    %c0_i32_1 = arith.constant 0 : i32
    return %arg1, %c0_i32, %c0_i32_0 : i32, i32, i32
  }
  func.func @transform_18(%arg0: i32, %arg1: i32) -> (i32, i32, i32) {
    %c0_i32 = arith.constant 0 : i32
    %c0_i32_0 = arith.constant 0 : i32
    %c0_i32_1 = arith.constant 0 : i32
    return %arg1, %c0_i32, %c0_i32_0 : i32, i32, i32
  }
  func.func @transform_19(%arg0: i32, %arg1: i32) -> (i32, i32, i32) {
    %c0_i32 = arith.constant 0 : i32
    %c0_i32_0 = arith.constant 0 : i32
    %c0_i32_1 = arith.constant 0 : i32
    return %arg1, %c0_i32, %c0_i32_0 : i32, i32, i32
  }
  func.func @transform_20(%arg0: i32, %arg1: i32) -> (i32, i32, i32) {
    %c0_i32 = arith.constant 0 : i32
    %c0_i32_0 = arith.constant 0 : i32
    %c0_i32_1 = arith.constant 0 : i32
    return %arg1, %c0_i32, %c0_i32_0 : i32, i32, i32
  }
  func.func @transform_21(%arg0: i32, %arg1: i32) -> (i32, i32, i32) {
    %c0_i32 = arith.constant 0 : i32
    %c0_i32_0 = arith.constant 0 : i32
    %c0_i32_1 = arith.constant 0 : i32
    return %arg1, %c0_i32, %c0_i32_0 : i32, i32, i32
  }
  func.func @transform_22(%arg0: i32, %arg1: i32) -> (i32, i32, i32) {
    %c0_i32 = arith.constant 0 : i32
    %c0_i32_0 = arith.constant 0 : i32
    %c0_i32_1 = arith.constant 0 : i32
    return %arg1, %c0_i32, %c0_i32_0 : i32, i32, i32
  }
  func.func @transform_23(%arg0: i32, %arg1: i32) -> (i32, i32, i32) {
    %c0_i32 = arith.constant 0 : i32
    %c0_i32_0 = arith.constant 0 : i32
    %c0_i32_1 = arith.constant 0 : i32
    return %arg1, %c0_i32, %c0_i32_0 : i32, i32, i32
  }
  func.func @transform_24(%arg0: i32, %arg1: i32) -> (i32, i32, i32) {
    %c0_i32 = arith.constant 0 : i32
    %c0_i32_0 = arith.constant 0 : i32
    %c0_i32_1 = arith.constant 0 : i32
    return %arg1, %c0_i32, %c0_i32_0 : i32, i32, i32
  }
  func.func @transform_25(%arg0: i32, %arg1: i32) -> (i32, i32, i32) {
    %c0_i32 = arith.constant 0 : i32
    %c0_i32_0 = arith.constant 0 : i32
    %c0_i32_1 = arith.constant 0 : i32
    return %arg1, %c0_i32, %c0_i32_0 : i32, i32, i32
  }
  func.func @transform_26(%arg0: i32, %arg1: i32) -> (i32, i32, i32) {
    %c0_i32 = arith.constant 0 : i32
    %c0_i32_0 = arith.constant 0 : i32
    %c0_i32_1 = arith.constant 0 : i32
    return %arg1, %c0_i32, %c0_i32_0 : i32, i32, i32
  }
  func.func @transform_27(%arg0: i32, %arg1: i32) -> (i32, i32, i32) {
    %c0_i32 = arith.constant 0 : i32
    %c0_i32_0 = arith.constant 0 : i32
    %c0_i32_1 = arith.constant 0 : i32
    return %arg1, %c0_i32, %c0_i32_0 : i32, i32, i32
  }
  func.func @transform_28(%arg0: i32, %arg1: i32) -> (i32, i32, i32) {
    %c0_i32 = arith.constant 0 : i32
    %c0_i32_0 = arith.constant 0 : i32
    %c0_i32_1 = arith.constant 0 : i32
    return %arg1, %c0_i32, %c0_i32_0 : i32, i32, i32
  }
  func.func @transform_29(%arg0: i32, %arg1: i32) -> (i32, i32, i32) {
    %c0_i32 = arith.constant 0 : i32
    %c0_i32_0 = arith.constant 0 : i32
    %c0_i32_1 = arith.constant 0 : i32
    return %arg1, %c0_i32, %c0_i32_0 : i32, i32, i32
  }
  func.func @transform_30(%arg0: i32, %arg1: i32) -> (i32, i32, i32) {
    %c0_i32 = arith.constant 0 : i32
    %c0_i32_0 = arith.constant 0 : i32
    %c0_i32_1 = arith.constant 0 : i32
    return %arg1, %c0_i32, %c0_i32_0 : i32, i32, i32
  }
  func.func @transform_31(%arg0: i32, %arg1: i32) -> (i32, i32, i32) {
    %c0_i32 = arith.constant 0 : i32
    %c0_i32_0 = arith.constant 0 : i32
    %c0_i32_1 = arith.constant 0 : i32
    return %arg1, %c0_i32, %c0_i32_0 : i32, i32, i32
  }
  func.func @transform_32(%arg0: i32, %arg1: i32) -> (i32, i32, i32) {
    %c0_i32 = arith.constant 0 : i32
    %c0_i32_0 = arith.constant 0 : i32
    %c0_i32_1 = arith.constant 0 : i32
    return %arg0, %c0_i32, %c0_i32_0 : i32, i32, i32
  }
}

</mosaic_0001>

<llo_original>
// kernel: conformer_forward.1
$region0: #{conformer_forward.1}
  #allocation0 [shape = 'u32[]', space=smem, size = 0x4, offset = 0x4, fixed_abs, tag = 'smem constant byte address 0x4 - core index']
  #allocation1 [shape = 'u32[144,128]{1,0:T(1,128)}', space=vmem, size = 0x12000, scoped, tag = 'internal scratch']
  #allocation2 [shape = 'f32[16,128]{1,0:T(8,128)}', space=vmem, size = 0x2000, scoped, tag = 'scratch operand']
  %s0 = inlined_call_operand.smem [shape: u32[33], index: -1, kind: input, shape index: {}]
  %s1 = sld [smem:[%s0]]
  %s2 = scalar_lea.smem %s0, 1
  %s3 = sld [smem:[%s2]]
  %s4 = scalar_lea.smem %s0, 2
  %s5 = sld [smem:[%s4]]
  %s6 = scalar_lea.smem %s0, 3
  %s7 = sld [smem:[%s6]]
  %s8 = scalar_lea.smem %s0, 4
  %s9 = sld [smem:[%s8]]
  %s10 = scalar_lea.smem %s0, 5
  %s11 = sld [smem:[%s10]]
  %s12 = scalar_lea.smem %s0, 6
  %s13 = sld [smem:[%s12]]
  %s14 = scalar_lea.smem %s0, 7
  %s15 = sld [smem:[%s14]]
  %s16 = scalar_lea.smem %s0, 8
  %s17 = sld [smem:[%s16]]
  %s18 = scalar_lea.smem %s0, 9
  %s19 = sld [smem:[%s18]]
  %s20 = scalar_lea.smem %s0, 10
  %s21 = sld [smem:[%s20]]
  %s22 = scalar_lea.smem %s0, 11
  %s23 = sld [smem:[%s22]]
  %s24 = scalar_lea.smem %s0, 12
  %s25 = sld [smem:[%s24]]
  %s26 = scalar_lea.smem %s0, 13
  %s27 = sld [smem:[%s26]]
  %s28 = scalar_lea.smem %s0, 14
  %s29 = sld [smem:[%s28]]
  %s30 = scalar_lea.smem %s0, 15
  %s31 = sld [smem:[%s30]]
  %s32 = scalar_lea.smem %s0, 16
  %s33 = sld [smem:[%s32]]
  %s34 = scalar_lea.smem %s0, 17
  %s35 = sld [smem:[%s34]]
  %s36 = scalar_lea.smem %s0, 18
  %s37 = sld [smem:[%s36]]
  %s38 = scalar_lea.smem %s0, 19
  %s39 = sld [smem:[%s38]]
  %s40 = scalar_lea.smem %s0, 20
  %s41 = sld [smem:[%s40]]
  %s42 = scalar_lea.smem %s0, 21
  %s43 = sld [smem:[%s42]]
  %s44 = scalar_lea.smem %s0, 22
  %s45 = sld [smem:[%s44]]
  %s46 = scalar_lea.smem %s0, 23
  %s47 = sld [smem:[%s46]]
  %s48 = scalar_lea.smem %s0, 24
  %s49 = sld [smem:[%s48]]
  %s50 = scalar_lea.smem %s0, 25
  %s51 = sld [smem:[%s50]]
  %s52 = scalar_lea.smem %s0, 26
  %s53 = sld [smem:[%s52]]
  %s54 = scalar_lea.smem %s0, 27
  %s55 = sld [smem:[%s54]]
  %s56 = scalar_lea.smem %s0, 28
  %s57 = sld [smem:[%s56]]
  %s58 = scalar_lea.smem %s0, 29
  %s59 = sld [smem:[%s58]]
  %s60 = scalar_lea.smem %s0, 30
  %s61 = sld [smem:[%s60]]
  %s62 = scalar_lea.smem %s0, 31
  %s63 = sld [smem:[%s62]]
  %s64 = scalar_lea.smem %s0, 32
  %s65 = sld [smem:[%s64]]
  %s66 = sld [smem:[#allocation0]]
  $region233: #{conformer_forward.1} parent=0
    _
  %s68 = ssub.s32 1, %s66
  %s69 = scalar_select 0, %s68, %s66
  $region1: #{conformer_forward.1} parent=0
    #allocation3 [shape = 'u8[512]{0}', space=smem, size = 0x200, scoped, tag = 'input window, operand 0, single buffered']
    #allocation4 [shape = 's32[2]{0}', space=sflag, size = 0x8, scoped, tag = 'scoped memory for conformer_forward.1']
    #allocation5 [shape = 's32[2]{0}', space=sflag, size = 0x8, scoped, tag = 'scoped memory for conformer_forward.1']
    #allocation6 [shape = 'u8[262144]{0}', space=vmem, size = 0x40000, scoped, tag = 'input window, operand 5']
    #allocation7 [shape = 'u8[262144]{0}', space=vmem, size = 0x40000, scoped, tag = 'input window, operand 7']
    #allocation8 [shape = 's32[2]{0}', space=sflag, size = 0x8, scoped, tag = 'scoped memory for conformer_forward.1']
    #allocation9 [shape = 'u8[1024]{0}', space=vmem, size = 0x400, scoped, tag = 'input window, operand 9']
    #allocation10 [shape = 'u8[3072]{0}', space=vmem, size = 0xc00, scoped, tag = 'input window, operand 12']
    #allocation11 [shape = 's32[2]{0}', space=sflag, size = 0x8, scoped, tag = 'scoped memory for conformer_forward.1']
    #allocation12 [shape = 'u8[65536]{0}', space=vmem, size = 0x10000, scoped, tag = 'input window, operand 13']
    #allocation13 [shape = 'u8[1024]{0}', space=vmem, size = 0x400, scoped, tag = 'input window, operand 15']
    #allocation14 [shape = 's32[2]{0}', space=sflag, size = 0x8, scoped, tag = 'scoped memory for conformer_forward.1']
    #allocation15 [shape = 'u8[1024]{0}', space=vmem, size = 0x400, scoped, tag = 'input window, operand 16']
    #allocation16 [shape = 'u8[131072]{0}', space=vmem, size = 0x20000, scoped, tag = 'input window, operand 17']
    #allocation17 [shape = 's32[2]{0}', space=sflag, size = 0x8, scoped, tag = 'scoped memory for conformer_forward.1']
    #allocation18 [shape = 'u8[65536]{0}', space=vmem, size = 0x10000, scoped, tag = 'input window, operand 22']
    #allocation19 [shape = 'u8[1024]{0}', space=vmem, size = 0x400, scoped, tag = 'input window, operand 23']
    #allocation20 [shape = 's32[2]{0}', space=sflag, size = 0x8, scoped, tag = 'scoped memory for conformer_forward.1']
    #allocation21 [shape = 'u8[1024]{0}', space=vmem, size = 0x400, scoped, tag = 'input window, operand 24']
    #allocation22 [shape = 'u8[262144]{0}', space=vmem, size = 0x40000, scoped, tag = 'input window, operand 26']
    #allocation23 [shape = 's32[2]{0}', space=sflag, size = 0x8, scoped, tag = 'scoped memory for conformer_forward.1']
    #allocation24 [shape = 'u8[262144]{0}', space=vmem, size = 0x40000, scoped, tag = 'input window, operand 28']
    #allocation25 [shape = 'u8[1024]{0}', space=vmem, size = 0x400, scoped, tag = 'input window, operand 30']
    #allocation26 [shape = 's32[2]{0}', space=sflag, size = 0x8, scoped, tag = 'scoped memory for conformer_forward.1']
    #allocation27 [shape = 'u8[1024]{0}', space=vmem, size = 0x400, scoped, tag = 'input window, operand 31']
    %70 = vsyncpa [#allocation5], 0
    %71 = vsyncpa [#allocation4], 0
    %s72 = scalar_lea.sflag [#allocation4], 1
    %73 = vsyncpa %s72, 0
    %74 = vsyncpa [#allocation8], 0
    %s75 = scalar_lea.sflag [#allocation8], 1
    %76 = vsyncpa %s75, 0
    %77 = vsyncpa [#allocation11], 0
    %s78 = scalar_lea.sflag [#allocation11], 1
    %79 = vsyncpa %s78, 0
    %80 = vsyncpa [#allocation14], 0
    %s81 = scalar_lea.sflag [#allocation14], 1
    %82 = vsyncpa %s81, 0
    %83 = vsyncpa [#allocation17], 0
    %s84 = scalar_lea.sflag [#allocation17], 1
    %85 = vsyncpa %s84, 0
    %86 = vsyncpa [#allocation20], 0
    %s87 = scalar_lea.sflag [#allocation20], 1
    %88 = vsyncpa %s87, 0
    %89 = vsyncpa [#allocation23], 0
    %s90 = scalar_lea.sflag [#allocation23], 1
    %91 = vsyncpa %s90, 0
    %92 = vsyncpa [#allocation26], 0
    %s93 = scalar_lea.sflag [#allocation26], 1
    %94 = vsyncpa %s93, 0
    loop: start=0, step=1, limit=4
    $region2: #{conformer_forward.1} parent=1 // loop_pre_header
      _
    $region3: #{conformer_forward.1} parent=1 // loop_header
      %s96 = sphi 0, %s100
      %p97 = scmp.ge.s32.totalorder %s96, 4
      %s103 = sphi 0, %s115
      %s104 = sphi 0, %s111
      %s105 = sphi 0, %s103
      %s106 = sphi 0, %s104
      %s107 = sphi 0, %s105
      %s108 = sphi 0, %s106
      %s116 = sphi 0, %s116
      %s118 = sphi 0, %s116
      %s119 = sphi 0, %s118
      %s133 = sphi 0, %s119
      %s139 = sphi 0, %s141
      %s142 = sphi 0, %s139
      %s143 = sphi 0, %s142
      %s159 = sphi 0, %s143
      %s163 = sphi 0, %s163
      %s165 = sphi 0, %s163
      %s166 = sphi 0, %s165
      %s180 = sphi 0, %s166
      %s186 = sphi 0, %s188
      %s189 = sphi 0, %s186
      %s190 = sphi 0, %s189
      %s206 = sphi 0, %s190
      %s212 = sphi 0, %s214
      %s215 = sphi 0, %s212
      %s216 = sphi 0, %s215
      %s232 = sphi 0, %s216
      %s238 = sphi 0, %s240
      %s241 = sphi 0, %s238
      %s242 = sphi 0, %s241
      %s258 = sphi 0, %s242
      %s264 = sphi 0, %s266
      %s267 = sphi 0, %s264
      %s268 = sphi 0, %s267
      %s284 = sphi 0, %s268
      %s290 = sphi 0, %s292
      %s293 = sphi 0, %s290
      %s294 = sphi 0, %s293
      %s310 = sphi 0, %s294
      %s316 = sphi 0, %s318
      %s319 = sphi 0, %s316
      %s320 = sphi 0, %s319
      %s336 = sphi 0, %s320
      %s342 = sphi 0, %s344
      %s345 = sphi 0, %s342
      %s346 = sphi 0, %s345
      %s362 = sphi 0, %s346
      %s368 = sphi 0, %s370
      %s371 = sphi 0, %s368
      %s372 = sphi 0, %s371
      %s388 = sphi 0, %s372
      %s394 = sphi 0, %s396
      %s397 = sphi 0, %s394
      %s398 = sphi 0, %s397
      %s414 = sphi 0, %s398
      %s420 = sphi 0, %s422
      %s423 = sphi 0, %s420
      %s424 = sphi 0, %s423
      %s440 = sphi 0, %s424
      %s446 = sphi 0, %s448
      %s449 = sphi 0, %s446
      %s450 = sphi 0, %s449
      %s466 = sphi 0, %s450
      %s472 = sphi 0, %s474
      %s475 = sphi 0, %s472
      %s476 = sphi 0, %s475
      %s492 = sphi 0, %s476
      %s498 = sphi 0, %s500
      %s501 = sphi 0, %s498
      %s502 = sphi 0, %s501
      %s518 = sphi 0, %s502
      %s524 = sphi 0, %s526
      %s527 = sphi 0, %s524
      %s528 = sphi 0, %s527
      %s544 = sphi 0, %s528
      %s550 = sphi 0, %s552
      %s553 = sphi 0, %s550
      %s554 = sphi 0, %s553
      %s570 = sphi 0, %s554
      %s576 = sphi 0, %s578
      %s579 = sphi 0, %s576
      %s580 = sphi 0, %s579
      %s596 = sphi 0, %s580
      %s602 = sphi 0, %s604
      %s605 = sphi 0, %s602
      %s606 = sphi 0, %s605
      %s622 = sphi 0, %s606
      %s628 = sphi 0, %s630
      %s631 = sphi 0, %s628
      %s632 = sphi 0, %s631
      %s648 = sphi 0, %s632
      %s654 = sphi 0, %s656
      %s657 = sphi 0, %s654
      %s658 = sphi 0, %s657
      %s674 = sphi 0, %s658
      %s680 = sphi 0, %s682
      %s683 = sphi 0, %s680
      %s684 = sphi 0, %s683
      %s700 = sphi 0, %s684
      %s706 = sphi 0, %s708
      %s709 = sphi 0, %s706
      %s710 = sphi 0, %s709
      %s726 = sphi 0, %s710
      %s732 = sphi 0, %s734
      %s735 = sphi 0, %s732
      %s736 = sphi 0, %s735
      %s752 = sphi 0, %s736
      %s758 = sphi 0, %s760
      %s761 = sphi 0, %s758
      %s762 = sphi 0, %s761
      %s778 = sphi 0, %s762
      %s784 = sphi 0, %s786
      %s787 = sphi 0, %s784
      %s788 = sphi 0, %s787
      %s804 = sphi 0, %s788
      %s810 = sphi 0, %s812
      %s813 = sphi 0, %s810
      %s814 = sphi 0, %s813
      %s830 = sphi 0, %s814
      %s836 = sphi 0, %s838
      %s839 = sphi 0, %s836
      %s840 = sphi 0, %s839
      %s856 = sphi 0, %s840
      %s862 = sphi 0, %s864
      %s865 = sphi 0, %s862
      %s866 = sphi 0, %s865
      %s882 = sphi 0, %s866
      %s888 = sphi 0, %s890
      %s891 = sphi 0, %s888
      %s892 = sphi 0, %s891
      %s908 = sphi 0, %s892
      %s914 = sphi 0, %s916
      %s917 = sphi 0, %s914
      %s918 = sphi 0, %s917
      %s934 = sphi 0, %s918
      %s940 = sphi 0, %s942
      %s943 = sphi 0, %s940
      %s944 = sphi 0, %s943
      %s960 = sphi 0, %s944
    $region4: #{conformer_forward.1} parent=1 // loop_header_branch
      %99 = sbr.rel (%p97) target = $region8
    $region5: #{conformer_forward.1} parent=1 // loop_body
      %s101 = ssub.s32 %s96, 1
      %s102 = ssub.s32 %s96, 2
      %s109 = sadd.s32 1, %s104
      %p110 = scmp.ge.s32.totalorder %s109, 2
      %s111 = scalar_select %p110, 0, %s109
      %s112 = sadd.s32 1, %s103
      %s113 = scalar_select %p110, %s112, %s103
      %p114 = scmp.ge.s32.totalorder %s113, 1
      %s115 = scalar_select %p114, 0, %s113
      %s117 = sadd.s32 %s116, 1
      %p120 = scmp.eq.s32.totalorder %s96, 1
      %p121 = scmp.ne.s32.totalorder %s116, %s118
      %p122 = scmp.eq.s32.totalorder %s96, 0
      %p123 = por %p121, %p122
      %p124 = scmp.ne.s32.totalorder %s116, %s118
      %p125 = scmp.eq.s32.totalorder %s101, 1
      %p126 = por %p124, %p125
      %p127 = scmp.ne.s32.totalorder %s118, %s119
      %p128 = scmp.eq.s32.totalorder %s101, 0
      %p129 = por %p127, %p128
      %p130 = scmp.ne.s32.totalorder %s118, %s119
      %p131 = scmp.eq.s32.totalorder %s102, 1
      %p132 = por %p130, %p131
      %p134 = scmp.ne.s32.totalorder %s119, %s133
      %p135 = scmp.eq.s32.totalorder %s102, 0
      %p136 = por %p134, %p135
      %s137 = ssub.s32 %s103, %s115
      %p138 = scmp.eq.s32.totalorder %s137, 0
      %s140 = sadd.s32 %s139, 1
      %s141 = scalar_select %p138, %s139, %s140
      %p144 = pneg %p138
      %p145 = scmp.eq.s32.totalorder %s96, 1
      %p146 = por %p144, %p145
      %p147 = scmp.ne.s32.totalorder %s139, %s142
      %p148 = scmp.eq.s32.totalorder %s96, 0
      %p149 = por %p147, %p148
      %p150 = scmp.ne.s32.totalorder %s139, %s142
      %p151 = scmp.eq.s32.totalorder %s101, 1
      %p152 = por %p150, %p151
      %p153 = scmp.ne.s32.totalorder %s142, %s143
      %p154 = scmp.eq.s32.totalorder %s101, 0
      %p155 = por %p153, %p154
      %p156 = scmp.ne.s32.totalorder %s142, %s143
      %p157 = scmp.eq.s32.totalorder %s102, 1
      %p158 = por %p156, %p157
      %p160 = scmp.ne.s32.totalorder %s143, %s159
      %p161 = scmp.eq.s32.totalorder %s102, 0
      %p162 = por %p160, %p161
      %s164 = sadd.s32 %s163, 1
      %p167 = scmp.eq.s32.totalorder %s96, 1
      %p168 = scmp.ne.s32.totalorder %s163, %s165
      %p169 = scmp.eq.s32.totalorder %s96, 0
      %p170 = por %p168, %p169
      %p171 = scmp.ne.s32.totalorder %s163, %s165
      %p172 = scmp.eq.s32.totalorder %s101, 1
      %p173 = por %p171, %p172
      %p174 = scmp.ne.s32.totalorder %s165, %s166
      %p175 = scmp.eq.s32.totalorder %s101, 0
      %p176 = por %p174, %p175
      %p177 = scmp.ne.s32.totalorder %s165, %s166
      %p178 = scmp.eq.s32.totalorder %s102, 1
      %p179 = por %p177, %p178
      %p181 = scmp.ne.s32.totalorder %s166, %s180
      %p182 = scmp.eq.s32.totalorder %s102, 0
      %p183 = por %p181, %p182
      %s184 = ssub.s32 %s104, %s111
      %p185 = scmp.eq.s32.totalorder %s184, 0
      %s187 = sadd.s32 %s186, 1
      %s188 = scalar_select %p185, %s186, %s187
      %p191 = pneg %p185
      %p192 = scmp.eq.s32.totalorder %s96, 1
      %p193 = por %p191, %p192
      %p194 = scmp.ne.s32.totalorder %s186, %s189
      %p195 = scmp.eq.s32.totalorder %s96, 0
      %p196 = por %p194, %p195
      %p197 = scmp.ne.s32.totalorder %s186, %s189
      %p198 = scmp.eq.s32.totalorder %s101, 1
      %p199 = por %p197, %p198
      %p200 = scmp.ne.s32.totalorder %s189, %s190
      %p201 = scmp.eq.s32.totalorder %s101, 0
      %p202 = por %p200, %p201
      %p203 = scmp.ne.s32.totalorder %s189, %s190
      %p204 = scmp.eq.s32.totalorder %s102, 1
      %p205 = por %p203, %p204
      %p207 = scmp.ne.s32.totalorder %s190, %s206
      %p208 = scmp.eq.s32.totalorder %s102, 0
      %p209 = por %p207, %p208
      %s210 = ssub.s32 %s104, %s111
      %p211 = scmp.eq.s32.totalorder %s210, 0
      %s213 = sadd.s32 %s212, 1
      %s214 = scalar_select %p211, %s212, %s213
      %p217 = pneg %p211
      %p218 = scmp.eq.s32.totalorder %s96, 1
      %p219 = por %p217, %p218
      %p220 = scmp.ne.s32.totalorder %s212, %s215
      %p221 = scmp.eq.s32.totalorder %s96, 0
      %p222 = por %p220, %p221
      %p223 = scmp.ne.s32.totalorder %s212, %s215
      %p224 = scmp.eq.s32.totalorder %s101, 1
      %p225 = por %p223, %p224
      %p226 = scmp.ne.s32.totalorder %s215, %s216
      %p227 = scmp.eq.s32.totalorder %s101, 0
      %p228 = por %p226, %p227
      %p229 = scmp.ne.s32.totalorder %s215, %s216
      %p230 = scmp.eq.s32.totalorder %s102, 1
      %p231 = por %p229, %p230
      %p233 = scmp.ne.s32.totalorder %s216, %s232
      %p234 = scmp.eq.s32.totalorder %s102, 0
      %p235 = por %p233, %p234
      %s236 = ssub.s32 %s104, %s111
      %p237 = scmp.eq.s32.totalorder %s236, 0
      %s239 = sadd.s32 %s238, 1
      %s240 = scalar_select %p237, %s238, %s239
      %p243 = pneg %p237
      %p244 = scmp.eq.s32.totalorder %s96, 1
      %p245 = por %p243, %p244
      %p246 = scmp.ne.s32.totalorder %s238, %s241
      %p247 = scmp.eq.s32.totalorder %s96, 0
      %p248 = por %p246, %p247
      %p249 = scmp.ne.s32.totalorder %s238, %s241
      %p250 = scmp.eq.s32.totalorder %s101, 1
      %p251 = por %p249, %p250
      %p252 = scmp.ne.s32.totalorder %s241, %s242
      %p253 = scmp.eq.s32.totalorder %s101, 0
      %p254 = por %p252, %p253
      %p255 = scmp.ne.s32.totalorder %s241, %s242
      %p256 = scmp.eq.s32.totalorder %s102, 1
      %p257 = por %p255, %p256
      %p259 = scmp.ne.s32.totalorder %s242, %s258
      %p260 = scmp.eq.s32.totalorder %s102, 0
      %p261 = por %p259, %p260
      %s262 = ssub.s32 %s104, %s111
      %p263 = scmp.eq.s32.totalorder %s262, 0
      %s265 = sadd.s32 %s264, 1
      %s266 = scalar_select %p263, %s264, %s265
      %p269 = pneg %p263
      %p270 = scmp.eq.s32.totalorder %s96, 1
      %p271 = por %p269, %p270
      %p272 = scmp.ne.s32.totalorder %s264, %s267
      %p273 = scmp.eq.s32.totalorder %s96, 0
      %p274 = por %p272, %p273
      %p275 = scmp.ne.s32.totalorder %s264, %s267
      %p276 = scmp.eq.s32.totalorder %s101, 1
      %p277 = por %p275, %p276
      %p278 = scmp.ne.s32.totalorder %s267, %s268
      %p279 = scmp.eq.s32.totalorder %s101, 0
      %p280 = por %p278, %p279
      %p281 = scmp.ne.s32.totalorder %s267, %s268
      %p282 = scmp.eq.s32.totalorder %s102, 1
      %p283 = por %p281, %p282
      %p285 = scmp.ne.s32.totalorder %s268, %s284
      %p286 = scmp.eq.s32.totalorder %s102, 0
      %p287 = por %p285, %p286
      %s288 = ssub.s32 %s104, %s111
      %p289 = scmp.eq.s32.totalorder %s288, 0
      %s291 = sadd.s32 %s290, 1
      %s292 = scalar_select %p289, %s290, %s291
      %p295 = pneg %p289
      %p296 = scmp.eq.s32.totalorder %s96, 1
      %p297 = por %p295, %p296
      %p298 = scmp.ne.s32.totalorder %s290, %s293
      %p299 = scmp.eq.s32.totalorder %s96, 0
      %p300 = por %p298, %p299
      %p301 = scmp.ne.s32.totalorder %s290, %s293
      %p302 = scmp.eq.s32.totalorder %s101, 1
      %p303 = por %p301, %p302
      %p304 = scmp.ne.s32.totalorder %s293, %s294
      %p305 = scmp.eq.s32.totalorder %s101, 0
      %p306 = por %p304, %p305
      %p307 = scmp.ne.s32.totalorder %s293, %s294
      %p308 = scmp.eq.s32.totalorder %s102, 1
      %p309 = por %p307, %p308
      %p311 = scmp.ne.s32.totalorder %s294, %s310
      %p312 = scmp.eq.s32.totalorder %s102, 0
      %p313 = por %p311, %p312
      %s314 = ssub.s32 %s104, %s111
      %p315 = scmp.eq.s32.totalorder %s314, 0
      %s317 = sadd.s32 %s316, 1
      %s318 = scalar_select %p315, %s316, %s317
      %p321 = pneg %p315
      %p322 = scmp.eq.s32.totalorder %s96, 1
      %p323 = por %p321, %p322
      %p324 = scmp.ne.s32.totalorder %s316, %s319
      %p325 = scmp.eq.s32.totalorder %s96, 0
      %p326 = por %p324, %p325
      %p327 = scmp.ne.s32.totalorder %s316, %s319
      %p328 = scmp.eq.s32.totalorder %s101, 1
      %p329 = por %p327, %p328
      %p330 = scmp.ne.s32.totalorder %s319, %s320
      %p331 = scmp.eq.s32.totalorder %s101, 0
      %p332 = por %p330, %p331
      %p333 = scmp.ne.s32.totalorder %s319, %s320
      %p334 = scmp.eq.s32.totalorder %s102, 1
      %p335 = por %p333, %p334
      %p337 = scmp.ne.s32.totalorder %s320, %s336
      %p338 = scmp.eq.s32.totalorder %s102, 0
      %p339 = por %p337, %p338
      %s340 = ssub.s32 %s104, %s111
      %p341 = scmp.eq.s32.totalorder %s340, 0
      %s343 = sadd.s32 %s342, 1
      %s344 = scalar_select %p341, %s342, %s343
      %p347 = pneg %p341
      %p348 = scmp.eq.s32.totalorder %s96, 1
      %p349 = por %p347, %p348
      %p350 = scmp.ne.s32.totalorder %s342, %s345
      %p351 = scmp.eq.s32.totalorder %s96, 0
      %p352 = por %p350, %p351
      %p353 = scmp.ne.s32.totalorder %s342, %s345
      %p354 = scmp.eq.s32.totalorder %s101, 1
      %p355 = por %p353, %p354
      %p356 = scmp.ne.s32.totalorder %s345, %s346
      %p357 = scmp.eq.s32.totalorder %s101, 0
      %p358 = por %p356, %p357
      %p359 = scmp.ne.s32.totalorder %s345, %s346
      %p360 = scmp.eq.s32.totalorder %s102, 1
      %p361 = por %p359, %p360
      %p363 = scmp.ne.s32.totalorder %s346, %s362
      %p364 = scmp.eq.s32.totalorder %s102, 0
      %p365 = por %p363, %p364
      %s366 = ssub.s32 %s104, %s111
      %p367 = scmp.eq.s32.totalorder %s366, 0
      %s369 = sadd.s32 %s368, 1
      %s370 = scalar_select %p367, %s368, %s369
      %p373 = pneg %p367
      %p374 = scmp.eq.s32.totalorder %s96, 1
      %p375 = por %p373, %p374
      %p376 = scmp.ne.s32.totalorder %s368, %s371
      %p377 = scmp.eq.s32.totalorder %s96, 0
      %p378 = por %p376, %p377
      %p379 = scmp.ne.s32.totalorder %s368, %s371
      %p380 = scmp.eq.s32.totalorder %s101, 1
      %p381 = por %p379, %p380
      %p382 = scmp.ne.s32.totalorder %s371, %s372
      %p383 = scmp.eq.s32.totalorder %s101, 0
      %p384 = por %p382, %p383
      %p385 = scmp.ne.s32.totalorder %s371, %s372
      %p386 = scmp.eq.s32.totalorder %s102, 1
      %p387 = por %p385, %p386
      %p389 = scmp.ne.s32.totalorder %s372, %s388
      %p390 = scmp.eq.s32.totalorder %s102, 0
      %p391 = por %p389, %p390
      %s392 = ssub.s32 %s104, %s111
      %p393 = scmp.eq.s32.totalorder %s392, 0
      %s395 = sadd.s32 %s394, 1
      %s396 = scalar_select %p393, %s394, %s395
      %p399 = pneg %p393
      %p400 = scmp.eq.s32.totalorder %s96, 1
      %p401 = por %p399, %p400
      %p402 = scmp.ne.s32.totalorder %s394, %s397
      %p403 = scmp.eq.s32.totalorder %s96, 0
      %p404 = por %p402, %p403
      %p405 = scmp.ne.s32.totalorder %s394, %s397
      %p406 = scmp.eq.s32.totalorder %s101, 1
      %p407 = por %p405, %p406
      %p408 = scmp.ne.s32.totalorder %s397, %s398
      %p409 = scmp.eq.s32.totalorder %s101, 0
      %p410 = por %p408, %p409
      %p411 = scmp.ne.s32.totalorder %s397, %s398
      %p412 = scmp.eq.s32.totalorder %s102, 1
      %p413 = por %p411, %p412
      %p415 = scmp.ne.s32.totalorder %s398, %s414
      %p416 = scmp.eq.s32.totalorder %s102, 0
      %p417 = por %p415, %p416
      %s418 = ssub.s32 %s104, %s111
      %p419 = scmp.eq.s32.totalorder %s418, 0
      %s421 = sadd.s32 %s420, 1
      %s422 = scalar_select %p419, %s420, %s421
      %p425 = pneg %p419
      %p426 = scmp.eq.s32.totalorder %s96, 1
      %p427 = por %p425, %p426
      %p428 = scmp.ne.s32.totalorder %s420, %s423
      %p429 = scmp.eq.s32.totalorder %s96, 0
      %p430 = por %p428, %p429
      %p431 = scmp.ne.s32.totalorder %s420, %s423
      %p432 = scmp.eq.s32.totalorder %s101, 1
      %p433 = por %p431, %p432
      %p434 = scmp.ne.s32.totalorder %s423, %s424
      %p435 = scmp.eq.s32.totalorder %s101, 0
      %p436 = por %p434, %p435
      %p437 = scmp.ne.s32.totalorder %s423, %s424
      %p438 = scmp.eq.s32.totalorder %s102, 1
      %p439 = por %p437, %p438
      %p441 = scmp.ne.s32.totalorder %s424, %s440
      %p442 = scmp.eq.s32.totalorder %s102, 0
      %p443 = por %p441, %p442
      %s444 = ssub.s32 %s104, %s111
      %p445 = scmp.eq.s32.totalorder %s444, 0
      %s447 = sadd.s32 %s446, 1
      %s448 = scalar_select %p445, %s446, %s447
      %p451 = pneg %p445
      %p452 = scmp.eq.s32.totalorder %s96, 1
      %p453 = por %p451, %p452
      %p454 = scmp.ne.s32.totalorder %s446, %s449
      %p455 = scmp.eq.s32.totalorder %s96, 0
      %p456 = por %p454, %p455
      %p457 = scmp.ne.s32.totalorder %s446, %s449
      %p458 = scmp.eq.s32.totalorder %s101, 1
      %p459 = por %p457, %p458
      %p460 = scmp.ne.s32.totalorder %s449, %s450
      %p461 = scmp.eq.s32.totalorder %s101, 0
      %p462 = por %p460, %p461
      %p463 = scmp.ne.s32.totalorder %s449, %s450
      %p464 = scmp.eq.s32.totalorder %s102, 1
      %p465 = por %p463, %p464
      %p467 = scmp.ne.s32.totalorder %s450, %s466
      %p468 = scmp.eq.s32.totalorder %s102, 0
      %p469 = por %p467, %p468
      %s470 = ssub.s32 %s104, %s111
      %p471 = scmp.eq.s32.totalorder %s470, 0
      %s473 = sadd.s32 %s472, 1
      %s474 = scalar_select %p471, %s472, %s473
      %p477 = pneg %p471
      %p478 = scmp.eq.s32.totalorder %s96, 1
      %p479 = por %p477, %p478
      %p480 = scmp.ne.s32.totalorder %s472, %s475
      %p481 = scmp.eq.s32.totalorder %s96, 0
      %p482 = por %p480, %p481
      %p483 = scmp.ne.s32.totalorder %s472, %s475
      %p484 = scmp.eq.s32.totalorder %s101, 1
      %p485 = por %p483, %p484
      %p486 = scmp.ne.s32.totalorder %s475, %s476
      %p487 = scmp.eq.s32.totalorder %s101, 0
      %p488 = por %p486, %p487
      %p489 = scmp.ne.s32.totalorder %s475, %s476
      %p490 = scmp.eq.s32.totalorder %s102, 1
      %p491 = por %p489, %p490
      %p493 = scmp.ne.s32.totalorder %s476, %s492
      %p494 = scmp.eq.s32.totalorder %s102, 0
      %p495 = por %p493, %p494
      %s496 = ssub.s32 %s104, %s111
      %p497 = scmp.eq.s32.totalorder %s496, 0
      %s499 = sadd.s32 %s498, 1
      %s500 = scalar_select %p497, %s498, %s499
      %p503 = pneg %p497
      %p504 = scmp.eq.s32.totalorder %s96, 1
      %p505 = por %p503, %p504
      %p506 = scmp.ne.s32.totalorder %s498, %s501
      %p507 = scmp.eq.s32.totalorder %s96, 0
      %p508 = por %p506, %p507
      %p509 = scmp.ne.s32.totalorder %s498, %s501
      %p510 = scmp.eq.s32.totalorder %s101, 1
      %p511 = por %p509, %p510
      %p512 = scmp.ne.s32.totalorder %s501, %s502
      %p513 = scmp.eq.s32.totalorder %s101, 0
      %p514 = por %p512, %p513
      %p515 = scmp.ne.s32.totalorder %s501, %s502
      %p516 = scmp.eq.s32.totalorder %s102, 1
      %p517 = por %p515, %p516
      %p519 = scmp.ne.s32.totalorder %s502, %s518
      %p520 = scmp.eq.s32.totalorder %s102, 0
      %p521 = por %p519, %p520
      %s522 = ssub.s32 %s104, %s111
      %p523 = scmp.eq.s32.totalorder %s522, 0
      %s525 = sadd.s32 %s524, 1
      %s526 = scalar_select %p523, %s524, %s525
      %p529 = pneg %p523
      %p530 = scmp.eq.s32.totalorder %s96, 1
      %p531 = por %p529, %p530
      %p532 = scmp.ne.s32.totalorder %s524, %s527
      %p533 = scmp.eq.s32.totalorder %s96, 0
      %p534 = por %p532, %p533
      %p535 = scmp.ne.s32.totalorder %s524, %s527
      %p536 = scmp.eq.s32.totalorder %s101, 1
      %p537 = por %p535, %p536
      %p538 = scmp.ne.s32.totalorder %s527, %s528
      %p539 = scmp.eq.s32.totalorder %s101, 0
      %p540 = por %p538, %p539
      %p541 = scmp.ne.s32.totalorder %s527, %s528
      %p542 = scmp.eq.s32.totalorder %s102, 1
      %p543 = por %p541, %p542
      %p545 = scmp.ne.s32.totalorder %s528, %s544
      %p546 = scmp.eq.s32.totalorder %s102, 0
      %p547 = por %p545, %p546
      %s548 = ssub.s32 %s104, %s111
      %p549 = scmp.eq.s32.totalorder %s548, 0
      %s551 = sadd.s32 %s550, 1
      %s552 = scalar_select %p549, %s550, %s551
      %p555 = pneg %p549
      %p556 = scmp.eq.s32.totalorder %s96, 1
      %p557 = por %p555, %p556
      %p558 = scmp.ne.s32.totalorder %s550, %s553
      %p559 = scmp.eq.s32.totalorder %s96, 0
      %p560 = por %p558, %p559
      %p561 = scmp.ne.s32.totalorder %s550, %s553
      %p562 = scmp.eq.s32.totalorder %s101, 1
      %p563 = por %p561, %p562
      %p564 = scmp.ne.s32.totalorder %s553, %s554
      %p565 = scmp.eq.s32.totalorder %s101, 0
      %p566 = por %p564, %p565
      %p567 = scmp.ne.s32.totalorder %s553, %s554
      %p568 = scmp.eq.s32.totalorder %s102, 1
      %p569 = por %p567, %p568
      %p571 = scmp.ne.s32.totalorder %s554, %s570
      %p572 = scmp.eq.s32.totalorder %s102, 0
      %p573 = por %p571, %p572
      %s574 = ssub.s32 %s104, %s111
      %p575 = scmp.eq.s32.totalorder %s574, 0
      %s577 = sadd.s32 %s576, 1
      %s578 = scalar_select %p575, %s576, %s577
      %p581 = pneg %p575
      %p582 = scmp.eq.s32.totalorder %s96, 1
      %p583 = por %p581, %p582
      %p584 = scmp.ne.s32.totalorder %s576, %s579
      %p585 = scmp.eq.s32.totalorder %s96, 0
      %p586 = por %p584, %p585
      %p587 = scmp.ne.s32.totalorder %s576, %s579
      %p588 = scmp.eq.s32.totalorder %s101, 1
      %p589 = por %p587, %p588
      %p590 = scmp.ne.s32.totalorder %s579, %s580
      %p591 = scmp.eq.s32.totalorder %s101, 0
      %p592 = por %p590, %p591
      %p593 = scmp.ne.s32.totalorder %s579, %s580
      %p594 = scmp.eq.s32.totalorder %s102, 1
      %p595 = por %p593, %p594
      %p597 = scmp.ne.s32.totalorder %s580, %s596
      %p598 = scmp.eq.s32.totalorder %s102, 0
      %p599 = por %p597, %p598
      %s600 = ssub.s32 %s104, %s111
      %p601 = scmp.eq.s32.totalorder %s600, 0
      %s603 = sadd.s32 %s602, 1
      %s604 = scalar_select %p601, %s602, %s603
      %p607 = pneg %p601
      %p608 = scmp.eq.s32.totalorder %s96, 1
      %p609 = por %p607, %p608
      %p610 = scmp.ne.s32.totalorder %s602, %s605
      %p611 = scmp.eq.s32.totalorder %s96, 0
      %p612 = por %p610, %p611
      %p613 = scmp.ne.s32.totalorder %s602, %s605
      %p614 = scmp.eq.s32.totalorder %s101, 1
      %p615 = por %p613, %p614
      %p616 = scmp.ne.s32.totalorder %s605, %s606
      %p617 = scmp.eq.s32.totalorder %s101, 0
      %p618 = por %p616, %p617
      %p619 = scmp.ne.s32.totalorder %s605, %s606
      %p620 = scmp.eq.s32.totalorder %s102, 1
      %p621 = por %p619, %p620
      %p623 = scmp.ne.s32.totalorder %s606, %s622
      %p624 = scmp.eq.s32.totalorder %s102, 0
      %p625 = por %p623, %p624
      %s626 = ssub.s32 %s104, %s111
      %p627 = scmp.eq.s32.totalorder %s626, 0
      %s629 = sadd.s32 %s628, 1
      %s630 = scalar_select %p627, %s628, %s629
      %p633 = pneg %p627
      %p634 = scmp.eq.s32.totalorder %s96, 1
      %p635 = por %p633, %p634
      %p636 = scmp.ne.s32.totalorder %s628, %s631
      %p637 = scmp.eq.s32.totalorder %s96, 0
      %p638 = por %p636, %p637
      %p639 = scmp.ne.s32.totalorder %s628, %s631
      %p640 = scmp.eq.s32.totalorder %s101, 1
      %p641 = por %p639, %p640
      %p642 = scmp.ne.s32.totalorder %s631, %s632
      %p643 = scmp.eq.s32.totalorder %s101, 0
      %p644 = por %p642, %p643
      %p645 = scmp.ne.s32.totalorder %s631, %s632
      %p646 = scmp.eq.s32.totalorder %s102, 1
      %p647 = por %p645, %p646
      %p649 = scmp.ne.s32.totalorder %s632, %s648
      %p650 = scmp.eq.s32.totalorder %s102, 0
      %p651 = por %p649, %p650
      %s652 = ssub.s32 %s104, %s111
      %p653 = scmp.eq.s32.totalorder %s652, 0
      %s655 = sadd.s32 %s654, 1
      %s656 = scalar_select %p653, %s654, %s655
      %p659 = pneg %p653
      %p660 = scmp.eq.s32.totalorder %s96, 1
      %p661 = por %p659, %p660
      %p662 = scmp.ne.s32.totalorder %s654, %s657
      %p663 = scmp.eq.s32.totalorder %s96, 0
      %p664 = por %p662, %p663
      %p665 = scmp.ne.s32.totalorder %s654, %s657
      %p666 = scmp.eq.s32.totalorder %s101, 1
      %p667 = por %p665, %p666
      %p668 = scmp.ne.s32.totalorder %s657, %s658
      %p669 = scmp.eq.s32.totalorder %s101, 0
      %p670 = por %p668, %p669
      %p671 = scmp.ne.s32.totalorder %s657, %s658
      %p672 = scmp.eq.s32.totalorder %s102, 1
      %p673 = por %p671, %p672
      %p675 = scmp.ne.s32.totalorder %s658, %s674
      %p676 = scmp.eq.s32.totalorder %s102, 0
      %p677 = por %p675, %p676
      %s678 = ssub.s32 %s104, %s111
      %p679 = scmp.eq.s32.totalorder %s678, 0
      %s681 = sadd.s32 %s680, 1
      %s682 = scalar_select %p679, %s680, %s681
      %p685 = pneg %p679
      %p686 = scmp.eq.s32.totalorder %s96, 1
      %p687 = por %p685, %p686
      %p688 = scmp.ne.s32.totalorder %s680, %s683
      %p689 = scmp.eq.s32.totalorder %s96, 0
      %p690 = por %p688, %p689
      %p691 = scmp.ne.s32.totalorder %s680, %s683
      %p692 = scmp.eq.s32.totalorder %s101, 1
      %p693 = por %p691, %p692
      %p694 = scmp.ne.s32.totalorder %s683, %s684
      %p695 = scmp.eq.s32.totalorder %s101, 0
      %p696 = por %p694, %p695
      %p697 = scmp.ne.s32.totalorder %s683, %s684
      %p698 = scmp.eq.s32.totalorder %s102, 1
      %p699 = por %p697, %p698
      %p701 = scmp.ne.s32.totalorder %s684, %s700
      %p702 = scmp.eq.s32.totalorder %s102, 0
      %p703 = por %p701, %p702
      %s704 = ssub.s32 %s104, %s111
      %p705 = scmp.eq.s32.totalorder %s704, 0
      %s707 = sadd.s32 %s706, 1
      %s708 = scalar_select %p705, %s706, %s707
      %p711 = pneg %p705
      %p712 = scmp.eq.s32.totalorder %s96, 1
      %p713 = por %p711, %p712
      %p714 = scmp.ne.s32.totalorder %s706, %s709
      %p715 = scmp.eq.s32.totalorder %s96, 0
      %p716 = por %p714, %p715
      %p717 = scmp.ne.s32.totalorder %s706, %s709
      %p718 = scmp.eq.s32.totalorder %s101, 1
      %p719 = por %p717, %p718
      %p720 = scmp.ne.s32.totalorder %s709, %s710
      %p721 = scmp.eq.s32.totalorder %s101, 0
      %p722 = por %p720, %p721
      %p723 = scmp.ne.s32.totalorder %s709, %s710
      %p724 = scmp.eq.s32.totalorder %s102, 1
      %p725 = por %p723, %p724
      %p727 = scmp.ne.s32.totalorder %s710, %s726
      %p728 = scmp.eq.s32.totalorder %s102, 0
      %p729 = por %p727, %p728
      %s730 = ssub.s32 %s104, %s111
      %p731 = scmp.eq.s32.totalorder %s730, 0
      %s733 = sadd.s32 %s732, 1
      %s734 = scalar_select %p731, %s732, %s733
      %p737 = pneg %p731
      %p738 = scmp.eq.s32.totalorder %s96, 1
      %p739 = por %p737, %p738
      %p740 = scmp.ne.s32.totalorder %s732, %s735
      %p741 = scmp.eq.s32.totalorder %s96, 0
      %p742 = por %p740, %p741
      %p743 = scmp.ne.s32.totalorder %s732, %s735
      %p744 = scmp.eq.s32.totalorder %s101, 1
      %p745 = por %p743, %p744
      %p746 = scmp.ne.s32.totalorder %s735, %s736
      %p747 = scmp.eq.s32.totalorder %s101, 0
      %p748 = por %p746, %p747
      %p749 = scmp.ne.s32.totalorder %s735, %s736
      %p750 = scmp.eq.s32.totalorder %s102, 1
      %p751 = por %p749, %p750
      %p753 = scmp.ne.s32.totalorder %s736, %s752
      %p754 = scmp.eq.s32.totalorder %s102, 0
      %p755 = por %p753, %p754
      %s756 = ssub.s32 %s104, %s111
      %p757 = scmp.eq.s32.totalorder %s756, 0
      %s759 = sadd.s32 %s758, 1
      %s760 = scalar_select %p757, %s758, %s759
      %p763 = pneg %p757
      %p764 = scmp.eq.s32.totalorder %s96, 1
      %p765 = por %p763, %p764
      %p766 = scmp.ne.s32.totalorder %s758, %s761
      %p767 = scmp.eq.s32.totalorder %s96, 0
      %p768 = por %p766, %p767
      %p769 = scmp.ne.s32.totalorder %s758, %s761
      %p770 = scmp.eq.s32.totalorder %s101, 1
      %p771 = por %p769, %p770
      %p772 = scmp.ne.s32.totalorder %s761, %s762
      %p773 = scmp.eq.s32.totalorder %s101, 0
      %p774 = por %p772, %p773
      %p775 = scmp.ne.s32.totalorder %s761, %s762
      %p776 = scmp.eq.s32.totalorder %s102, 1
      %p777 = por %p775, %p776
      %p779 = scmp.ne.s32.totalorder %s762, %s778
      %p780 = scmp.eq.s32.totalorder %s102, 0
      %p781 = por %p779, %p780
      %s782 = ssub.s32 %s104, %s111
      %p783 = scmp.eq.s32.totalorder %s782, 0
      %s785 = sadd.s32 %s784, 1
      %s786 = scalar_select %p783, %s784, %s785
      %p789 = pneg %p783
      %p790 = scmp.eq.s32.totalorder %s96, 1
      %p791 = por %p789, %p790
      %p792 = scmp.ne.s32.totalorder %s784, %s787
      %p793 = scmp.eq.s32.totalorder %s96, 0
      %p794 = por %p792, %p793
      %p795 = scmp.ne.s32.totalorder %s784, %s787
      %p796 = scmp.eq.s32.totalorder %s101, 1
      %p797 = por %p795, %p796
      %p798 = scmp.ne.s32.totalorder %s787, %s788
      %p799 = scmp.eq.s32.totalorder %s101, 0
      %p800 = por %p798, %p799
      %p801 = scmp.ne.s32.totalorder %s787, %s788
      %p802 = scmp.eq.s32.totalorder %s102, 1
      %p803 = por %p801, %p802
      %p805 = scmp.ne.s32.totalorder %s788, %s804
      %p806 = scmp.eq.s32.totalorder %s102, 0
      %p807 = por %p805, %p806
      %s808 = ssub.s32 %s104, %s111
      %p809 = scmp.eq.s32.totalorder %s808, 0
      %s811 = sadd.s32 %s810, 1
      %s812 = scalar_select %p809, %s810, %s811
      %p815 = pneg %p809
      %p816 = scmp.eq.s32.totalorder %s96, 1
      %p817 = por %p815, %p816
      %p818 = scmp.ne.s32.totalorder %s810, %s813
      %p819 = scmp.eq.s32.totalorder %s96, 0
      %p820 = por %p818, %p819
      %p821 = scmp.ne.s32.totalorder %s810, %s813
      %p822 = scmp.eq.s32.totalorder %s101, 1
      %p823 = por %p821, %p822
      %p824 = scmp.ne.s32.totalorder %s813, %s814
      %p825 = scmp.eq.s32.totalorder %s101, 0
      %p826 = por %p824, %p825
      %p827 = scmp.ne.s32.totalorder %s813, %s814
      %p828 = scmp.eq.s32.totalorder %s102, 1
      %p829 = por %p827, %p828
      %p831 = scmp.ne.s32.totalorder %s814, %s830
      %p832 = scmp.eq.s32.totalorder %s102, 0
      %p833 = por %p831, %p832
      %s834 = ssub.s32 %s104, %s111
      %p835 = scmp.eq.s32.totalorder %s834, 0
      %s837 = sadd.s32 %s836, 1
      %s838 = scalar_select %p835, %s836, %s837
      %p841 = pneg %p835
      %p842 = scmp.eq.s32.totalorder %s96, 1
      %p843 = por %p841, %p842
      %p844 = scmp.ne.s32.totalorder %s836, %s839
      %p845 = scmp.eq.s32.totalorder %s96, 0
      %p846 = por %p844, %p845
      %p847 = scmp.ne.s32.totalorder %s836, %s839
      %p848 = scmp.eq.s32.totalorder %s101, 1
      %p849 = por %p847, %p848
      %p850 = scmp.ne.s32.totalorder %s839, %s840
      %p851 = scmp.eq.s32.totalorder %s101, 0
      %p852 = por %p850, %p851
      %p853 = scmp.ne.s32.totalorder %s839, %s840
      %p854 = scmp.eq.s32.totalorder %s102, 1
      %p855 = por %p853, %p854
      %p857 = scmp.ne.s32.totalorder %s840, %s856
      %p858 = scmp.eq.s32.totalorder %s102, 0
      %p859 = por %p857, %p858
      %s860 = ssub.s32 %s104, %s111
      %p861 = scmp.eq.s32.totalorder %s860, 0
      %s863 = sadd.s32 %s862, 1
      %s864 = scalar_select %p861, %s862, %s863
      %p867 = pneg %p861
      %p868 = scmp.eq.s32.totalorder %s96, 1
      %p869 = por %p867, %p868
      %p870 = scmp.ne.s32.totalorder %s862, %s865
      %p871 = scmp.eq.s32.totalorder %s96, 0
      %p872 = por %p870, %p871
      %p873 = scmp.ne.s32.totalorder %s862, %s865
      %p874 = scmp.eq.s32.totalorder %s101, 1
      %p875 = por %p873, %p874
      %p876 = scmp.ne.s32.totalorder %s865, %s866
      %p877 = scmp.eq.s32.totalorder %s101, 0
      %p878 = por %p876, %p877
      %p879 = scmp.ne.s32.totalorder %s865, %s866
      %p880 = scmp.eq.s32.totalorder %s102, 1
      %p881 = por %p879, %p880
      %p883 = scmp.ne.s32.totalorder %s866, %s882
      %p884 = scmp.eq.s32.totalorder %s102, 0
      %p885 = por %p883, %p884
      %s886 = ssub.s32 %s104, %s111
      %p887 = scmp.eq.s32.totalorder %s886, 0
      %s889 = sadd.s32 %s888, 1
      %s890 = scalar_select %p887, %s888, %s889
      %p893 = pneg %p887
      %p894 = scmp.eq.s32.totalorder %s96, 1
      %p895 = por %p893, %p894
      %p896 = scmp.ne.s32.totalorder %s888, %s891
      %p897 = scmp.eq.s32.totalorder %s96, 0
      %p898 = por %p896, %p897
      %p899 = scmp.ne.s32.totalorder %s888, %s891
      %p900 = scmp.eq.s32.totalorder %s101, 1
      %p901 = por %p899, %p900
      %p902 = scmp.ne.s32.totalorder %s891, %s892
      %p903 = scmp.eq.s32.totalorder %s101, 0
      %p904 = por %p902, %p903
      %p905 = scmp.ne.s32.totalorder %s891, %s892
      %p906 = scmp.eq.s32.totalorder %s102, 1
      %p907 = por %p905, %p906
      %p909 = scmp.ne.s32.totalorder %s892, %s908
      %p910 = scmp.eq.s32.totalorder %s102, 0
      %p911 = por %p909, %p910
      %s912 = ssub.s32 %s104, %s111
      %p913 = scmp.eq.s32.totalorder %s912, 0
      %s915 = sadd.s32 %s914, 1
      %s916 = scalar_select %p913, %s914, %s915
      %p919 = pneg %p913
      %p920 = scmp.eq.s32.totalorder %s96, 1
      %p921 = por %p919, %p920
      %p922 = scmp.ne.s32.totalorder %s914, %s917
      %p923 = scmp.eq.s32.totalorder %s96, 0
      %p924 = por %p922, %p923
      %p925 = scmp.ne.s32.totalorder %s914, %s917
      %p926 = scmp.eq.s32.totalorder %s101, 1
      %p927 = por %p925, %p926
      %p928 = scmp.ne.s32.totalorder %s917, %s918
      %p929 = scmp.eq.s32.totalorder %s101, 0
      %p930 = por %p928, %p929
      %p931 = scmp.ne.s32.totalorder %s917, %s918
      %p932 = scmp.eq.s32.totalorder %s102, 1
      %p933 = por %p931, %p932
      %p935 = scmp.ne.s32.totalorder %s918, %s934
      %p936 = scmp.eq.s32.totalorder %s102, 0
      %p937 = por %p935, %p936
      %s938 = ssub.s32 %s103, %s115
      %p939 = scmp.eq.s32.totalorder %s938, 0
      %s941 = sadd.s32 %s940, 1
      %s942 = scalar_select %p939, %s940, %s941
      %p945 = pneg %p939
      %p946 = scmp.eq.s32.totalorder %s96, 1
      %p947 = por %p945, %p946
      %p948 = scmp.ne.s32.totalorder %s940, %s943
      %p949 = scmp.eq.s32.totalorder %s96, 0
      %p950 = por %p948, %p949
      %p951 = scmp.ne.s32.totalorder %s940, %s943
      %p952 = scmp.eq.s32.totalorder %s101, 1
      %p953 = por %p951, %p952
      %p954 = scmp.ne.s32.totalorder %s943, %s944
      %p955 = scmp.eq.s32.totalorder %s101, 0
      %p956 = por %p954, %p955
      %p957 = scmp.ne.s32.totalorder %s943, %s944
      %p958 = scmp.eq.s32.totalorder %s102, 1
      %p959 = por %p957, %p958
      %p961 = scmp.ne.s32.totalorder %s944, %s960
      %p962 = scmp.eq.s32.totalorder %s102, 0
      %p963 = por %p961, %p962
      %p964 = scmp.le.s32.totalorder 1, %s96
      %p965 = scmp.lt.s32.totalorder %s96, 3
      %p966 = pnand %p964, %p965
      %p967 = pneg %p966
      // Predicated region
      $region9: #{conformer_forward.1} parent=5 // pred_check
        _
      $region10: #{conformer_forward.1} parent=5 // pred_check_branch
        %969 = sbr.rel (%p966) target = $region12
      $region11: #{conformer_forward.1} parent=5 // pred_region
        %s970 = ssub.s32 %s96, 1
        // Predicated region
        $region13: #{conformer_forward.1} parent=11 // pred_check
          %p971 = pneg %p129
        $region14: #{conformer_forward.1} parent=11 // pred_check_branch
          %973 = sbr.rel (%p971) target = $region16
        $region15: #{conformer_forward.1} parent=11 // pred_region
          %s975 = ssub.s32 16, 16
          %976 = vsyncadd [#allocation5], %s975
          %s978 = sshll.u32 %s1, 4
          %s979 = int_to_ptr.vmem [resolvable:$true] %s978
          %981 = dma.vmem_to_smem %s979, 16, [#allocation3], [#allocation5]
        $region16: #{conformer_forward.1} parent=11 // pred_fallthru
          _
        // Predicated region
        $region17: #{conformer_forward.1} parent=11 // pred_check
          %p982 = pneg %p155
        $region18: #{conformer_forward.1} parent=11 // pred_check_branch
          %984 = sbr.rel (%p982) target = $region20
        $region19: #{conformer_forward.1} parent=11 // pred_region
          %s985 = smul.u32 2, %s105
          %p986 = scmp.lt.s32.totalorder %s985, 1
          %s987 = scalar_select %p986, %s985, 1
          %s988 = smul.addr %s987, 8
          %s989 = scalar_lea.vmem %s3, %s988
          %s990 = smul.u32 2, %s105
        $region20: #{conformer_forward.1} parent=11 // pred_fallthru
          _
        // Predicated region
        $region21: #{conformer_forward.1} parent=11 // pred_check
          %p991 = pneg %p176
        $region22: #{conformer_forward.1} parent=11 // pred_check_branch
          %993 = sbr.rel (%p991) target = $region24
        $region23: #{conformer_forward.1} parent=11 // pred_region
          _
        $region24: #{conformer_forward.1} parent=11 // pred_fallthru
          _
      $region12: #{conformer_forward.1} parent=5 // pred_fallthru
        _
      %p994 = scmp.lt.s32.totalorder %s96, 2
      // Predicated region
      $region25: #{conformer_forward.1} parent=5 // pred_check
        %p995 = pneg %p994
      $region26: #{conformer_forward.1} parent=5 // pred_check_branch
        %997 = sbr.rel (%p995) target = $region28
      $region27: #{conformer_forward.1} parent=5 // pred_region
        // Predicated region
        $region29: #{conformer_forward.1} parent=27 // pred_check
          %p998 = pneg %p196
        $region30: #{conformer_forward.1} parent=27 // pred_check_branch
          %1000 = sbr.rel (%p998) target = $region32
        $region31: #{conformer_forward.1} parent=27 // pred_region
          %p1001 = scmp.lt.s32.totalorder %s104, 1
          %s1002 = scalar_select %p1001, %s104, 1
          %s1003 = scalar_lea.vmem %s7, %s1002
        $region32: #{conformer_forward.1} parent=27 // pred_fallthru
          _
        // Predicated region
        $region33: #{conformer_forward.1} parent=27 // pred_check
          %p1004 = pneg %p222
        $region34: #{conformer_forward.1} parent=27 // pred_check_branch
          %1006 = sbr.rel (%p1004) target = $region36
        $region35: #{conformer_forward.1} parent=27 // pred_region
          %p1007 = scmp.lt.s32.totalorder %s104, 1
          %s1008 = scalar_select %p1007, %s104, 1
          %s1009 = scalar_lea.vmem %s9, %s1008
        $region36: #{conformer_forward.1} parent=27 // pred_fallthru
          _
        // Predicated region
        $region37: #{conformer_forward.1} parent=27 // pred_check
          %p1010 = pneg %p248
        $region38: #{conformer_forward.1} parent=27 // pred_check_branch
          %1012 = sbr.rel (%p1010) target = $region40
        $region39: #{conformer_forward.1} parent=27 // pred_region
          %s1013 = sand.u32 %s238, 1
          %s1014 = scalar_lea.sflag [#allocation4], %s1013
          %s1015 = sand.u32 %s238, 1
          %s1016 = smul.addr %s1015, 256
          %s1017 = scalar_lea.vmem [#allocation6], %s1016
          %s1019 = ssub.s32 4096, 4096
          %1020 = vsyncadd %s1014, %s1019
          %s1021 = smul.addr %s104, 64
          %s1022 = smul.addr %s1021, 64
          %s1023 = scalar_lea.hbm %s11, %s1022
          %s1024 = sshll.u32 %s1017, 4
          %s1025 = int_to_ptr.vmem [resolvable:$true] %s1024
          %1030 = dma.hbm_to_vmem [thread:$0]  %s1023, 4096, %s1025, %s1014, 256, 256, 16
        $region40: #{conformer_forward.1} parent=27 // pred_fallthru
          _
        // Predicated region
        $region41: #{conformer_forward.1} parent=27 // pred_check
          %p1031 = pneg %p274
        $region42: #{conformer_forward.1} parent=27 // pred_check_branch
          %1033 = sbr.rel (%p1031) target = $region44
        $region43: #{conformer_forward.1} parent=27 // pred_region
          %p1034 = scmp.lt.s32.totalorder %s104, 1
          %s1035 = scalar_select %p1034, %s104, 1
          %s1036 = smul.addr %s1035, 4
          %s1037 = scalar_lea.vmem %s13, %s1036
        $region44: #{conformer_forward.1} parent=27 // pred_fallthru
          _
        // Predicated region
        $region45: #{conformer_forward.1} parent=27 // pred_check
          %p1038 = pneg %p300
        $region46: #{conformer_forward.1} parent=27 // pred_check_branch
          %1040 = sbr.rel (%p1038) target = $region48
        $region47: #{conformer_forward.1} parent=27 // pred_region
          %s1041 = sand.u32 %s96, 1
          %s1042 = scalar_lea.sflag [#allocation8], %s1041
          %s1043 = sand.u32 %s290, 1
          %s1044 = smul.addr %s1043, 256
          %s1045 = scalar_lea.vmem [#allocation7], %s1044
          %s1047 = ssub.s32 4096, 4096
          %1048 = vsyncadd %s1042, %s1047
          %s1049 = smul.addr %s104, 64
          %s1050 = smul.addr %s1049, 64
          %s1051 = scalar_lea.hbm %s15, %s1050
          %s1052 = sshll.u32 %s1045, 4
          %s1053 = int_to_ptr.vmem [resolvable:$true] %s1052
          %1058 = dma.hbm_to_vmem [thread:$0]  %s1051, 4096, %s1053, %s1042, 64, 64, 4
        $region48: #{conformer_forward.1} parent=27 // pred_fallthru
          _
        // Predicated region
        $region49: #{conformer_forward.1} parent=27 // pred_check
          %p1059 = pneg %p326
        $region50: #{conformer_forward.1} parent=27 // pred_check_branch
          %1061 = sbr.rel (%p1059) target = $region52
        $region51: #{conformer_forward.1} parent=27 // pred_region
          %p1062 = scmp.lt.s32.totalorder %s104, 1
          %s1063 = scalar_select %p1062, %s104, 1
          %s1064 = scalar_lea.vmem %s17, %s1063
        $region52: #{conformer_forward.1} parent=27 // pred_fallthru
          _
        // Predicated region
        $region53: #{conformer_forward.1} parent=27 // pred_check
          %p1065 = pneg %p352
        $region54: #{conformer_forward.1} parent=27 // pred_check_branch
          %1067 = sbr.rel (%p1065) target = $region56
        $region55: #{conformer_forward.1} parent=27 // pred_region
          %s1068 = sand.u32 %s96, 1
          %s1069 = scalar_lea.sflag [#allocation8], %s1068
          %s1070 = sand.u32 %s342, 1
          %s1071 = scalar_lea.vmem [#allocation9], %s1070
          %s1073 = ssub.s32 16, 16
          %1074 = vsyncadd %s1069, %s1073
          %s1075 = smul.addr %s104, 16
          %s1076 = scalar_lea.hbm %s19, %s1075
          %s1078 = sshll.u32 %s1071, 4
          %s1079 = int_to_ptr.vmem [resolvable:$true] %s1078
          %1081 = dma.hbm_to_vmem [thread:$0]  %s1076, 16, %s1079, %s1069
        $region56: #{conformer_forward.1} parent=27 // pred_fallthru
          _
        // Predicated region
        $region57: #{conformer_forward.1} parent=27 // pred_check
          %p1082 = pneg %p378
        $region58: #{conformer_forward.1} parent=27 // pred_check_branch
          %1084 = sbr.rel (%p1082) target = $region60
        $region59: #{conformer_forward.1} parent=27 // pred_region
          %p1085 = scmp.lt.s32.totalorder %s104, 1
          %s1086 = scalar_select %p1085, %s104, 1
          %s1087 = scalar_lea.vmem %s21, %s1086
        $region60: #{conformer_forward.1} parent=27 // pred_fallthru
          _
        // Predicated region
        $region61: #{conformer_forward.1} parent=27 // pred_check
          %p1088 = pneg %p404
        $region62: #{conformer_forward.1} parent=27 // pred_check_branch
          %1090 = sbr.rel (%p1088) target = $region64
        $region63: #{conformer_forward.1} parent=27 // pred_region
          %p1091 = scmp.lt.s32.totalorder %s104, 1
          %s1092 = scalar_select %p1091, %s104, 1
          %s1093 = smul.addr %s1092, 48
          %s1094 = smul.addr %s1093, 4
          %s1095 = scalar_lea.vmem %s23, %s1094
        $region64: #{conformer_forward.1} parent=27 // pred_fallthru
          _
        // Predicated region
        $region65: #{conformer_forward.1} parent=27 // pred_check
          %p1096 = pneg %p430
        $region66: #{conformer_forward.1} parent=27 // pred_check_branch
          %1098 = sbr.rel (%p1096) target = $region68
        $region67: #{conformer_forward.1} parent=27 // pred_region
          %s1099 = sand.u32 %s96, 1
          %s1100 = scalar_lea.sflag [#allocation11], %s1099
          %s1101 = sand.u32 %s420, 1
          %s1102 = smul.addr %s1101, 3
          %s1103 = scalar_lea.vmem [#allocation10], %s1102
          %s1105 = ssub.s32 48, 48
          %1106 = vsyncadd %s1100, %s1105
          %s1107 = smul.addr %s104, 3
          %s1108 = smul.addr %s1107, 16
          %s1109 = scalar_lea.hbm %s25, %s1108
          %s1111 = sshll.u32 %s1103, 4
          %s1112 = int_to_ptr.vmem [resolvable:$true] %s1111
          %1114 = dma.hbm_to_vmem [thread:$0]  %s1109, 48, %s1112, %s1100
        $region68: #{conformer_forward.1} parent=27 // pred_fallthru
          _
        // Predicated region
        $region69: #{conformer_forward.1} parent=27 // pred_check
          %p1115 = pneg %p456
        $region70: #{conformer_forward.1} parent=27 // pred_check_branch
          %1117 = sbr.rel (%p1115) target = $region72
        $region71: #{conformer_forward.1} parent=27 // pred_region
          %s1118 = sand.u32 %s96, 1
          %s1119 = scalar_lea.sflag [#allocation11], %s1118
          %s1120 = sand.u32 %s446, 1
          %s1121 = smul.addr %s1120, 64
          %s1122 = scalar_lea.vmem [#allocation12], %s1121
          %s1124 = ssub.s32 1024, 1024
          %1125 = vsyncadd %s1119, %s1124
          %s1126 = smul.addr %s104, 16
          %s1127 = smul.addr %s1126, 64
          %s1128 = scalar_lea.hbm %s27, %s1127
          %s1129 = sshll.u32 %s1122, 4
          %s1130 = int_to_ptr.vmem [resolvable:$true] %s1129
          %1135 = dma.hbm_to_vmem [thread:$0]  %s1128, 1024, %s1130, %s1119, 64, 64, 4
        $region72: #{conformer_forward.1} parent=27 // pred_fallthru
          _
        // Predicated region
        $region73: #{conformer_forward.1} parent=27 // pred_check
          %p1136 = pneg %p482
        $region74: #{conformer_forward.1} parent=27 // pred_check_branch
          %1138 = sbr.rel (%p1136) target = $region76
        $region75: #{conformer_forward.1} parent=27 // pred_region
          %p1139 = scmp.lt.s32.totalorder %s104, 1
          %s1140 = scalar_select %p1139, %s104, 1
          %s1141 = scalar_lea.vmem %s29, %s1140
        $region76: #{conformer_forward.1} parent=27 // pred_fallthru
          _
        // Predicated region
        $region77: #{conformer_forward.1} parent=27 // pred_check
          %p1142 = pneg %p508
        $region78: #{conformer_forward.1} parent=27 // pred_check_branch
          %1144 = sbr.rel (%p1142) target = $region80
        $region79: #{conformer_forward.1} parent=27 // pred_region
          %s1145 = sand.u32 %s96, 1
          %s1146 = scalar_lea.sflag [#allocation14], %s1145
          %s1147 = sand.u32 %s498, 1
          %s1148 = scalar_lea.vmem [#allocation13], %s1147
          %s1150 = ssub.s32 16, 16
          %1151 = vsyncadd %s1146, %s1150
          %s1152 = smul.addr %s104, 16
          %s1153 = scalar_lea.hbm %s31, %s1152
          %s1155 = sshll.u32 %s1148, 4
          %s1156 = int_to_ptr.vmem [resolvable:$true] %s1155
          %1158 = dma.hbm_to_vmem [thread:$0]  %s1153, 16, %s1156, %s1146
        $region80: #{conformer_forward.1} parent=27 // pred_fallthru
          _
        // Predicated region
        $region81: #{conformer_forward.1} parent=27 // pred_check
          %p1159 = pneg %p534
        $region82: #{conformer_forward.1} parent=27 // pred_check_branch
          %1161 = sbr.rel (%p1159) target = $region84
        $region83: #{conformer_forward.1} parent=27 // pred_region
          %s1162 = sand.u32 %s96, 1
          %s1163 = scalar_lea.sflag [#allocation14], %s1162
          %s1164 = sand.u32 %s524, 1
          %s1165 = scalar_lea.vmem [#allocation15], %s1164
          %s1167 = ssub.s32 16, 16
          %1168 = vsyncadd %s1163, %s1167
          %s1169 = smul.addr %s104, 16
          %s1170 = scalar_lea.hbm %s33, %s1169
          %s1172 = sshll.u32 %s1165, 4
          %s1173 = int_to_ptr.vmem [resolvable:$true] %s1172
          %1175 = dma.hbm_to_vmem [thread:$0]  %s1170, 16, %s1173, %s1163
        $region84: #{conformer_forward.1} parent=27 // pred_fallthru
          _
        // Predicated region
        $region85: #{conformer_forward.1} parent=27 // pred_check
          %p1176 = pneg %p560
        $region86: #{conformer_forward.1} parent=27 // pred_check_branch
          %1178 = sbr.rel (%p1176) target = $region88
        $region87: #{conformer_forward.1} parent=27 // pred_region
          %s1179 = sand.u32 %s96, 1
          %s1180 = scalar_lea.sflag [#allocation17], %s1179
          %s1181 = sand.u32 %s550, 1
          %s1182 = smul.addr %s1181, 128
          %s1183 = scalar_lea.vmem [#allocation16], %s1182
          %s1185 = ssub.s32 2048, 2048
          %1186 = vsyncadd %s1180, %s1185
          %s1187 = smul.addr %s104, 32
          %s1188 = smul.addr %s1187, 64
          %s1189 = scalar_lea.hbm %s35, %s1188
          %s1190 = sshll.u32 %s1183, 4
          %s1191 = int_to_ptr.vmem [resolvable:$true] %s1190
          %1196 = dma.hbm_to_vmem [thread:$0]  %s1189, 2048, %s1191, %s1180, 128, 128, 8
        $region88: #{conformer_forward.1} parent=27 // pred_fallthru
          _
        // Predicated region
        $region89: #{conformer_forward.1} parent=27 // pred_check
          %p1197 = pneg %p586
        $region90: #{conformer_forward.1} parent=27 // pred_check_branch
          %1199 = sbr.rel (%p1197) target = $region92
        $region91: #{conformer_forward.1} parent=27 // pred_region
          %p1200 = scmp.lt.s32.totalorder %s104, 1
          %s1201 = scalar_select %p1200, %s104, 1
          %s1202 = smul.addr %s1201, 2
          %s1203 = scalar_lea.vmem %s37, %s1202
        $region92: #{conformer_forward.1} parent=27 // pred_fallthru
          _
        // Predicated region
        $region93: #{conformer_forward.1} parent=27 // pred_check
          %p1204 = pneg %p612
        $region94: #{conformer_forward.1} parent=27 // pred_check_branch
          %1206 = sbr.rel (%p1204) target = $region96
        $region95: #{conformer_forward.1} parent=27 // pred_region
          %p1207 = scmp.lt.s32.totalorder %s104, 1
          %s1208 = scalar_select %p1207, %s104, 1
          %s1209 = smul.addr %s1208, 8
          %s1210 = scalar_lea.vmem %s39, %s1209
        $region96: #{conformer_forward.1} parent=27 // pred_fallthru
          _
        // Predicated region
        $region97: #{conformer_forward.1} parent=27 // pred_check
          %p1211 = pneg %p638
        $region98: #{conformer_forward.1} parent=27 // pred_check_branch
          %1213 = sbr.rel (%p1211) target = $region100
        $region99: #{conformer_forward.1} parent=27 // pred_region
          %p1214 = scmp.lt.s32.totalorder %s104, 1
          %s1215 = scalar_select %p1214, %s104, 1
          %s1216 = scalar_lea.vmem %s41, %s1215
        $region100: #{conformer_forward.1} parent=27 // pred_fallthru
          _
        // Predicated region
        $region101: #{conformer_forward.1} parent=27 // pred_check
          %p1217 = pneg %p664
        $region102: #{conformer_forward.1} parent=27 // pred_check_branch
          %1219 = sbr.rel (%p1217) target = $region104
        $region103: #{conformer_forward.1} parent=27 // pred_region
          %p1220 = scmp.lt.s32.totalorder %s104, 1
          %s1221 = scalar_select %p1220, %s104, 1
          %s1222 = scalar_lea.vmem %s43, %s1221
        $region104: #{conformer_forward.1} parent=27 // pred_fallthru
          _
        // Predicated region
        $region105: #{conformer_forward.1} parent=27 // pred_check
          %p1223 = pneg %p690
        $region106: #{conformer_forward.1} parent=27 // pred_check_branch
          %1225 = sbr.rel (%p1223) target = $region108
        $region107: #{conformer_forward.1} parent=27 // pred_region
          %s1226 = sand.u32 %s96, 1
          %s1227 = scalar_lea.sflag [#allocation17], %s1226
          %s1228 = sand.u32 %s680, 1
          %s1229 = smul.addr %s1228, 64
          %s1230 = scalar_lea.vmem [#allocation18], %s1229
          %s1232 = ssub.s32 1024, 1024
          %1233 = vsyncadd %s1227, %s1232
          %s1234 = smul.addr %s104, 16
          %s1235 = smul.addr %s1234, 64
          %s1236 = scalar_lea.hbm %s45, %s1235
          %s1237 = sshll.u32 %s1230, 4
          %s1238 = int_to_ptr.vmem [resolvable:$true] %s1237
          %1243 = dma.hbm_to_vmem [thread:$0]  %s1236, 1024, %s1238, %s1227, 64, 64, 4
        $region108: #{conformer_forward.1} parent=27 // pred_fallthru
          _
        // Predicated region
        $region109: #{conformer_forward.1} parent=27 // pred_check
          %p1244 = pneg %p716
        $region110: #{conformer_forward.1} parent=27 // pred_check_branch
          %1246 = sbr.rel (%p1244) target = $region112
        $region111: #{conformer_forward.1} parent=27 // pred_region
          %s1247 = sand.u32 %s96, 1
          %s1248 = scalar_lea.sflag [#allocation20], %s1247
          %s1249 = sand.u32 %s706, 1
          %s1250 = scalar_lea.vmem [#allocation19], %s1249
          %s1252 = ssub.s32 16, 16
          %1253 = vsyncadd %s1248, %s1252
          %s1254 = smul.addr %s104, 16
          %s1255 = scalar_lea.hbm %s47, %s1254
          %s1257 = sshll.u32 %s1250, 4
          %s1258 = int_to_ptr.vmem [resolvable:$true] %s1257
          %1260 = dma.hbm_to_vmem [thread:$0]  %s1255, 16, %s1258, %s1248
        $region112: #{conformer_forward.1} parent=27 // pred_fallthru
          _
        // Predicated region
        $region113: #{conformer_forward.1} parent=27 // pred_check
          %p1261 = pneg %p742
        $region114: #{conformer_forward.1} parent=27 // pred_check_branch
          %1263 = sbr.rel (%p1261) target = $region116
        $region115: #{conformer_forward.1} parent=27 // pred_region
          %s1264 = sand.u32 %s96, 1
          %s1265 = scalar_lea.sflag [#allocation20], %s1264
          %s1266 = sand.u32 %s732, 1
          %s1267 = scalar_lea.vmem [#allocation21], %s1266
          %s1269 = ssub.s32 16, 16
          %1270 = vsyncadd %s1265, %s1269
          %s1271 = smul.addr %s104, 16
          %s1272 = scalar_lea.hbm %s49, %s1271
          %s1274 = sshll.u32 %s1267, 4
          %s1275 = int_to_ptr.vmem [resolvable:$true] %s1274
          %1277 = dma.hbm_to_vmem [thread:$0]  %s1272, 16, %s1275, %s1265
        $region116: #{conformer_forward.1} parent=27 // pred_fallthru
          _
        // Predicated region
        $region117: #{conformer_forward.1} parent=27 // pred_check
          %p1278 = pneg %p768
        $region118: #{conformer_forward.1} parent=27 // pred_check_branch
          %1280 = sbr.rel (%p1278) target = $region120
        $region119: #{conformer_forward.1} parent=27 // pred_region
          %p1281 = scmp.lt.s32.totalorder %s104, 1
          %s1282 = scalar_select %p1281, %s104, 1
          %s1283 = scalar_lea.vmem %s51, %s1282
        $region120: #{conformer_forward.1} parent=27 // pred_fallthru
          _
        // Predicated region
        $region121: #{conformer_forward.1} parent=27 // pred_check
          %p1284 = pneg %p794
        $region122: #{conformer_forward.1} parent=27 // pred_check_branch
          %1286 = sbr.rel (%p1284) target = $region124
        $region123: #{conformer_forward.1} parent=27 // pred_region
          %s1287 = sand.u32 %s96, 1
          %s1288 = scalar_lea.sflag [#allocation23], %s1287
          %s1289 = sand.u32 %s784, 1
          %s1290 = smul.addr %s1289, 256
          %s1291 = scalar_lea.vmem [#allocation22], %s1290
          %s1293 = ssub.s32 4096, 4096
          %1294 = vsyncadd %s1288, %s1293
          %s1295 = smul.addr %s104, 64
          %s1296 = smul.addr %s1295, 64
          %s1297 = scalar_lea.hbm %s53, %s1296
          %s1298 = sshll.u32 %s1291, 4
          %s1299 = int_to_ptr.vmem [resolvable:$true] %s1298
          %1304 = dma.hbm_to_vmem [thread:$0]  %s1297, 4096, %s1299, %s1288, 256, 256, 16
        $region124: #{conformer_forward.1} parent=27 // pred_fallthru
          _
        // Predicated region
        $region125: #{conformer_forward.1} parent=27 // pred_check
          %p1305 = pneg %p820
        $region126: #{conformer_forward.1} parent=27 // pred_check_branch
          %1307 = sbr.rel (%p1305) target = $region128
        $region127: #{conformer_forward.1} parent=27 // pred_region
          %p1308 = scmp.lt.s32.totalorder %s104, 1
          %s1309 = scalar_select %p1308, %s104, 1
          %s1310 = smul.addr %s1309, 4
          %s1311 = scalar_lea.vmem %s55, %s1310
        $region128: #{conformer_forward.1} parent=27 // pred_fallthru
          _
        // Predicated region
        $region129: #{conformer_forward.1} parent=27 // pred_check
          %p1312 = pneg %p846
        $region130: #{conformer_forward.1} parent=27 // pred_check_branch
          %1314 = sbr.rel (%p1312) target = $region132
        $region131: #{conformer_forward.1} parent=27 // pred_region
          %s1315 = sand.u32 %s96, 1
          %s1316 = scalar_lea.sflag [#allocation23], %s1315
          %s1317 = sand.u32 %s836, 1
          %s1318 = smul.addr %s1317, 256
          %s1319 = scalar_lea.vmem [#allocation24], %s1318
          %s1321 = ssub.s32 4096, 4096
          %1322 = vsyncadd %s1316, %s1321
          %s1323 = smul.addr %s104, 64
          %s1324 = smul.addr %s1323, 64
          %s1325 = scalar_lea.hbm %s57, %s1324
          %s1326 = sshll.u32 %s1319, 4
          %s1327 = int_to_ptr.vmem [resolvable:$true] %s1326
          %1332 = dma.hbm_to_vmem [thread:$0]  %s1325, 4096, %s1327, %s1316, 64, 64, 4
        $region132: #{conformer_forward.1} parent=27 // pred_fallthru
          _
        // Predicated region
        $region133: #{conformer_forward.1} parent=27 // pred_check
          %p1333 = pneg %p872
        $region134: #{conformer_forward.1} parent=27 // pred_check_branch
          %1335 = sbr.rel (%p1333) target = $region136
        $region135: #{conformer_forward.1} parent=27 // pred_region
          %p1336 = scmp.lt.s32.totalorder %s104, 1
          %s1337 = scalar_select %p1336, %s104, 1
          %s1338 = scalar_lea.vmem %s59, %s1337
        $region136: #{conformer_forward.1} parent=27 // pred_fallthru
          _
        // Predicated region
        $region137: #{conformer_forward.1} parent=27 // pred_check
          %p1339 = pneg %p898
        $region138: #{conformer_forward.1} parent=27 // pred_check_branch
          %1341 = sbr.rel (%p1339) target = $region140
        $region139: #{conformer_forward.1} parent=27 // pred_region
          %s1342 = sand.u32 %s96, 1
          %s1343 = scalar_lea.sflag [#allocation26], %s1342
          %s1344 = sand.u32 %s888, 1
          %s1345 = scalar_lea.vmem [#allocation25], %s1344
          %s1347 = ssub.s32 16, 16
          %1348 = vsyncadd %s1343, %s1347
          %s1349 = smul.addr %s104, 16
          %s1350 = scalar_lea.hbm %s61, %s1349
          %s1352 = sshll.u32 %s1345, 4
          %s1353 = int_to_ptr.vmem [resolvable:$true] %s1352
          %1355 = dma.hbm_to_vmem [thread:$0]  %s1350, 16, %s1353, %s1343
        $region140: #{conformer_forward.1} parent=27 // pred_fallthru
          _
        // Predicated region
        $region141: #{conformer_forward.1} parent=27 // pred_check
          %p1356 = pneg %p924
        $region142: #{conformer_forward.1} parent=27 // pred_check_branch
          %1358 = sbr.rel (%p1356) target = $region144
        $region143: #{conformer_forward.1} parent=27 // pred_region
          %s1359 = sand.u32 %s96, 1
          %s1360 = scalar_lea.sflag [#allocation26], %s1359
          %s1361 = sand.u32 %s914, 1
          %s1362 = scalar_lea.vmem [#allocation27], %s1361
          %s1364 = ssub.s32 16, 16
          %1365 = vsyncadd %s1360, %s1364
          %s1366 = smul.addr %s104, 16
          %s1367 = scalar_lea.hbm %s63, %s1366
          %s1369 = sshll.u32 %s1362, 4
          %s1370 = int_to_ptr.vmem [resolvable:$true] %s1369
          %1372 = dma.hbm_to_vmem [thread:$0]  %s1367, 16, %s1370, %s1360
        $region144: #{conformer_forward.1} parent=27 // pred_fallthru
          _
      $region28: #{conformer_forward.1} parent=5 // pred_fallthru
        _
      %p1373 = scmp.le.s32.totalorder 1, %s96
      %p1374 = scmp.lt.s32.totalorder %s96, 3
      %p1375 = pnand %p1373, %p1374
      %p1376 = pneg %p1375
      // Predicated region
      $region145: #{conformer_forward.1} parent=5 // pred_check
        _
      $region146: #{conformer_forward.1} parent=5 // pred_check_branch
        %1378 = sbr.rel (%p1375) target = $region148
      $region147: #{conformer_forward.1} parent=5 // pred_region
        %s1379 = ssub.s32 %s96, 1
        // Predicated region
        $region149: #{conformer_forward.1} parent=147 // pred_check
          %p1380 = pneg %p129
        $region150: #{conformer_forward.1} parent=147 // pred_check_branch
          %1382 = sbr.rel (%p1380) target = $region152
        $region151: #{conformer_forward.1} parent=147 // pred_region
          %1383 = dma.done [#allocation5], 16
        $region152: #{conformer_forward.1} parent=147 // pred_fallthru
          _
        %s1384 = sand.u32 %s241, 1
        %s1385 = scalar_lea.sflag [#allocation4], %s1384
        %s1386 = sand.u32 %s241, 1
        %s1387 = smul.addr %s1386, 256
        %s1388 = scalar_lea.vmem [#allocation6], %s1387
        // Predicated region
        $region153: #{conformer_forward.1} parent=147 // pred_check
          %p1389 = pneg %p254
        $region154: #{conformer_forward.1} parent=147 // pred_check_branch
          %1391 = sbr.rel (%p1389) target = $region156
        $region155: #{conformer_forward.1} parent=147 // pred_region
          %1392 = dma.done %s1385, 4096
        $region156: #{conformer_forward.1} parent=147 // pred_fallthru
          _
        %s1393 = sand.u32 %s101, 1
        %s1394 = scalar_lea.sflag [#allocation8], %s1393
        %s1395 = sand.u32 %s293, 1
        %s1396 = smul.addr %s1395, 256
        %s1397 = scalar_lea.vmem [#allocation7], %s1396
        // Predicated region
        $region157: #{conformer_forward.1} parent=147 // pred_check
          %p1398 = pneg %p306
        $region158: #{conformer_forward.1} parent=147 // pred_check_branch
          %1400 = sbr.rel (%p1398) target = $region160
        $region159: #{conformer_forward.1} parent=147 // pred_region
          %1401 = dma.done %s1394, 4096
        $region160: #{conformer_forward.1} parent=147 // pred_fallthru
          _
        %s1402 = sand.u32 %s101, 1
        %s1403 = scalar_lea.sflag [#allocation8], %s1402
        %s1404 = sand.u32 %s345, 1
        %s1405 = scalar_lea.vmem [#allocation9], %s1404
        // Predicated region
        $region161: #{conformer_forward.1} parent=147 // pred_check
          %p1406 = pneg %p358
        $region162: #{conformer_forward.1} parent=147 // pred_check_branch
          %1408 = sbr.rel (%p1406) target = $region164
        $region163: #{conformer_forward.1} parent=147 // pred_region
          %1409 = dma.done %s1403, 16
        $region164: #{conformer_forward.1} parent=147 // pred_fallthru
          _
        %s1410 = sand.u32 %s101, 1
        %s1411 = scalar_lea.sflag [#allocation11], %s1410
        %s1412 = sand.u32 %s423, 1
        %s1413 = smul.addr %s1412, 3
        %s1414 = scalar_lea.vmem [#allocation10], %s1413
        // Predicated region
        $region165: #{conformer_forward.1} parent=147 // pred_check
          %p1415 = pneg %p436
        $region166: #{conformer_forward.1} parent=147 // pred_check_branch
          %1417 = sbr.rel (%p1415) target = $region168
        $region167: #{conformer_forward.1} parent=147 // pred_region
          %1418 = dma.done %s1411, 48
        $region168: #{conformer_forward.1} parent=147 // pred_fallthru
          _
        %s1419 = sand.u32 %s101, 1
        %s1420 = scalar_lea.sflag [#allocation11], %s1419
        %s1421 = sand.u32 %s449, 1
        %s1422 = smul.addr %s1421, 64
        %s1423 = scalar_lea.vmem [#allocation12], %s1422
        // Predicated region
        $region169: #{conformer_forward.1} parent=147 // pred_check
          %p1424 = pneg %p462
        $region170: #{conformer_forward.1} parent=147 // pred_check_branch
          %1426 = sbr.rel (%p1424) target = $region172
        $region171: #{conformer_forward.1} parent=147 // pred_region
          %1427 = dma.done %s1420, 1024
        $region172: #{conformer_forward.1} parent=147 // pred_fallthru
          _
        %s1428 = sand.u32 %s101, 1
        %s1429 = scalar_lea.sflag [#allocation14], %s1428
        %s1430 = sand.u32 %s501, 1
        %s1431 = scalar_lea.vmem [#allocation13], %s1430
        // Predicated region
        $region173: #{conformer_forward.1} parent=147 // pred_check
          %p1432 = pneg %p514
        $region174: #{conformer_forward.1} parent=147 // pred_check_branch
          %1434 = sbr.rel (%p1432) target = $region176
        $region175: #{conformer_forward.1} parent=147 // pred_region
          %1435 = dma.done %s1429, 16
        $region176: #{conformer_forward.1} parent=147 // pred_fallthru
          _
        %s1436 = sand.u32 %s101, 1
        %s1437 = scalar_lea.sflag [#allocation14], %s1436
        %s1438 = sand.u32 %s527, 1
        %s1439 = scalar_lea.vmem [#allocation15], %s1438
        // Predicated region
        $region177: #{conformer_forward.1} parent=147 // pred_check
          %p1440 = pneg %p540
        $region178: #{conformer_forward.1} parent=147 // pred_check_branch
          %1442 = sbr.rel (%p1440) target = $region180
        $region179: #{conformer_forward.1} parent=147 // pred_region
          %1443 = dma.done %s1437, 16
        $region180: #{conformer_forward.1} parent=147 // pred_fallthru
          _
        %s1444 = sand.u32 %s101, 1
        %s1445 = scalar_lea.sflag [#allocation17], %s1444
        %s1446 = sand.u32 %s553, 1
        %s1447 = smul.addr %s1446, 128
        %s1448 = scalar_lea.vmem [#allocation16], %s1447
        // Predicated region
        $region181: #{conformer_forward.1} parent=147 // pred_check
          %p1449 = pneg %p566
        $region182: #{conformer_forward.1} parent=147 // pred_check_branch
          %1451 = sbr.rel (%p1449) target = $region184
        $region183: #{conformer_forward.1} parent=147 // pred_region
          %1452 = dma.done %s1445, 2048
        $region184: #{conformer_forward.1} parent=147 // pred_fallthru
          _
        %s1453 = sand.u32 %s101, 1
        %s1454 = scalar_lea.sflag [#allocation17], %s1453
        %s1455 = sand.u32 %s683, 1
        %s1456 = smul.addr %s1455, 64
        %s1457 = scalar_lea.vmem [#allocation18], %s1456
        // Predicated region
        $region185: #{conformer_forward.1} parent=147 // pred_check
          %p1458 = pneg %p696
        $region186: #{conformer_forward.1} parent=147 // pred_check_branch
          %1460 = sbr.rel (%p1458) target = $region188
        $region187: #{conformer_forward.1} parent=147 // pred_region
          %1461 = dma.done %s1454, 1024
        $region188: #{conformer_forward.1} parent=147 // pred_fallthru
          _
        %s1462 = sand.u32 %s101, 1
        %s1463 = scalar_lea.sflag [#allocation20], %s1462
        %s1464 = sand.u32 %s709, 1
        %s1465 = scalar_lea.vmem [#allocation19], %s1464
        // Predicated region
        $region189: #{conformer_forward.1} parent=147 // pred_check
          %p1466 = pneg %p722
        $region190: #{conformer_forward.1} parent=147 // pred_check_branch
          %1468 = sbr.rel (%p1466) target = $region192
        $region191: #{conformer_forward.1} parent=147 // pred_region
          %1469 = dma.done %s1463, 16
        $region192: #{conformer_forward.1} parent=147 // pred_fallthru
          _
        %s1470 = sand.u32 %s101, 1
        %s1471 = scalar_lea.sflag [#allocation20], %s1470
        %s1472 = sand.u32 %s735, 1
        %s1473 = scalar_lea.vmem [#allocation21], %s1472
        // Predicated region
        $region193: #{conformer_forward.1} parent=147 // pred_check
          %p1474 = pneg %p748
        $region194: #{conformer_forward.1} parent=147 // pred_check_branch
          %1476 = sbr.rel (%p1474) target = $region196
        $region195: #{conformer_forward.1} parent=147 // pred_region
          %1477 = dma.done %s1471, 16
        $region196: #{conformer_forward.1} parent=147 // pred_fallthru
          _
        %s1478 = sand.u32 %s101, 1
        %s1479 = scalar_lea.sflag [#allocation23], %s1478
        %s1480 = sand.u32 %s787, 1
        %s1481 = smul.addr %s1480, 256
        %s1482 = scalar_lea.vmem [#allocation22], %s1481
        // Predicated region
        $region197: #{conformer_forward.1} parent=147 // pred_check
          %p1483 = pneg %p800
        $region198: #{conformer_forward.1} parent=147 // pred_check_branch
          %1485 = sbr.rel (%p1483) target = $region200
        $region199: #{conformer_forward.1} parent=147 // pred_region
          %1486 = dma.done %s1479, 4096
        $region200: #{conformer_forward.1} parent=147 // pred_fallthru
          _
        %s1487 = sand.u32 %s101, 1
        %s1488 = scalar_lea.sflag [#allocation23], %s1487
        %s1489 = sand.u32 %s839, 1
        %s1490 = smul.addr %s1489, 256
        %s1491 = scalar_lea.vmem [#allocation24], %s1490
        // Predicated region
        $region201: #{conformer_forward.1} parent=147 // pred_check
          %p1492 = pneg %p852
        $region202: #{conformer_forward.1} parent=147 // pred_check_branch
          %1494 = sbr.rel (%p1492) target = $region204
        $region203: #{conformer_forward.1} parent=147 // pred_region
          %1495 = dma.done %s1488, 4096
        $region204: #{conformer_forward.1} parent=147 // pred_fallthru
          _
        %s1496 = sand.u32 %s101, 1
        %s1497 = scalar_lea.sflag [#allocation26], %s1496
        %s1498 = sand.u32 %s891, 1
        %s1499 = scalar_lea.vmem [#allocation25], %s1498
        // Predicated region
        $region205: #{conformer_forward.1} parent=147 // pred_check
          %p1500 = pneg %p904
        $region206: #{conformer_forward.1} parent=147 // pred_check_branch
          %1502 = sbr.rel (%p1500) target = $region208
        $region207: #{conformer_forward.1} parent=147 // pred_region
          %1503 = dma.done %s1497, 16
        $region208: #{conformer_forward.1} parent=147 // pred_fallthru
          _
        %s1504 = sand.u32 %s101, 1
        %s1505 = scalar_lea.sflag [#allocation26], %s1504
        %s1506 = sand.u32 %s917, 1
        %s1507 = scalar_lea.vmem [#allocation27], %s1506
        // Predicated region
        $region209: #{conformer_forward.1} parent=147 // pred_check
          %p1508 = pneg %p930
        $region210: #{conformer_forward.1} parent=147 // pred_check_branch
          %1510 = sbr.rel (%p1508) target = $region212
        $region211: #{conformer_forward.1} parent=147 // pred_region
          %1511 = dma.done %s1505, 16
        $region212: #{conformer_forward.1} parent=147 // pred_fallthru
          _
        %1512 = sfence
        %p1513 = pneg %p129
        %p1514 = pneg %p126
        %s1515 = smul.u32 2, %s105
        %p1516 = scmp.lt.s32.totalorder %s1515, 1
        %s1517 = scalar_select %p1516, %s1515, 1
        %s1518 = smul.addr %s1517, 8
        %s1519 = scalar_lea.vmem %s3, %s1518
        %p1520 = pneg %p155
        %p1521 = pneg %p152
        %p1522 = pneg %p176
        %p1523 = pneg %p173
        %p1524 = scmp.lt.s32.totalorder %s106, 1
        %s1525 = scalar_select %p1524, %s106, 1
        %s1526 = scalar_lea.vmem %s7, %s1525
        %p1527 = pneg %p202
        %p1528 = pneg %p199
        %p1529 = scmp.lt.s32.totalorder %s106, 1
        %s1530 = scalar_select %p1529, %s106, 1
        %s1531 = scalar_lea.vmem %s9, %s1530
        %p1532 = pneg %p228
        %p1533 = pneg %p225
        %s1534 = sand.u32 %s241, 1
        %s1535 = scalar_lea.sflag [#allocation4], %s1534
        %s1536 = sand.u32 %s241, 1
        %s1537 = smul.addr %s1536, 256
        %s1538 = scalar_lea.vmem [#allocation6], %s1537
        %p1539 = pneg %p254
        %p1540 = pneg %p251
        %p1541 = scmp.lt.s32.totalorder %s106, 1
        %s1542 = scalar_select %p1541, %s106, 1
        %s1543 = smul.addr %s1542, 4
        %s1544 = scalar_lea.vmem %s13, %s1543
        %p1545 = pneg %p280
        %p1546 = pneg %p277
        %s1547 = sand.u32 %s101, 1
        %s1548 = scalar_lea.sflag [#allocation8], %s1547
        %s1549 = sand.u32 %s293, 1
        %s1550 = smul.addr %s1549, 256
        %s1551 = scalar_lea.vmem [#allocation7], %s1550
        %p1552 = pneg %p306
        %p1553 = pneg %p303
        %p1554 = scmp.lt.s32.totalorder %s106, 1
        %s1555 = scalar_select %p1554, %s106, 1
        %s1556 = scalar_lea.vmem %s17, %s1555
        %p1557 = pneg %p332
        %p1558 = pneg %p329
        %s1559 = sand.u32 %s101, 1
        %s1560 = scalar_lea.sflag [#allocation8], %s1559
        %s1561 = sand.u32 %s345, 1
        %s1562 = scalar_lea.vmem [#allocation9], %s1561
        %p1563 = pneg %p358
        %p1564 = pneg %p355
        %p1565 = scmp.lt.s32.totalorder %s106, 1
        %s1566 = scalar_select %p1565, %s106, 1
        %s1567 = scalar_lea.vmem %s21, %s1566
        %p1568 = pneg %p384
        %p1569 = pneg %p381
        %p1570 = scmp.lt.s32.totalorder %s106, 1
        %s1571 = scalar_select %p1570, %s106, 1
        %s1572 = smul.addr %s1571, 48
        %s1573 = smul.addr %s1572, 4
        %s1574 = scalar_lea.vmem %s23, %s1573
        %p1575 = pneg %p410
        %p1576 = pneg %p407
        %s1577 = sand.u32 %s101, 1
        %s1578 = scalar_lea.sflag [#allocation11], %s1577
        %s1579 = sand.u32 %s423, 1
        %s1580 = smul.addr %s1579, 3
        %s1581 = scalar_lea.vmem [#allocation10], %s1580
        %p1582 = pneg %p436
        %p1583 = pneg %p433
        %s1584 = sand.u32 %s101, 1
        %s1585 = scalar_lea.sflag [#allocation11], %s1584
        %s1586 = sand.u32 %s449, 1
        %s1587 = smul.addr %s1586, 64
        %s1588 = scalar_lea.vmem [#allocation12], %s1587
        %p1589 = pneg %p462
        %p1590 = pneg %p459
        %p1591 = scmp.lt.s32.totalorder %s106, 1
        %s1592 = scalar_select %p1591, %s106, 1
        %s1593 = scalar_lea.vmem %s29, %s1592
        %p1594 = pneg %p488
        %p1595 = pneg %p485
        %s1596 = sand.u32 %s101, 1
        %s1597 = scalar_lea.sflag [#allocation14], %s1596
        %s1598 = sand.u32 %s501, 1
        %s1599 = scalar_lea.vmem [#allocation13], %s1598
        %p1600 = pneg %p514
        %p1601 = pneg %p511
        %s1602 = sand.u32 %s101, 1
        %s1603 = scalar_lea.sflag [#allocation14], %s1602
        %s1604 = sand.u32 %s527, 1
        %s1605 = scalar_lea.vmem [#allocation15], %s1604
        %p1606 = pneg %p540
        %p1607 = pneg %p537
        %s1608 = sand.u32 %s101, 1
        %s1609 = scalar_lea.sflag [#allocation17], %s1608
        %s1610 = sand.u32 %s553, 1
        %s1611 = smul.addr %s1610, 128
        %s1612 = scalar_lea.vmem [#allocation16], %s1611
        %p1613 = pneg %p566
        %p1614 = pneg %p563
        %p1615 = scmp.lt.s32.totalorder %s106, 1
        %s1616 = scalar_select %p1615, %s106, 1
        %s1617 = smul.addr %s1616, 2
        %s1618 = scalar_lea.vmem %s37, %s1617
        %p1619 = pneg %p592
        %p1620 = pneg %p589
        %p1621 = scmp.lt.s32.totalorder %s106, 1
        %s1622 = scalar_select %p1621, %s106, 1
        %s1623 = smul.addr %s1622, 8
        %s1624 = scalar_lea.vmem %s39, %s1623
        %p1625 = pneg %p618
        %p1626 = pneg %p615
        %p1627 = scmp.lt.s32.totalorder %s106, 1
        %s1628 = scalar_select %p1627, %s106, 1
        %s1629 = scalar_lea.vmem %s41, %s1628
        %p1630 = pneg %p644
        %p1631 = pneg %p641
        %p1632 = scmp.lt.s32.totalorder %s106, 1
        %s1633 = scalar_select %p1632, %s106, 1
        %s1634 = scalar_lea.vmem %s43, %s1633
        %p1635 = pneg %p670
        %p1636 = pneg %p667
        %s1637 = sand.u32 %s101, 1
        %s1638 = scalar_lea.sflag [#allocation17], %s1637
        %s1639 = sand.u32 %s683, 1
        %s1640 = smul.addr %s1639, 64
        %s1641 = scalar_lea.vmem [#allocation18], %s1640
        %p1642 = pneg %p696
        %p1643 = pneg %p693
        %s1644 = sand.u32 %s101, 1
        %s1645 = scalar_lea.sflag [#allocation20], %s1644
        %s1646 = sand.u32 %s709, 1
        %s1647 = scalar_lea.vmem [#allocation19], %s1646
        %p1648 = pneg %p722
        %p1649 = pneg %p719
        %s1650 = sand.u32 %s101, 1
        %s1651 = scalar_lea.sflag [#allocation20], %s1650
        %s1652 = sand.u32 %s735, 1
        %s1653 = scalar_lea.vmem [#allocation21], %s1652
        %p1654 = pneg %p748
        %p1655 = pneg %p745
        %p1656 = scmp.lt.s32.totalorder %s106, 1
        %s1657 = scalar_select %p1656, %s106, 1
        %s1658 = scalar_lea.vmem %s51, %s1657
        %p1659 = pneg %p774
        %p1660 = pneg %p771
        %s1661 = sand.u32 %s101, 1
        %s1662 = scalar_lea.sflag [#allocation23], %s1661
        %s1663 = sand.u32 %s787, 1
        %s1664 = smul.addr %s1663, 256
        %s1665 = scalar_lea.vmem [#allocation22], %s1664
        %p1666 = pneg %p800
        %p1667 = pneg %p797
        %p1668 = scmp.lt.s32.totalorder %s106, 1
        %s1669 = scalar_select %p1668, %s106, 1
        %s1670 = smul.addr %s1669, 4
        %s1671 = scalar_lea.vmem %s55, %s1670
        %p1672 = pneg %p826
        %p1673 = pneg %p823
        %s1674 = sand.u32 %s101, 1
        %s1675 = scalar_lea.sflag [#allocation23], %s1674
        %s1676 = sand.u32 %s839, 1
        %s1677 = smul.addr %s1676, 256
        %s1678 = scalar_lea.vmem [#allocation24], %s1677
        %p1679 = pneg %p852
        %p1680 = pneg %p849
        %p1681 = scmp.lt.s32.totalorder %s106, 1
        %s1682 = scalar_select %p1681, %s106, 1
        %s1683 = scalar_lea.vmem %s59, %s1682
        %p1684 = pneg %p878
        %p1685 = pneg %p875
        %s1686 = sand.u32 %s101, 1
        %s1687 = scalar_lea.sflag [#allocation26], %s1686
        %s1688 = sand.u32 %s891, 1
        %s1689 = scalar_lea.vmem [#allocation25], %s1688
        %p1690 = pneg %p904
        %p1691 = pneg %p901
        %s1692 = sand.u32 %s101, 1
        %s1693 = scalar_lea.sflag [#allocation26], %s1692
        %s1694 = sand.u32 %s917, 1
        %s1695 = scalar_lea.vmem [#allocation27], %s1694
        %p1696 = pneg %p930
        %p1697 = pneg %p927
        %p1698 = pneg %p956
        %p1699 = pneg %p953
        %s1700 = smul.u32 2, %s105
        %p1701 = scmp.lt.s32.totalorder %s1700, 1
        %s1702 = scalar_select %p1701, %s1700, 1
        %s1703 = smul.addr %s1702, 8
        %s1704 = scalar_lea.vmem %s65, %s1703
        %s1705 = smul.u32 2, %s105
        %p1706 = scmp.lt.s32.totalorder %s1705, 1
        %s1707 = scalar_select %p1706, %s1705, 1
        %s1708 = smul.addr %s1707, 8
        %s1709 = scalar_lea.vmem %s3, %s1708
        %s1710 = smul.u32 2, %s105
        %p1711 = scmp.lt.s32.totalorder %s106, 1
        %s1712 = scalar_select %p1711, %s106, 1
        %s1713 = scalar_lea.vmem %s7, %s1712
        %p1714 = scmp.lt.s32.totalorder %s106, 1
        %s1715 = scalar_select %p1714, %s106, 1
        %s1716 = scalar_lea.vmem %s9, %s1715
        %p1717 = scmp.lt.s32.totalorder %s106, 1
        %s1718 = scalar_select %p1717, %s106, 1
        %s1719 = smul.addr %s1718, 4
        %s1720 = scalar_lea.vmem %s13, %s1719
        %p1721 = scmp.lt.s32.totalorder %s106, 1
        %s1722 = scalar_select %p1721, %s106, 1
        %s1723 = scalar_lea.vmem %s17, %s1722
        %p1724 = scmp.lt.s32.totalorder %s106, 1
        %s1725 = scalar_select %p1724, %s106, 1
        %s1726 = scalar_lea.vmem %s21, %s1725
        %p1727 = scmp.lt.s32.totalorder %s106, 1
        %s1728 = scalar_select %p1727, %s106, 1
        %s1729 = smul.addr %s1728, 48
        %s1730 = smul.addr %s1729, 4
        %s1731 = scalar_lea.vmem %s23, %s1730
        %p1732 = scmp.lt.s32.totalorder %s106, 1
        %s1733 = scalar_select %p1732, %s106, 1
        %s1734 = scalar_lea.vmem %s29, %s1733
        %p1735 = scmp.lt.s32.totalorder %s106, 1
        %s1736 = scalar_select %p1735, %s106, 1
        %s1737 = smul.addr %s1736, 2
        %s1738 = scalar_lea.vmem %s37, %s1737
        %p1739 = scmp.lt.s32.totalorder %s106, 1
        %s1740 = scalar_select %p1739, %s106, 1
        %s1741 = smul.addr %s1740, 8
        %s1742 = scalar_lea.vmem %s39, %s1741
        %p1743 = scmp.lt.s32.totalorder %s106, 1
        %s1744 = scalar_select %p1743, %s106, 1
        %s1745 = scalar_lea.vmem %s41, %s1744
        %p1746 = scmp.lt.s32.totalorder %s106, 1
        %s1747 = scalar_select %p1746, %s106, 1
        %s1748 = scalar_lea.vmem %s43, %s1747
        %p1749 = scmp.lt.s32.totalorder %s106, 1
        %s1750 = scalar_select %p1749, %s106, 1
        %s1751 = scalar_lea.vmem %s51, %s1750
        %p1752 = scmp.lt.s32.totalorder %s106, 1
        %s1753 = scalar_select %p1752, %s106, 1
        %s1754 = smul.addr %s1753, 4
        %s1755 = scalar_lea.vmem %s55, %s1754
        %p1756 = scmp.lt.s32.totalorder %s106, 1
        %s1757 = scalar_select %p1756, %s106, 1
        %s1758 = scalar_lea.vmem %s59, %s1757
        %s1759 = smul.u32 2, %s105
        %p1760 = scmp.lt.s32.totalorder %s1759, 1
        %s1761 = scalar_select %p1760, %s1759, 1
        %s1762 = smul.addr %s1761, 8
        %s1763 = scalar_lea.vmem %s65, %s1762
        %s1764 = smul.u32 2, %s105
        %p1766 = scmp.eq.s32.totalorder %s106, 0
        // Predicated region
        $region213: #{conformer_forward.1} parent=147 // pred_check
          %p1767 = pneg %p1766
        $region214: #{conformer_forward.1} parent=147 // pred_check_branch
          %1769 = sbr.rel (%p1767) target = $region216
        $region215: #{conformer_forward.1} parent=147 // pred_region
          %v1770 = vld [vmem:[%s1709] sm:$0xff]
          %v1771 = vld [vmem:[%s1709 + $0x8] sm:$0xff]
          %v1772 = vld [vmem:[%s5] sm:$0xff]
          %v1773 = vadd.f32 %v1770, %v1772
          %v1774 = vadd.f32 %v1771, %v1772
          %1775 = vst [vmem:[#allocation2] sm:$0xff] %v1773
          %1776 = vst [vmem:[#allocation2 + $0x8] sm:$0xff] %v1774
        $region216: #{conformer_forward.1} parent=147 // pred_fallthru
          _
        %v1777 = vld [vmem:[#allocation2] sm:$0xff]
        %v1778 = vld [vmem:[#allocation2 + $0x8] sm:$0xff]
        %v1779 = vlaneseq
        %v1780 = vand.u32 %v1779, 127
        %v1781 = vlaneseq
        %v1782 = vshrl.u32 %v1781, 7
        %s1783 = smul.u32 %s105, 2
        %s1784 = sld [smem:[#allocation3 + %s1783]]
        %v1785 = vstv %s1784
        %vm1786 = vcmp.lt.s32.totalorder %v1780, %v1785
        %v1787 = vsel %vm1786, 0.0, -1e+09
        %vm1788 = vcmp.lt.s32.totalorder %v1782, %v1785
        %v1789 = vsel %vm1788, 1, 0
        %v1790 = vcvt.s32.f32 %v1789
        %s1791 = sadd.s32 %s1783, 1
        %s1792 = sld [smem:[#allocation3 + %s1791]]
        %v1793 = vstv %s1792
        %vm1794 = vcmp.lt.s32.totalorder %v1780, %v1793
        %v1795 = vsel %vm1794, 0.0, -1e+09
        %vm1796 = vcmp.lt.s32.totalorder %v1782, %v1793
        %v1797 = vsel %vm1796, 1, 0
        %v1798 = vcvt.s32.f32 %v1797
        %1799 = vadd.xlane.f32.xlu0 %v1777
        %v1800 = vpop.xlane.xlu0 %1799
        %1801 = vadd.xlane.f32.xlu0 %v1778
        %v1802 = vpop.xlane.xlu0 %1801
        %v1803 = vrcp.pop 128.0
        %v1804 = vmul.f32 %v1800, %v1803
        %v1805 = vmul.f32 %v1802, %v1803
        %v1806 = vsub.f32 %v1777, %v1804
        %v1807 = vsub.f32 %v1778, %v1805
        %v1808 = vmul.f32 %v1806, %v1806
        %v1809 = vmul.f32 %v1807, %v1807
        %1810 = vadd.xlane.f32.xlu0 %v1808
        %v1811 = vpop.xlane.xlu0 %1810
        %1812 = vadd.xlane.f32.xlu0 %v1809
        %v1813 = vpop.xlane.xlu0 %1812
        %v1814 = vmul.f32 %v1811, %v1803
        %v1815 = vmul.f32 %v1813, %v1803
        %v1816 = vadd.f32 %v1814, 1e-05
        %v1817 = vadd.f32 %v1815, 1e-05
        %v1818 = vrsqrt.pop %v1816
        %v1819 = vrsqrt.pop %v1817
        %v1820 = vmul.f32 %v1806, %v1818
        %v1821 = vmul.f32 %v1807, %v1819
        %v1822 = vld [vmem:[%s1713] sm:$0x1]
        %v1824 = vlaneseq
        %v1825 = vshrl.u32 %v1824, 7
        %v1826 = vsub.s32 0, %v1825
        %v1827 = vrot.slane %v1822, %v1826
        %v1829 = vmul.f32 %v1820, %v1827
        %v1830 = vmul.f32 %v1821, %v1827
        %v1831 = vld [vmem:[%s1716] sm:$0x1]
        %v1833 = vlaneseq
        %v1834 = vshrl.u32 %v1833, 7
        %v1835 = vsub.s32 0, %v1834
        %v1836 = vrot.slane %v1831, %v1835
        %v1838 = vadd.f32 %v1829, %v1836
        %v1839 = vadd.f32 %v1830, %v1836
        %v1840 = vpack.c.bf16 %v1839, %v1838
        %v1841 = vld [vmem:[%s1388] sm:$0xff]
        %v1842 = vld [vmem:[%s1388 + $0x8] sm:$0xff]
        %v1843 = vld [vmem:[%s1388 + $0x10] sm:$0xff]
        %v1844 = vld [vmem:[%s1388 + $0x18] sm:$0xff]
        %v1845 = vld [vmem:[%s1388 + $0x20] sm:$0xff]
        %v1846 = vld [vmem:[%s1388 + $0x28] sm:$0xff]
        %v1847 = vld [vmem:[%s1388 + $0x30] sm:$0xff]
        %v1848 = vld [vmem:[%s1388 + $0x38] sm:$0xff]
        %v1849 = vld [vmem:[%s1388 + $0x40] sm:$0xff]
        %v1850 = vld [vmem:[%s1388 + $0x48] sm:$0xff]
        %v1851 = vld [vmem:[%s1388 + $0x50] sm:$0xff]
        %v1852 = vld [vmem:[%s1388 + $0x58] sm:$0xff]
        %v1853 = vld [vmem:[%s1388 + $0x60] sm:$0xff]
        %v1854 = vld [vmem:[%s1388 + $0x68] sm:$0xff]
        %v1855 = vld [vmem:[%s1388 + $0x70] sm:$0xff]
        %v1856 = vld [vmem:[%s1388 + $0x78] sm:$0xff]
        %v1857 = vld [vmem:[%s1388 + $0x80] sm:$0xff]
        %v1858 = vld [vmem:[%s1388 + $0x88] sm:$0xff]
        %v1859 = vld [vmem:[%s1388 + $0x90] sm:$0xff]
        %v1860 = vld [vmem:[%s1388 + $0x98] sm:$0xff]
        %v1861 = vld [vmem:[%s1388 + $0xa0] sm:$0xff]
        %v1862 = vld [vmem:[%s1388 + $0xa8] sm:$0xff]
        %v1863 = vld [vmem:[%s1388 + $0xb0] sm:$0xff]
        %v1864 = vld [vmem:[%s1388 + $0xb8] sm:$0xff]
        %v1865 = vld [vmem:[%s1388 + $0xc0] sm:$0xff]
        %v1866 = vld [vmem:[%s1388 + $0xc8] sm:$0xff]
        %v1867 = vld [vmem:[%s1388 + $0xd0] sm:$0xff]
        %v1868 = vld [vmem:[%s1388 + $0xd8] sm:$0xff]
        %v1869 = vld [vmem:[%s1388 + $0xe0] sm:$0xff]
        %v1870 = vld [vmem:[%s1388 + $0xe8] sm:$0xff]
        %v1871 = vld [vmem:[%s1388 + $0xf0] sm:$0xff]
        %v1872 = vld [vmem:[%s1388 + $0xf8] sm:$0xff]
        %v1873 = vld [vmem:[%s1720] sm:$0xf]
        %v1875 = vlaneseq
        %v1876 = vshrl.u32 %v1875, 7
        %v1877 = vsub.s32 0, %v1876
        %v1878 = vrot.slane %v1873, %v1877
        %v1879 = vlaneseq
        %v1880 = vshrl.u32 %v1879, 7
        %v1881 = vsub.s32 1, %v1880
        %v1882 = vrot.slane %v1873, %v1881
        %v1883 = vlaneseq
        %v1884 = vshrl.u32 %v1883, 7
        %v1885 = vsub.s32 2, %v1884
        %v1886 = vrot.slane %v1873, %v1885
        %v1887 = vlaneseq
        %v1888 = vshrl.u32 %v1887, 7
        %v1889 = vsub.s32 3, %v1888
        %v1890 = vrot.slane %v1873, %v1889
        %v1927 = vunpack.c.l.b16 %v1841
        %v1928 = vunpack.c.h.b16 %v1841
        %v1929 = vunpack.c.l.b16 %v1842
        %v1930 = vunpack.c.h.b16 %v1842
        %v1931 = vunpack.c.l.b16 %v1843
        %v1932 = vunpack.c.h.b16 %v1843
        %v1933 = vunpack.c.l.b16 %v1844
        %v1934 = vunpack.c.h.b16 %v1844
        %v1935 = vunpack.c.l.b16 %v1845
        %v1936 = vunpack.c.h.b16 %v1845
        %v1937 = vunpack.c.l.b16 %v1846
        %v1938 = vunpack.c.h.b16 %v1846
        %v1939 = vunpack.c.l.b16 %v1847
        %v1940 = vunpack.c.h.b16 %v1847
        %v1941 = vunpack.c.l.b16 %v1848
        %v1942 = vunpack.c.h.b16 %v1848
        %v1943 = vunpack.c.l.b16 %v1849
        %v1944 = vunpack.c.h.b16 %v1849
        %v1945 = vunpack.c.l.b16 %v1850
        %v1946 = vunpack.c.h.b16 %v1850
        %v1947 = vunpack.c.l.b16 %v1851
        %v1948 = vunpack.c.h.b16 %v1851
        %v1949 = vunpack.c.l.b16 %v1852
        %v1950 = vunpack.c.h.b16 %v1852
        %v1951 = vunpack.c.l.b16 %v1853
        %v1952 = vunpack.c.h.b16 %v1853
        %v1953 = vunpack.c.l.b16 %v1854
        %v1954 = vunpack.c.h.b16 %v1854
        %v1955 = vunpack.c.l.b16 %v1855
        %v1956 = vunpack.c.h.b16 %v1855
        %v1957 = vunpack.c.l.b16 %v1856
        %v1958 = vunpack.c.h.b16 %v1856
        %v1959 = vunpack.c.l.b16 %v1857
        %v1960 = vunpack.c.h.b16 %v1857
        %v1961 = vunpack.c.l.b16 %v1858
        %v1962 = vunpack.c.h.b16 %v1858
        %v1963 = vunpack.c.l.b16 %v1859
        %v1964 = vunpack.c.h.b16 %v1859
        %v1965 = vunpack.c.l.b16 %v1860
        %v1966 = vunpack.c.h.b16 %v1860
        %v1967 = vunpack.c.l.b16 %v1861
        %v1968 = vunpack.c.h.b16 %v1861
        %v1969 = vunpack.c.l.b16 %v1862
        %v1970 = vunpack.c.h.b16 %v1862
        %v1971 = vunpack.c.l.b16 %v1863
        %v1972 = vunpack.c.h.b16 %v1863
        %v1973 = vunpack.c.l.b16 %v1864
        %v1974 = vunpack.c.h.b16 %v1864
        %v1975 = vunpack.c.l.b16 %v1865
        %v1976 = vunpack.c.h.b16 %v1865
        %v1977 = vunpack.c.l.b16 %v1866
        %v1978 = vunpack.c.h.b16 %v1866
        %v1979 = vunpack.c.l.b16 %v1867
        %v1980 = vunpack.c.h.b16 %v1867
        %v1981 = vunpack.c.l.b16 %v1868
        %v1982 = vunpack.c.h.b16 %v1868
        %v1983 = vunpack.c.l.b16 %v1869
        %v1984 = vunpack.c.h.b16 %v1869
        %v1985 = vunpack.c.l.b16 %v1870
        %v1986 = vunpack.c.h.b16 %v1870
        %v1987 = vunpack.c.l.b16 %v1871
        %v1988 = vunpack.c.h.b16 %v1871
        %v1989 = vunpack.c.l.b16 %v1872
        %v1990 = vunpack.c.h.b16 %v1872
        %v1991 = vpack.c.b16 %v1931, %v1927
        %v1992 = vpack.c.b16 %v1932, %v1928
        %v1993 = vpack.c.b16 %v1933, %v1929
        %v1994 = vpack.c.b16 %v1934, %v1930
        %v1995 = vpack.c.b16 %v1939, %v1935
        %v1996 = vpack.c.b16 %v1940, %v1936
        %v1997 = vpack.c.b16 %v1941, %v1937
        %v1998 = vpack.c.b16 %v1942, %v1938
        %v1999 = vpack.c.b16 %v1947, %v1943
        %v2000 = vpack.c.b16 %v1948, %v1944
        %v2001 = vpack.c.b16 %v1949, %v1945
        %v2002 = vpack.c.b16 %v1950, %v1946
        %v2003 = vpack.c.b16 %v1955, %v1951
        %v2004 = vpack.c.b16 %v1956, %v1952
        %v2005 = vpack.c.b16 %v1957, %v1953
        %v2006 = vpack.c.b16 %v1958, %v1954
        %v2007 = vpack.c.b16 %v1963, %v1959
        %v2008 = vpack.c.b16 %v1964, %v1960
        %v2009 = vpack.c.b16 %v1965, %v1961
        %v2010 = vpack.c.b16 %v1966, %v1962
        %v2011 = vpack.c.b16 %v1971, %v1967
        %v2012 = vpack.c.b16 %v1972, %v1968
        %v2013 = vpack.c.b16 %v1973, %v1969
        %v2014 = vpack.c.b16 %v1974, %v1970
        %v2015 = vpack.c.b16 %v1979, %v1975
        %v2016 = vpack.c.b16 %v1980, %v1976
        %v2017 = vpack.c.b16 %v1981, %v1977
        %v2018 = vpack.c.b16 %v1982, %v1978
        %v2019 = vpack.c.b16 %v1987, %v1983
        %v2020 = vpack.c.b16 %v1988, %v1984
        %v2021 = vpack.c.b16 %v1989, %v1985
        %v2022 = vpack.c.b16 %v1990, %v1986
        %2055 = vmatprep.subr.bf16.mxu0 %v1992
        %2056 = vmatpush1.bf16.msra.mxu0 %v1991
        %2057 = vmatprep.subr.bf16.mxu0 %v1996
        %2058 = vmatpush1.bf16.msra.mxu0 %v1995
        %2059 = vmatprep.subr.bf16.mxu0 %v2000
        %2060 = vmatpush1.bf16.msra.mxu0 %v1999
        %2061 = vmatprep.subr.bf16.mxu0 %v2004
        %2062 = vmatpush1.bf16.msra.mxu0 %v2003
        %2063 = vmatprep.subr.bf16.mxu0 %v2008
        %2064 = vmatpush1.bf16.msra.mxu0 %v2007
        %2065 = vmatprep.subr.bf16.mxu0 %v2012
        %2066 = vmatpush1.bf16.msra.mxu0 %v2011
        %2067 = vmatprep.subr.bf16.mxu0 %v2016
        %2068 = vmatpush1.bf16.msra.mxu0 %v2015
        %2069 = vmatprep.subr.bf16.mxu0 %v2020
        %2070 = vmatpush1.bf16.msra.mxu0 %v2019
        %2071 = vmatprep.subr.bf16.mxu0 0
        %2072 = vmatpush1.bf16.msra.mxu0 0
        %2073 = vmatprep.subr.bf16.mxu0 0
        %2074 = vmatpush1.bf16.msra.mxu0 0
        %2075 = vmatprep.subr.bf16.mxu0 0
        %2076 = vmatpush1.bf16.msra.mxu0 0
        %2077 = vmatprep.subr.bf16.mxu0 0
        %2078 = vmatpush1.bf16.msra.mxu0 0
        %2079 = vmatprep.subr.bf16.mxu0 0
        %2080 = vmatpush1.bf16.msra.mxu0 0
        %2081 = vmatprep.subr.bf16.mxu0 0
        %2082 = vmatpush1.bf16.msra.mxu0 0
        %2083 = vmatprep.subr.bf16.mxu0 0
        %2084 = vmatpush1.bf16.msra.mxu0 0
        %2085 = vmatprep.subr.bf16.mxu0 0
        %2086 = vmatpush1.bf16.msra.mxu0 0
        %2087 = vmatprep.mubr.bf16.mxu0 0
        %2088 = vmatmul.mubr.bf16.gmra.mrb[0].mxu0 %v1840
        %v2089 = vpop.f32.mrb[0].mxu0
        %v2090 = vadd.f32 %v1878, %v2089
        %v2091 = vpop.f32.mrb[0].mxu0
        %v2092 = vadd.f32 %v1882, %v2091
        %v2093 = vpop.f32.mrb[0].mxu0
        %v2094 = vadd.f32 %v1878, %v2093
        %v2095 = vpop.f32.mrb[0].mxu0
        %v2096 = vadd.f32 %v1882, %v2095
        %2097 = vdwg.mxu0
        %2098 = vmatprep.subr.bf16.mxu0 %v1994
        %2099 = vmatpush1.bf16.msra.mxu0 %v1993
        %2100 = vmatprep.subr.bf16.mxu0 %v1998
        %2101 = vmatpush1.bf16.msra.mxu0 %v1997
        %2102 = vmatprep.subr.bf16.mxu0 %v2002
        %2103 = vmatpush1.bf16.msra.mxu0 %v2001
        %2104 = vmatprep.subr.bf16.mxu0 %v2006
        %2105 = vmatpush1.bf16.msra.mxu0 %v2005
        %2106 = vmatprep.subr.bf16.mxu0 %v2010
        %2107 = vmatpush1.bf16.msra.mxu0 %v2009
        %2108 = vmatprep.subr.bf16.mxu0 %v2014
        %2109 = vmatpush1.bf16.msra.mxu0 %v2013
        %2110 = vmatprep.subr.bf16.mxu0 %v2018
        %2111 = vmatpush1.bf16.msra.mxu0 %v2017
        %2112 = vmatprep.subr.bf16.mxu0 %v2022
        %2113 = vmatpush1.bf16.msra.mxu0 %v2021
        %2114 = vmatprep.subr.bf16.mxu0 0
        %2115 = vmatpush1.bf16.msra.mxu0 0
        %2116 = vmatprep.subr.bf16.mxu0 0
        %2117 = vmatpush1.bf16.msra.mxu0 0
        %2118 = vmatprep.subr.bf16.mxu0 0
        %2119 = vmatpush1.bf16.msra.mxu0 0
        %2120 = vmatprep.subr.bf16.mxu0 0
        %2121 = vmatpush1.bf16.msra.mxu0 0
        %2122 = vmatprep.subr.bf16.mxu0 0
        %2123 = vmatpush1.bf16.msra.mxu0 0
        %2124 = vmatprep.subr.bf16.mxu0 0
        %2125 = vmatpush1.bf16.msra.mxu0 0
        %2126 = vmatprep.subr.bf16.mxu0 0
        %2127 = vmatpush1.bf16.msra.mxu0 0
        %2128 = vmatprep.subr.bf16.mxu0 0
        %2129 = vmatpush1.bf16.msra.mxu0 0
        %2130 = vmatprep.mubr.bf16.mxu0 0
        %2131 = vmatmul.mubr.bf16.gmra.mrb[0].mxu0 %v1840
        %v2132 = vpop.f32.mrb[0].mxu0
        %v2133 = vadd.f32 %v1886, %v2132
        %v2134 = vpop.f32.mrb[0].mxu0
        %v2135 = vadd.f32 %v1890, %v2134
        %v2136 = vpop.f32.mrb[0].mxu0
        %v2137 = vadd.f32 %v1886, %v2136
        %v2138 = vpop.f32.mrb[0].mxu0
        %v2139 = vadd.f32 %v1890, %v2138
        %2140 = vdwg.mxu0
        %v2141 = vxor.u32 %v2090, 2147483648
        %v2142 = vxor.u32 %v2092, 2147483648
        %v2143 = vxor.u32 %v2133, 2147483648
        %v2144 = vxor.u32 %v2135, 2147483648
        %v2145 = vxor.u32 %v2094, 2147483648
        %v2146 = vxor.u32 %v2096, 2147483648
        %v2147 = vxor.u32 %v2137, 2147483648
        %v2148 = vxor.u32 %v2139, 2147483648
        %v2149 = vmul.f32 %v2141, 1.442695
        %v2150 = vpow.pop %v2149
        %v2151 = vmul.f32 %v2142, 1.442695
        %v2152 = vpow.pop %v2151
        %v2153 = vmul.f32 %v2143, 1.442695
        %v2154 = vpow.pop %v2153
        %v2155 = vmul.f32 %v2144, 1.442695
        %v2156 = vpow.pop %v2155
        %v2157 = vmul.f32 %v2145, 1.442695
        %v2158 = vpow.pop %v2157
        %v2159 = vmul.f32 %v2146, 1.442695
        %v2160 = vpow.pop %v2159
        %v2161 = vmul.f32 %v2147, 1.442695
        %v2162 = vpow.pop %v2161
        %v2163 = vmul.f32 %v2148, 1.442695
        %v2164 = vpow.pop %v2163
        %v2165 = vadd.f32 %v2150, 1.0
        %v2166 = vadd.f32 %v2152, 1.0
        %v2167 = vadd.f32 %v2154, 1.0
        %v2168 = vadd.f32 %v2156, 1.0
        %v2169 = vadd.f32 %v2158, 1.0
        %v2170 = vadd.f32 %v2160, 1.0
        %v2171 = vadd.f32 %v2162, 1.0
        %v2172 = vadd.f32 %v2164, 1.0
        %v2173 = vrcp.pop %v2165
        %v2174 = vmul.f32 1.0, %v2173
        %v2175 = vrcp.pop %v2166
        %v2176 = vmul.f32 1.0, %v2175
        %v2177 = vrcp.pop %v2167
        %v2178 = vmul.f32 1.0, %v2177
        %v2179 = vrcp.pop %v2168
        %v2180 = vmul.f32 1.0, %v2179
        %v2181 = vrcp.pop %v2169
        %v2182 = vmul.f32 1.0, %v2181
        %v2183 = vrcp.pop %v2170
        %v2184 = vmul.f32 1.0, %v2183
        %v2185 = vrcp.pop %v2171
        %v2186 = vmul.f32 1.0, %v2185
        %v2187 = vrcp.pop %v2172
        %v2188 = vmul.f32 1.0, %v2187
        %v2189 = vmul.f32 %v2090, %v2174
        %v2190 = vmul.f32 %v2092, %v2176
        %v2191 = vmul.f32 %v2133, %v2178
        %v2192 = vmul.f32 %v2135, %v2180
        %v2193 = vmul.f32 %v2094, %v2182
        %v2194 = vmul.f32 %v2096, %v2184
        %v2195 = vmul.f32 %v2137, %v2186
        %v2196 = vmul.f32 %v2139, %v2188
        %v2197 = vpack.c.bf16 %v2193, %v2189
        %v2198 = vpack.c.bf16 %v2194, %v2190
        %v2199 = vpack.c.bf16 %v2195, %v2191
        %v2200 = vpack.c.bf16 %v2196, %v2192
        %v2201 = vld [vmem:[%s1397] sm:$0xf]
        %v2202 = vld [vmem:[%s1397 + $0x4] sm:$0xf]
        %v2203 = vld [vmem:[%s1397 + $0x8] sm:$0xf]
        %v2204 = vld [vmem:[%s1397 + $0xc] sm:$0xf]
        %v2205 = vld [vmem:[%s1397 + $0x10] sm:$0xf]
        %v2206 = vld [vmem:[%s1397 + $0x14] sm:$0xf]
        %v2207 = vld [vmem:[%s1397 + $0x18] sm:$0xf]
        %v2208 = vld [vmem:[%s1397 + $0x1c] sm:$0xf]
        %v2209 = vld [vmem:[%s1397 + $0x20] sm:$0xf]
        %v2210 = vld [vmem:[%s1397 + $0x24] sm:$0xf]
        %v2211 = vld [vmem:[%s1397 + $0x28] sm:$0xf]
        %v2212 = vld [vmem:[%s1397 + $0x2c] sm:$0xf]
        %v2213 = vld [vmem:[%s1397 + $0x30] sm:$0xf]
        %v2214 = vld [vmem:[%s1397 + $0x34] sm:$0xf]
        %v2215 = vld [vmem:[%s1397 + $0x38] sm:$0xf]
        %v2216 = vld [vmem:[%s1397 + $0x3c] sm:$0xf]
        %v2217 = vld [vmem:[%s1397 + $0x40] sm:$0xf]
        %v2218 = vld [vmem:[%s1397 + $0x44] sm:$0xf]
        %v2219 = vld [vmem:[%s1397 + $0x48] sm:$0xf]
        %v2220 = vld [vmem:[%s1397 + $0x4c] sm:$0xf]
        %v2221 = vld [vmem:[%s1397 + $0x50] sm:$0xf]
        %v2222 = vld [vmem:[%s1397 + $0x54] sm:$0xf]
        %v2223 = vld [vmem:[%s1397 + $0x58] sm:$0xf]
        %v2224 = vld [vmem:[%s1397 + $0x5c] sm:$0xf]
        %v2225 = vld [vmem:[%s1397 + $0x60] sm:$0xf]
        %v2226 = vld [vmem:[%s1397 + $0x64] sm:$0xf]
        %v2227 = vld [vmem:[%s1397 + $0x68] sm:$0xf]
        %v2228 = vld [vmem:[%s1397 + $0x6c] sm:$0xf]
        %v2229 = vld [vmem:[%s1397 + $0x70] sm:$0xf]
        %v2230 = vld [vmem:[%s1397 + $0x74] sm:$0xf]
        %v2231 = vld [vmem:[%s1397 + $0x78] sm:$0xf]
        %v2232 = vld [vmem:[%s1397 + $0x7c] sm:$0xf]
        %v2233 = vld [vmem:[%s1397 + $0x80] sm:$0xf]
        %v2234 = vld [vmem:[%s1397 + $0x84] sm:$0xf]
        %v2235 = vld [vmem:[%s1397 + $0x88] sm:$0xf]
        %v2236 = vld [vmem:[%s1397 + $0x8c] sm:$0xf]
        %v2237 = vld [vmem:[%s1397 + $0x90] sm:$0xf]
        %v2238 = vld [vmem:[%s1397 + $0x94] sm:$0xf]
        %v2239 = vld [vmem:[%s1397 + $0x98] sm:$0xf]
        %v2240 = vld [vmem:[%s1397 + $0x9c] sm:$0xf]
        %v2241 = vld [vmem:[%s1397 + $0xa0] sm:$0xf]
        %v2242 = vld [vmem:[%s1397 + $0xa4] sm:$0xf]
        %v2243 = vld [vmem:[%s1397 + $0xa8] sm:$0xf]
        %v2244 = vld [vmem:[%s1397 + $0xac] sm:$0xf]
        %v2245 = vld [vmem:[%s1397 + $0xb0] sm:$0xf]
        %v2246 = vld [vmem:[%s1397 + $0xb4] sm:$0xf]
        %v2247 = vld [vmem:[%s1397 + $0xb8] sm:$0xf]
        %v2248 = vld [vmem:[%s1397 + $0xbc] sm:$0xf]
        %v2249 = vld [vmem:[%s1397 + $0xc0] sm:$0xf]
        %v2250 = vld [vmem:[%s1397 + $0xc4] sm:$0xf]
        %v2251 = vld [vmem:[%s1397 + $0xc8] sm:$0xf]
        %v2252 = vld [vmem:[%s1397 + $0xcc] sm:$0xf]
        %v2253 = vld [vmem:[%s1397 + $0xd0] sm:$0xf]
        %v2254 = vld [vmem:[%s1397 + $0xd4] sm:$0xf]
        %v2255 = vld [vmem:[%s1397 + $0xd8] sm:$0xf]
        %v2256 = vld [vmem:[%s1397 + $0xdc] sm:$0xf]
        %v2257 = vld [vmem:[%s1397 + $0xe0] sm:$0xf]
        %v2258 = vld [vmem:[%s1397 + $0xe4] sm:$0xf]
        %v2259 = vld [vmem:[%s1397 + $0xe8] sm:$0xf]
        %v2260 = vld [vmem:[%s1397 + $0xec] sm:$0xf]
        %v2261 = vld [vmem:[%s1397 + $0xf0] sm:$0xf]
        %v2262 = vld [vmem:[%s1397 + $0xf4] sm:$0xf]
        %v2263 = vld [vmem:[%s1397 + $0xf8] sm:$0xf]
        %v2264 = vld [vmem:[%s1397 + $0xfc] sm:$0xf]
        %v2265 = vld [vmem:[%s1723] sm:$0x1]
        %v2267 = vlaneseq
        %v2268 = vshrl.u32 %v2267, 7
        %v2269 = vsub.s32 0, %v2268
        %v2270 = vrot.slane %v2265, %v2269
        %v2336 = vunpack.c.l.b16 %v2201
        %v2337 = vunpack.c.l.b16 %v2202
        %v2338 = vunpack.c.l.b16 %v2203
        %v2339 = vunpack.c.l.b16 %v2204
        %v2340 = vunpack.c.l.b16 %v2205
        %v2341 = vunpack.c.l.b16 %v2206
        %v2342 = vunpack.c.l.b16 %v2207
        %v2343 = vunpack.c.l.b16 %v2208
        %v2344 = vunpack.c.l.b16 %v2209
        %v2345 = vunpack.c.l.b16 %v2210
        %v2346 = vunpack.c.l.b16 %v2211
        %v2347 = vunpack.c.l.b16 %v2212
        %v2348 = vunpack.c.l.b16 %v2213
        %v2349 = vunpack.c.l.b16 %v2214
        %v2350 = vunpack.c.l.b16 %v2215
        %v2351 = vunpack.c.l.b16 %v2216
        %v2352 = vunpack.c.l.b16 %v2217
        %v2353 = vunpack.c.l.b16 %v2218
        %v2354 = vunpack.c.l.b16 %v2219
        %v2355 = vunpack.c.l.b16 %v2220
        %v2356 = vunpack.c.l.b16 %v2221
        %v2357 = vunpack.c.l.b16 %v2222
        %v2358 = vunpack.c.l.b16 %v2223
        %v2359 = vunpack.c.l.b16 %v2224
        %v2360 = vunpack.c.l.b16 %v2225
        %v2361 = vunpack.c.l.b16 %v2226
        %v2362 = vunpack.c.l.b16 %v2227
        %v2363 = vunpack.c.l.b16 %v2228
        %v2364 = vunpack.c.l.b16 %v2229
        %v2365 = vunpack.c.l.b16 %v2230
        %v2366 = vunpack.c.l.b16 %v2231
        %v2367 = vunpack.c.l.b16 %v2232
        %v2368 = vunpack.c.l.b16 %v2233
        %v2369 = vunpack.c.l.b16 %v2234
        %v2370 = vunpack.c.l.b16 %v2235
        %v2371 = vunpack.c.l.b16 %v2236
        %v2372 = vunpack.c.l.b16 %v2237
        %v2373 = vunpack.c.l.b16 %v2238
        %v2374 = vunpack.c.l.b16 %v2239
        %v2375 = vunpack.c.l.b16 %v2240
        %v2376 = vunpack.c.l.b16 %v2241
        %v2377 = vunpack.c.l.b16 %v2242
        %v2378 = vunpack.c.l.b16 %v2243
        %v2379 = vunpack.c.l.b16 %v2244
        %v2380 = vunpack.c.l.b16 %v2245
        %v2381 = vunpack.c.l.b16 %v2246
        %v2382 = vunpack.c.l.b16 %v2247
        %v2383 = vunpack.c.l.b16 %v2248
        %v2384 = vunpack.c.l.b16 %v2249
        %v2385 = vunpack.c.l.b16 %v2250
        %v2386 = vunpack.c.l.b16 %v2251
        %v2387 = vunpack.c.l.b16 %v2252
        %v2388 = vunpack.c.l.b16 %v2253
        %v2389 = vunpack.c.l.b16 %v2254
        %v2390 = vunpack.c.l.b16 %v2255
        %v2391 = vunpack.c.l.b16 %v2256
        %v2392 = vunpack.c.l.b16 %v2257
        %v2393 = vunpack.c.l.b16 %v2258
        %v2394 = vunpack.c.l.b16 %v2259
        %v2395 = vunpack.c.l.b16 %v2260
        %v2396 = vunpack.c.l.b16 %v2261
        %v2397 = vunpack.c.l.b16 %v2262
        %v2398 = vunpack.c.l.b16 %v2263
        %v2399 = vunpack.c.l.b16 %v2264
        %v2400 = vpack.c.b16 %v2337, %v2336
        %v2401 = vpack.c.b16 %v2339, %v2338
        %v2402 = vpack.c.b16 %v2341, %v2340
        %v2403 = vpack.c.b16 %v2343, %v2342
        %v2404 = vpack.c.b16 %v2345, %v2344
        %v2405 = vpack.c.b16 %v2347, %v2346
        %v2406 = vpack.c.b16 %v2349, %v2348
        %v2407 = vpack.c.b16 %v2351, %v2350
        %v2408 = vpack.c.b16 %v2353, %v2352
        %v2409 = vpack.c.b16 %v2355, %v2354
        %v2410 = vpack.c.b16 %v2357, %v2356
        %v2411 = vpack.c.b16 %v2359, %v2358
        %v2412 = vpack.c.b16 %v2361, %v2360
        %v2413 = vpack.c.b16 %v2363, %v2362
        %v2414 = vpack.c.b16 %v2365, %v2364
        %v2415 = vpack.c.b16 %v2367, %v2366
        %v2416 = vpack.c.b16 %v2369, %v2368
        %v2417 = vpack.c.b16 %v2371, %v2370
        %v2418 = vpack.c.b16 %v2373, %v2372
        %v2419 = vpack.c.b16 %v2375, %v2374
        %v2420 = vpack.c.b16 %v2377, %v2376
        %v2421 = vpack.c.b16 %v2379, %v2378
        %v2422 = vpack.c.b16 %v2381, %v2380
        %v2423 = vpack.c.b16 %v2383, %v2382
        %v2424 = vpack.c.b16 %v2385, %v2384
        %v2425 = vpack.c.b16 %v2387, %v2386
        %v2426 = vpack.c.b16 %v2389, %v2388
        %v2427 = vpack.c.b16 %v2391, %v2390
        %v2428 = vpack.c.b16 %v2393, %v2392
        %v2429 = vpack.c.b16 %v2395, %v2394
        %v2430 = vpack.c.b16 %v2397, %v2396
        %v2431 = vpack.c.b16 %v2399, %v2398
        %2464 = vmatprep.subr.bf16.mxu0 0
        %2465 = vmatpush1.bf16.msra.mxu0 %v2400
        %2466 = vmatprep.subr.bf16.mxu0 0
        %2467 = vmatpush1.bf16.msra.mxu0 %v2401
        %2468 = vmatprep.subr.bf16.mxu0 0
        %2469 = vmatpush1.bf16.msra.mxu0 %v2402
        %2470 = vmatprep.subr.bf16.mxu0 0
        %2471 = vmatpush1.bf16.msra.mxu0 %v2403
        %2472 = vmatprep.subr.bf16.mxu0 0
        %2473 = vmatpush1.bf16.msra.mxu0 %v2404
        %2474 = vmatprep.subr.bf16.mxu0 0
        %2475 = vmatpush1.bf16.msra.mxu0 %v2405
        %2476 = vmatprep.subr.bf16.mxu0 0
        %2477 = vmatpush1.bf16.msra.mxu0 %v2406
        %2478 = vmatprep.subr.bf16.mxu0 0
        %2479 = vmatpush1.bf16.msra.mxu0 %v2407
        %2480 = vmatprep.subr.bf16.mxu0 0
        %2481 = vmatpush1.bf16.msra.mxu0 %v2408
        %2482 = vmatprep.subr.bf16.mxu0 0
        %2483 = vmatpush1.bf16.msra.mxu0 %v2409
        %2484 = vmatprep.subr.bf16.mxu0 0
        %2485 = vmatpush1.bf16.msra.mxu0 %v2410
        %2486 = vmatprep.subr.bf16.mxu0 0
        %2487 = vmatpush1.bf16.msra.mxu0 %v2411
        %2488 = vmatprep.subr.bf16.mxu0 0
        %2489 = vmatpush1.bf16.msra.mxu0 %v2412
        %2490 = vmatprep.subr.bf16.mxu0 0
        %2491 = vmatpush1.bf16.msra.mxu0 %v2413
        %2492 = vmatprep.subr.bf16.mxu0 0
        %2493 = vmatpush1.bf16.msra.mxu0 %v2414
        %2494 = vmatprep.subr.bf16.mxu0 0
        %2495 = vmatpush1.bf16.msra.mxu0 %v2415
        %2496 = vmatprep.mubr.bf16.mxu0 %v2198
        %2497 = vmatmul.mubr.bf16.gmra.mrb[0].mxu0 %v2197
        %v2498 = vpop.f32.mrb[0].mxu0
        %v2499 = vadd.f32 %v2270, %v2498
        %v2500 = vpop.f32.mrb[0].mxu0
        %v2501 = vpop.f32.mrb[0].mxu0
        %v2502 = vadd.f32 %v2270, %v2501
        %v2503 = vpop.f32.mrb[0].mxu0
        %2504 = vdwg.mxu0
        %2505 = vmatprep.subr.bf16.mxu0 0
        %2506 = vmatpush1.bf16.msra.mxu0 %v2416
        %2507 = vmatprep.subr.bf16.mxu0 0
        %2508 = vmatpush1.bf16.msra.mxu0 %v2417
        %2509 = vmatprep.subr.bf16.mxu0 0
        %2510 = vmatpush1.bf16.msra.mxu0 %v2418
        %2511 = vmatprep.subr.bf16.mxu0 0
        %2512 = vmatpush1.bf16.msra.mxu0 %v2419
        %2513 = vmatprep.subr.bf16.mxu0 0
        %2514 = vmatpush1.bf16.msra.mxu0 %v2420
        %2515 = vmatprep.subr.bf16.mxu0 0
        %2516 = vmatpush1.bf16.msra.mxu0 %v2421
        %2517 = vmatprep.subr.bf16.mxu0 0
        %2518 = vmatpush1.bf16.msra.mxu0 %v2422
        %2519 = vmatprep.subr.bf16.mxu0 0
        %2520 = vmatpush1.bf16.msra.mxu0 %v2423
        %2521 = vmatprep.subr.bf16.mxu0 0
        %2522 = vmatpush1.bf16.msra.mxu0 %v2424
        %2523 = vmatprep.subr.bf16.mxu0 0
        %2524 = vmatpush1.bf16.msra.mxu0 %v2425
        %2525 = vmatprep.subr.bf16.mxu0 0
        %2526 = vmatpush1.bf16.msra.mxu0 %v2426
        %2527 = vmatprep.subr.bf16.mxu0 0
        %2528 = vmatpush1.bf16.msra.mxu0 %v2427
        %2529 = vmatprep.subr.bf16.mxu0 0
        %2530 = vmatpush1.bf16.msra.mxu0 %v2428
        %2531 = vmatprep.subr.bf16.mxu0 0
        %2532 = vmatpush1.bf16.msra.mxu0 %v2429
        %2533 = vmatprep.subr.bf16.mxu0 0
        %2534 = vmatpush1.bf16.msra.mxu0 %v2430
        %2535 = vmatprep.subr.bf16.mxu0 0
        %2536 = vmatpush1.bf16.msra.mxu0 %v2431
        %2537 = vmatprep.mubr.bf16.mxu0 %v2200
        %2538 = vmatmul.mubr.bf16.gmra.mrb[0].mxu0 %v2199
        %v2539 = vpop.f32.mrb[0].mxu0
        %v2540 = vadd.f32 %v2499, %v2539
        %v2541 = vpop.f32.mrb[0].mxu0
        %v2542 = vpop.f32.mrb[0].mxu0
        %v2543 = vadd.f32 %v2502, %v2542
        %v2544 = vpop.f32.mrb[0].mxu0
        %2545 = vdwg.mxu0
        %v2546 = vmul.f32 %v2540, 0.5
        %v2547 = vmul.f32 %v2543, 0.5
        %v2548 = vadd.f32 %v1777, %v2546
        %v2549 = vadd.f32 %v1778, %v2547
        %2550 = vadd.xlane.f32.xlu0 %v2548
        %v2551 = vpop.xlane.xlu0 %2550
        %2552 = vadd.xlane.f32.xlu0 %v2549
        %v2553 = vpop.xlane.xlu0 %2552
        %v2554 = vmul.f32 %v2551, %v1803
        %v2555 = vmul.f32 %v2553, %v1803
        %v2556 = vsub.f32 %v2548, %v2554
        %v2557 = vsub.f32 %v2549, %v2555
        %v2558 = vmul.f32 %v2556, %v2556
        %v2559 = vmul.f32 %v2557, %v2557
        %2560 = vadd.xlane.f32.xlu0 %v2558
        %v2561 = vpop.xlane.xlu0 %2560
        %2562 = vadd.xlane.f32.xlu0 %v2559
        %v2563 = vpop.xlane.xlu0 %2562
        %v2564 = vmul.f32 %v2561, %v1803
        %v2565 = vmul.f32 %v2563, %v1803
        %v2566 = vadd.f32 %v2564, 1e-05
        %v2567 = vadd.f32 %v2565, 1e-05
        %v2568 = vrsqrt.pop %v2566
        %v2569 = vrsqrt.pop %v2567
        %v2570 = vmul.f32 %v2556, %v2568
        %v2571 = vmul.f32 %v2557, %v2569
        %v2572 = vld [vmem:[%s1405] sm:$0x1]
        %v2574 = vlaneseq
        %v2575 = vshrl.u32 %v2574, 7
        %v2576 = vsub.s32 0, %v2575
        %v2577 = vrot.slane %v2572, %v2576
        %v2579 = vmul.f32 %v2570, %v2577
        %v2580 = vmul.f32 %v2571, %v2577
        %v2581 = vld [vmem:[%s1726] sm:$0x1]
        %v2583 = vlaneseq
        %v2584 = vshrl.u32 %v2583, 7
        %v2585 = vsub.s32 0, %v2584
        %v2586 = vrot.slane %v2581, %v2585
        %v2588 = vadd.f32 %v2579, %v2586
        %v2589 = vadd.f32 %v2580, %v2586
        %v2590 = vpack.c.bf16 %v2589, %v2588
        %v2591 = vld [vmem:[%s1731] sm:$0xff]
        %v2592 = vld [vmem:[%s1731 + $0x8] sm:$0xf]
        %v2593 = vld [vmem:[%s1731 + $0xc] sm:$0xff]
        %v2594 = vld [vmem:[%s1731 + $0x14] sm:$0xf]
        %v2595 = vld [vmem:[%s1731 + $0x18] sm:$0xff]
        %v2596 = vld [vmem:[%s1731 + $0x20] sm:$0xf]
        %v2597 = vld [vmem:[%s1731 + $0x24] sm:$0xff]
        %v2598 = vld [vmem:[%s1731 + $0x2c] sm:$0xf]
        %v2599 = vld [vmem:[%s1731 + $0x30] sm:$0xff]
        %v2600 = vld [vmem:[%s1731 + $0x38] sm:$0xf]
        %v2601 = vld [vmem:[%s1731 + $0x3c] sm:$0xff]
        %v2602 = vld [vmem:[%s1731 + $0x44] sm:$0xf]
        %v2603 = vld [vmem:[%s1731 + $0x48] sm:$0xff]
        %v2604 = vld [vmem:[%s1731 + $0x50] sm:$0xf]
        %v2605 = vld [vmem:[%s1731 + $0x54] sm:$0xff]
        %v2606 = vld [vmem:[%s1731 + $0x5c] sm:$0xf]
        %v2607 = vld [vmem:[%s1731 + $0x60] sm:$0xff]
        %v2608 = vld [vmem:[%s1731 + $0x68] sm:$0xf]
        %v2609 = vld [vmem:[%s1731 + $0x6c] sm:$0xff]
        %v2610 = vld [vmem:[%s1731 + $0x74] sm:$0xf]
        %v2611 = vld [vmem:[%s1731 + $0x78] sm:$0xff]
        %v2612 = vld [vmem:[%s1731 + $0x80] sm:$0xf]
        %v2613 = vld [vmem:[%s1731 + $0x84] sm:$0xff]
        %v2614 = vld [vmem:[%s1731 + $0x8c] sm:$0xf]
        %v2615 = vld [vmem:[%s1731 + $0x90] sm:$0xff]
        %v2616 = vld [vmem:[%s1731 + $0x98] sm:$0xf]
        %v2617 = vld [vmem:[%s1731 + $0x9c] sm:$0xff]
        %v2618 = vld [vmem:[%s1731 + $0xa4] sm:$0xf]
        %v2619 = vld [vmem:[%s1731 + $0xa8] sm:$0xff]
        %v2620 = vld [vmem:[%s1731 + $0xb0] sm:$0xf]
        %v2621 = vld [vmem:[%s1731 + $0xb4] sm:$0xff]
        %v2622 = vld [vmem:[%s1731 + $0xbc] sm:$0xf]
        %v2623 = vld [vmem:[%s1414] sm:$0x7]
        %v2625 = vlaneseq
        %v2626 = vshrl.u32 %v2625, 7
        %v2627 = vsub.s32 0, %v2626
        %v2628 = vrot.slane %v2623, %v2627
        %v2629 = vlaneseq
        %v2630 = vshrl.u32 %v2629, 7
        %v2631 = vsub.s32 1, %v2630
        %v2632 = vrot.slane %v2623, %v2631
        %v2633 = vlaneseq
        %v2634 = vshrl.u32 %v2633, 7
        %v2635 = vsub.s32 2, %v2634
        %v2636 = vrot.slane %v2623, %v2635
        %v2672 = vunpack.c.l.b16 %v2591
        %v2673 = vunpack.c.h.b16 %v2591
        %v2674 = vunpack.c.l.b16 %v2592
        %v2675 = vunpack.c.l.b16 %v2593
        %v2676 = vunpack.c.h.b16 %v2593
        %v2677 = vunpack.c.l.b16 %v2594
        %v2678 = vunpack.c.l.b16 %v2595
        %v2679 = vunpack.c.h.b16 %v2595
        %v2680 = vunpack.c.l.b16 %v2596
        %v2681 = vunpack.c.l.b16 %v2597
        %v2682 = vunpack.c.h.b16 %v2597
        %v2683 = vunpack.c.l.b16 %v2598
        %v2684 = vunpack.c.l.b16 %v2599
        %v2685 = vunpack.c.h.b16 %v2599
        %v2686 = vunpack.c.l.b16 %v2600
        %v2687 = vunpack.c.l.b16 %v2601
        %v2688 = vunpack.c.h.b16 %v2601
        %v2689 = vunpack.c.l.b16 %v2602
        %v2690 = vunpack.c.l.b16 %v2603
        %v2691 = vunpack.c.h.b16 %v2603
        %v2692 = vunpack.c.l.b16 %v2604
        %v2693 = vunpack.c.l.b16 %v2605
        %v2694 = vunpack.c.h.b16 %v2605
        %v2695 = vunpack.c.l.b16 %v2606
        %v2696 = vunpack.c.l.b16 %v2607
        %v2697 = vunpack.c.h.b16 %v2607
        %v2698 = vunpack.c.l.b16 %v2608
        %v2699 = vunpack.c.l.b16 %v2609
        %v2700 = vunpack.c.h.b16 %v2609
        %v2701 = vunpack.c.l.b16 %v2610
        %v2702 = vunpack.c.l.b16 %v2611
        %v2703 = vunpack.c.h.b16 %v2611
        %v2704 = vunpack.c.l.b16 %v2612
        %v2705 = vunpack.c.l.b16 %v2613
        %v2706 = vunpack.c.h.b16 %v2613
        %v2707 = vunpack.c.l.b16 %v2614
        %v2708 = vunpack.c.l.b16 %v2615
        %v2709 = vunpack.c.h.b16 %v2615
        %v2710 = vunpack.c.l.b16 %v2616
        %v2711 = vunpack.c.l.b16 %v2617
        %v2712 = vunpack.c.h.b16 %v2617
        %v2713 = vunpack.c.l.b16 %v2618
        %v2714 = vunpack.c.l.b16 %v2619
        %v2715 = vunpack.c.h.b16 %v2619
        %v2716 = vunpack.c.l.b16 %v2620
        %v2717 = vunpack.c.l.b16 %v2621
        %v2718 = vunpack.c.h.b16 %v2621
        %v2719 = vunpack.c.l.b16 %v2622
        %v2720 = vpack.c.b16 %v2675, %v2672
        %v2721 = vpack.c.b16 %v2676, %v2673
        %v2722 = vpack.c.b16 %v2677, %v2674
        %v2723 = vpack.c.b16 %v2681, %v2678
        %v2724 = vpack.c.b16 %v2682, %v2679
        %v2725 = vpack.c.b16 %v2683, %v2680
        %v2726 = vpack.c.b16 %v2687, %v2684
        %v2727 = vpack.c.b16 %v2688, %v2685
        %v2728 = vpack.c.b16 %v2689, %v2686
        %v2729 = vpack.c.b16 %v2693, %v2690
        %v2730 = vpack.c.b16 %v2694, %v2691
        %v2731 = vpack.c.b16 %v2695, %v2692
        %v2732 = vpack.c.b16 %v2699, %v2696
        %v2733 = vpack.c.b16 %v2700, %v2697
        %v2734 = vpack.c.b16 %v2701, %v2698
        %v2735 = vpack.c.b16 %v2705, %v2702
        %v2736 = vpack.c.b16 %v2706, %v2703
        %v2737 = vpack.c.b16 %v2707, %v2704
        %v2738 = vpack.c.b16 %v2711, %v2708
        %v2739 = vpack.c.b16 %v2712, %v2709
        %v2740 = vpack.c.b16 %v2713, %v2710
        %v2741 = vpack.c.b16 %v2717, %v2714
        %v2742 = vpack.c.b16 %v2718, %v2715
        %v2743 = vpack.c.b16 %v2719, %v2716
        %2768 = vmatprep.subr.bf16.mxu0 %v2721
        %2769 = vmatpush1.bf16.msra.mxu0 %v2720
        %2770 = vmatprep.subr.bf16.mxu0 %v2724
        %2771 = vmatpush1.bf16.msra.mxu0 %v2723
        %2772 = vmatprep.subr.bf16.mxu0 %v2727
        %2773 = vmatpush1.bf16.msra.mxu0 %v2726
        %2774 = vmatprep.subr.bf16.mxu0 %v2730
        %2775 = vmatpush1.bf16.msra.mxu0 %v2729
        %2776 = vmatprep.subr.bf16.mxu0 %v2733
        %2777 = vmatpush1.bf16.msra.mxu0 %v2732
        %2778 = vmatprep.subr.bf16.mxu0 %v2736
        %2779 = vmatpush1.bf16.msra.mxu0 %v2735
        %2780 = vmatprep.subr.bf16.mxu0 %v2739
        %2781 = vmatpush1.bf16.msra.mxu0 %v2738
        %2782 = vmatprep.subr.bf16.mxu0 %v2742
        %2783 = vmatpush1.bf16.msra.mxu0 %v2741
        %2784 = vmatprep.subr.bf16.mxu0 0
        %2785 = vmatpush1.bf16.msra.mxu0 0
        %2786 = vmatprep.subr.bf16.mxu0 0
        %2787 = vmatpush1.bf16.msra.mxu0 0
        %2788 = vmatprep.subr.bf16.mxu0 0
        %2789 = vmatpush1.bf16.msra.mxu0 0
        %2790 = vmatprep.subr.bf16.mxu0 0
        %2791 = vmatpush1.bf16.msra.mxu0 0
        %2792 = vmatprep.subr.bf16.mxu0 0
        %2793 = vmatpush1.bf16.msra.mxu0 0
        %2794 = vmatprep.subr.bf16.mxu0 0
        %2795 = vmatpush1.bf16.msra.mxu0 0
        %2796 = vmatprep.subr.bf16.mxu0 0
        %2797 = vmatpush1.bf16.msra.mxu0 0
        %2798 = vmatprep.subr.bf16.mxu0 0
        %2799 = vmatpush1.bf16.msra.mxu0 0
        %2800 = vmatprep.mubr.bf16.mxu0 0
        %2801 = vmatmul.mubr.bf16.gmra.mrb[0].mxu0 %v2590
        %v2802 = vpop.f32.mrb[0].mxu0
        %v2803 = vadd.f32 %v2628, %v2802
        %v2804 = vpop.f32.mrb[0].mxu0
        %v2805 = vadd.f32 %v2632, %v2804
        %v2806 = vpop.f32.mrb[0].mxu0
        %v2807 = vadd.f32 %v2628, %v2806
        %v2808 = vpop.f32.mrb[0].mxu0
        %v2809 = vadd.f32 %v2632, %v2808
        %2810 = vdwg.mxu0
        %2811 = vmatprep.subr.bf16.mxu0 0
        %2812 = vmatpush1.bf16.msra.mxu0 %v2722
        %2813 = vmatprep.subr.bf16.mxu0 0
        %2814 = vmatpush1.bf16.msra.mxu0 %v2725
        %2815 = vmatprep.subr.bf16.mxu0 0
        %2816 = vmatpush1.bf16.msra.mxu0 %v2728
        %2817 = vmatprep.subr.bf16.mxu0 0
        %2818 = vmatpush1.bf16.msra.mxu0 %v2731
        %2819 = vmatprep.subr.bf16.mxu0 0
        %2820 = vmatpush1.bf16.msra.mxu0 %v2734
        %2821 = vmatprep.subr.bf16.mxu0 0
        %2822 = vmatpush1.bf16.msra.mxu0 %v2737
        %2823 = vmatprep.subr.bf16.mxu0 0
        %2824 = vmatpush1.bf16.msra.mxu0 %v2740
        %2825 = vmatprep.subr.bf16.mxu0 0
        %2826 = vmatpush1.bf16.msra.mxu0 %v2743
        %2827 = vmatprep.subr.bf16.mxu0 0
        %2828 = vmatpush1.bf16.msra.mxu0 0
        %2829 = vmatprep.subr.bf16.mxu0 0
        %2830 = vmatpush1.bf16.msra.mxu0 0
        %2831 = vmatprep.subr.bf16.mxu0 0
        %2832 = vmatpush1.bf16.msra.mxu0 0
        %2833 = vmatprep.subr.bf16.mxu0 0
        %2834 = vmatpush1.bf16.msra.mxu0 0
        %2835 = vmatprep.subr.bf16.mxu0 0
        %2836 = vmatpush1.bf16.msra.mxu0 0
        %2837 = vmatprep.subr.bf16.mxu0 0
        %2838 = vmatpush1.bf16.msra.mxu0 0
        %2839 = vmatprep.subr.bf16.mxu0 0
        %2840 = vmatpush1.bf16.msra.mxu0 0
        %2841 = vmatprep.subr.bf16.mxu0 0
        %2842 = vmatpush1.bf16.msra.mxu0 0
        %2843 = vmatprep.mubr.bf16.mxu0 0
        %2844 = vmatmul.mubr.bf16.gmra.mrb[0].mxu0 %v2590
        %v2845 = vpop.f32.mrb[0].mxu0
        %v2846 = vadd.f32 %v2636, %v2845
        %v2847 = vpop.f32.mrb[0].mxu0
        %v2848 = vpop.f32.mrb[0].mxu0
        %v2849 = vadd.f32 %v2636, %v2848
        %v2850 = vpop.f32.mrb[0].mxu0
        %2851 = vdwg.mxu0
        %v2852 = vpack.c.bf16 %v2803, %v2803
        %v2853 = vpack.c.bf16 %v2807, %v2807
        %v2854 = vpack.c.bf16 %v2805, %v2805
        %v2855 = vpack.c.bf16 %v2809, %v2809
        %vm2856 = vcmask 261120
        %v2858 = vsel %vm2856, %v2852, 0
        %v2861 = vsel %vm2856, %v2854, 0
        %2863 = vmatprep.subr.bf16.mxu0 0
        %2864 = vmatpush1.bf16.xpose.msra.mxu0 %v2861
        %2865 = vmatprep.subr.bf16.mxu0 0
        %2866 = vmatpush1.bf16.xpose.msra.mxu0 0
        %2867 = vmatprep.subr.bf16.mxu0 0
        %2868 = vmatpush1.bf16.xpose.msra.mxu0 0
        %2869 = vmatprep.subr.bf16.mxu0 0
        %2870 = vmatpush1.bf16.xpose.msra.mxu0 0
        %2871 = vmatprep.subr.bf16.mxu0 0
        %2872 = vmatpush1.bf16.xpose.msra.mxu0 0
        %2873 = vmatprep.subr.bf16.mxu0 0
        %2874 = vmatpush1.bf16.xpose.msra.mxu0 0
        %2875 = vmatprep.subr.bf16.mxu0 0
        %2876 = vmatpush1.bf16.xpose.msra.mxu0 0
        %2877 = vmatprep.subr.bf16.mxu0 0
        %2878 = vmatpush1.bf16.xpose.msra.mxu0 0
        %2879 = vmatprep.subr.bf16.mxu0 0
        %2880 = vmatpush1.bf16.xpose.msra.mxu0 0
        %2881 = vmatprep.subr.bf16.mxu0 0
        %2882 = vmatpush1.bf16.xpose.msra.mxu0 0
        %2883 = vmatprep.subr.bf16.mxu0 0
        %2884 = vmatpush1.bf16.xpose.msra.mxu0 0
        %2885 = vmatprep.subr.bf16.mxu0 0
        %2886 = vmatpush1.bf16.xpose.msra.mxu0 0
        %2887 = vmatprep.subr.bf16.mxu0 0
        %2888 = vmatpush1.bf16.xpose.msra.mxu0 0
        %2889 = vmatprep.subr.bf16.mxu0 0
        %2890 = vmatpush1.bf16.xpose.msra.mxu0 0
        %2891 = vmatprep.subr.bf16.mxu0 0
        %2892 = vmatpush1.bf16.xpose.msra.mxu0 0
        %2893 = vmatprep.subr.bf16.mxu0 0
        %2894 = vmatpush1.bf16.xpose.msra.mxu0 0
        %2895 = vmatprep.mubr.bf16.mxu0 0
        %2896 = vmatmul.mubr.bf16.gmra.mrb[0].mxu0 %v2858
        %v2897 = vpop.f32.mrb[0].mxu0
        %v2898 = vadd.f32 %v1787, %v2897
        %v2899 = vpop.f32.mrb[0].mxu0
        %v2900 = vpop.f32.mrb[0].mxu0
        %v2901 = vpop.f32.mrb[0].mxu0
        %2902 = vdwg.mxu0
        %v2904 = vsel %vm2856, %v2853, 0
        %v2907 = vsel %vm2856, %v2855, 0
        %2909 = vmatprep.subr.bf16.mxu0 0
        %2910 = vmatpush1.bf16.xpose.msra.mxu0 %v2907
        %2911 = vmatprep.subr.bf16.mxu0 0
        %2912 = vmatpush1.bf16.xpose.msra.mxu0 0
        %2913 = vmatprep.subr.bf16.mxu0 0
        %2914 = vmatpush1.bf16.xpose.msra.mxu0 0
        %2915 = vmatprep.subr.bf16.mxu0 0
        %2916 = vmatpush1.bf16.xpose.msra.mxu0 0
        %2917 = vmatprep.subr.bf16.mxu0 0
        %2918 = vmatpush1.bf16.xpose.msra.mxu0 0
        %2919 = vmatprep.subr.bf16.mxu0 0
        %2920 = vmatpush1.bf16.xpose.msra.mxu0 0
        %2921 = vmatprep.subr.bf16.mxu0 0
        %2922 = vmatpush1.bf16.xpose.msra.mxu0 0
        %2923 = vmatprep.subr.bf16.mxu0 0
        %2924 = vmatpush1.bf16.xpose.msra.mxu0 0
        %2925 = vmatprep.subr.bf16.mxu0 0
        %2926 = vmatpush1.bf16.xpose.msra.mxu0 0
        %2927 = vmatprep.subr.bf16.mxu0 0
        %2928 = vmatpush1.bf16.xpose.msra.mxu0 0
        %2929 = vmatprep.subr.bf16.mxu0 0
        %2930 = vmatpush1.bf16.xpose.msra.mxu0 0
        %2931 = vmatprep.subr.bf16.mxu0 0
        %2932 = vmatpush1.bf16.xpose.msra.mxu0 0
        %2933 = vmatprep.subr.bf16.mxu0 0
        %2934 = vmatpush1.bf16.xpose.msra.mxu0 0
        %2935 = vmatprep.subr.bf16.mxu0 0
        %2936 = vmatpush1.bf16.xpose.msra.mxu0 0
        %2937 = vmatprep.subr.bf16.mxu0 0
        %2938 = vmatpush1.bf16.xpose.msra.mxu0 0
        %2939 = vmatprep.subr.bf16.mxu0 0
        %2940 = vmatpush1.bf16.xpose.msra.mxu0 0
        %2941 = vmatprep.mubr.bf16.mxu0 0
        %2942 = vmatmul.mubr.bf16.gmra.mrb[0].mxu0 %v2904
        %v2943 = vpop.f32.mrb[0].mxu0
        %v2944 = vadd.f32 %v1795, %v2943
        %v2945 = vpop.f32.mrb[0].mxu0
        %v2946 = vpop.f32.mrb[0].mxu0
        %v2947 = vpop.f32.mrb[0].mxu0
        %2948 = vdwg.mxu0
        %vm2949 = vcmask 64512
        %v2950 = vsel %vm2949, %v2898, -inf
        %2951 = vmax.xlane.f32.xlu0 %v2950
        %v2952 = vpop.xlane.xlu0 %2951
        %v2953 = vsel %vm2949, %v2944, -inf
        %2954 = vmax.xlane.f32.xlu0 %v2953
        %v2955 = vpop.xlane.xlu0 %2954
        %v2956 = vsub.f32 %v2898, %v2952
        %v2957 = vsub.f32 %v2944, %v2955
        %v2958 = vmul.f32 %v2956, 1.442695
        %v2959 = vpow.pop %v2958
        %v2960 = vmul.f32 %v2957, 1.442695
        %v2961 = vpow.pop %v2960
        %v2962 = vsel %vm2949, %v2959, 0.0
        %2963 = vadd.xlane.f32.xlu0 %v2962
        %v2964 = vpop.xlane.xlu0 %2963
        %v2965 = vsel %vm2949, %v2961, 0.0
        %2966 = vadd.xlane.f32.xlu0 %v2965
        %v2967 = vpop.xlane.xlu0 %2966
        %v2968 = vrcp.pop %v2964
        %v2969 = vmul.f32 %v2959, %v2968
        %v2970 = vrcp.pop %v2967
        %v2971 = vmul.f32 %v2961, %v2970
        %v2972 = vpack.c.bf16 %v2969, %v2969
        %v2973 = vpack.c.bf16 %v2971, %v2971
        %v2974 = vpack.c.bf16 %v2846, %v2846
        %v2975 = vpack.c.bf16 %v2849, %v2849
        %v2977 = vsel %vm2949, %v2972, 0
        %vm2979 = vcmask 1043456
        %v2981 = vsel %vm2979, %v2974, 0
        %2983 = vmatprep.subr.bf16.mxu0 0
        %2984 = vmatpush1.bf16.msra.mxu0 %v2981
        %2985 = vmatprep.subr.bf16.mxu0 0
        %2986 = vmatpush1.bf16.msra.mxu0 0
        %2987 = vmatprep.subr.bf16.mxu0 0
        %2988 = vmatpush1.bf16.msra.mxu0 0
        %2989 = vmatprep.subr.bf16.mxu0 0
        %2990 = vmatpush1.bf16.msra.mxu0 0
        %2991 = vmatprep.subr.bf16.mxu0 0
        %2992 = vmatpush1.bf16.msra.mxu0 0
        %2993 = vmatprep.subr.bf16.mxu0 0
        %2994 = vmatpush1.bf16.msra.mxu0 0
        %2995 = vmatprep.subr.bf16.mxu0 0
        %2996 = vmatpush1.bf16.msra.mxu0 0
        %2997 = vmatprep.subr.bf16.mxu0 0
        %2998 = vmatpush1.bf16.msra.mxu0 0
        %2999 = vmatprep.subr.bf16.mxu0 0
        %3000 = vmatpush1.bf16.msra.mxu0 0
        %3001 = vmatprep.subr.bf16.mxu0 0
        %3002 = vmatpush1.bf16.msra.mxu0 0
        %3003 = vmatprep.subr.bf16.mxu0 0
        %3004 = vmatpush1.bf16.msra.mxu0 0
        %3005 = vmatprep.subr.bf16.mxu0 0
        %3006 = vmatpush1.bf16.msra.mxu0 0
        %3007 = vmatprep.subr.bf16.mxu0 0
        %3008 = vmatpush1.bf16.msra.mxu0 0
        %3009 = vmatprep.subr.bf16.mxu0 0
        %3010 = vmatpush1.bf16.msra.mxu0 0
        %3011 = vmatprep.subr.bf16.mxu0 0
        %3012 = vmatpush1.bf16.msra.mxu0 0
        %3013 = vmatprep.subr.bf16.mxu0 0
        %3014 = vmatpush1.bf16.msra.mxu0 0
        %3015 = vmatprep.mubr.bf16.mxu0 0
        %3016 = vmatmul.mubr.bf16.gmra.mrb[0].mxu0 %v2977
        %v3017 = vpop.f32.mrb[0].mxu0
        %v3018 = vadd.f32 0.0, %v3017
        %v3019 = vpop.f32.mrb[0].mxu0
        %v3020 = vpop.f32.mrb[0].mxu0
        %v3021 = vpop.f32.mrb[0].mxu0
        %3022 = vdwg.mxu0
        %v3024 = vsel %vm2949, %v2973, 0
        %v3027 = vsel %vm2979, %v2975, 0
        %3029 = vmatprep.subr.bf16.mxu0 0
        %3030 = vmatpush1.bf16.msra.mxu0 %v3027
        %3031 = vmatprep.subr.bf16.mxu0 0
        %3032 = vmatpush1.bf16.msra.mxu0 0
        %3033 = vmatprep.subr.bf16.mxu0 0
        %3034 = vmatpush1.bf16.msra.mxu0 0
        %3035 = vmatprep.subr.bf16.mxu0 0
        %3036 = vmatpush1.bf16.msra.mxu0 0
        %3037 = vmatprep.subr.bf16.mxu0 0
        %3038 = vmatpush1.bf16.msra.mxu0 0
        %3039 = vmatprep.subr.bf16.mxu0 0
        %3040 = vmatpush1.bf16.msra.mxu0 0
        %3041 = vmatprep.subr.bf16.mxu0 0
        %3042 = vmatpush1.bf16.msra.mxu0 0
        %3043 = vmatprep.subr.bf16.mxu0 0
        %3044 = vmatpush1.bf16.msra.mxu0 0
        %3045 = vmatprep.subr.bf16.mxu0 0
        %3046 = vmatpush1.bf16.msra.mxu0 0
        %3047 = vmatprep.subr.bf16.mxu0 0
        %3048 = vmatpush1.bf16.msra.mxu0 0
        %3049 = vmatprep.subr.bf16.mxu0 0
        %3050 = vmatpush1.bf16.msra.mxu0 0
        %3051 = vmatprep.subr.bf16.mxu0 0
        %3052 = vmatpush1.bf16.msra.mxu0 0
        %3053 = vmatprep.subr.bf16.mxu0 0
        %3054 = vmatpush1.bf16.msra.mxu0 0
        %3055 = vmatprep.subr.bf16.mxu0 0
        %3056 = vmatpush1.bf16.msra.mxu0 0
        %3057 = vmatprep.subr.bf16.mxu0 0
        %3058 = vmatpush1.bf16.msra.mxu0 0
        %3059 = vmatprep.subr.bf16.mxu0 0
        %3060 = vmatpush1.bf16.msra.mxu0 0
        %3061 = vmatprep.mubr.bf16.mxu0 0
        %3062 = vmatmul.mubr.bf16.gmra.mrb[0].mxu0 %v3024
        %v3063 = vpop.f32.mrb[0].mxu0
        %v3064 = vadd.f32 0.0, %v3063
        %v3065 = vpop.f32.mrb[0].mxu0
        %v3066 = vpop.f32.mrb[0].mxu0
        %v3067 = vpop.f32.mrb[0].mxu0
        %3068 = vdwg.mxu0
        %3070 = vrot.lane.b32.xlu0 %v2852, 96
        %v3071 = vpop.permute.xlu0 %3070
        %3073 = vrot.lane.b32.xlu0 %v2854, 96
        %v3074 = vpop.permute.xlu0 %3073
        %v3076 = vsel %vm2856, %v3071, 0
        %v3079 = vsel %vm2856, %v3074, 0
        %3081 = vmatprep.subr.bf16.mxu0 0
        %3082 = vmatpush1.bf16.xpose.msra.mxu0 %v3079
        %3083 = vmatprep.subr.bf16.mxu0 0
        %3084 = vmatpush1.bf16.xpose.msra.mxu0 0
        %3085 = vmatprep.subr.bf16.mxu0 0
        %3086 = vmatpush1.bf16.xpose.msra.mxu0 0
        %3087 = vmatprep.subr.bf16.mxu0 0
        %3088 = vmatpush1.bf16.xpose.msra.mxu0 0
        %3089 = vmatprep.subr.bf16.mxu0 0
        %3090 = vmatpush1.bf16.xpose.msra.mxu0 0
        %3091 = vmatprep.subr.bf16.mxu0 0
        %3092 = vmatpush1.bf16.xpose.msra.mxu0 0
        %3093 = vmatprep.subr.bf16.mxu0 0
        %3094 = vmatpush1.bf16.xpose.msra.mxu0 0
        %3095 = vmatprep.subr.bf16.mxu0 0
        %3096 = vmatpush1.bf16.xpose.msra.mxu0 0
        %3097 = vmatprep.subr.bf16.mxu0 0
        %3098 = vmatpush1.bf16.xpose.msra.mxu0 0
        %3099 = vmatprep.subr.bf16.mxu0 0
        %3100 = vmatpush1.bf16.xpose.msra.mxu0 0
        %3101 = vmatprep.subr.bf16.mxu0 0
        %3102 = vmatpush1.bf16.xpose.msra.mxu0 0
        %3103 = vmatprep.subr.bf16.mxu0 0
        %3104 = vmatpush1.bf16.xpose.msra.mxu0 0
        %3105 = vmatprep.subr.bf16.mxu0 0
        %3106 = vmatpush1.bf16.xpose.msra.mxu0 0
        %3107 = vmatprep.subr.bf16.mxu0 0
        %3108 = vmatpush1.bf16.xpose.msra.mxu0 0
        %3109 = vmatprep.subr.bf16.mxu0 0
        %3110 = vmatpush1.bf16.xpose.msra.mxu0 0
        %3111 = vmatprep.subr.bf16.mxu0 0
        %3112 = vmatpush1.bf16.xpose.msra.mxu0 0
        %3113 = vmatprep.mubr.bf16.mxu0 0
        %3114 = vmatmul.mubr.bf16.gmra.mrb[0].mxu0 %v3076
        %v3115 = vpop.f32.mrb[0].mxu0
        %v3116 = vadd.f32 %v1787, %v3115
        %v3117 = vpop.f32.mrb[0].mxu0
        %v3118 = vpop.f32.mrb[0].mxu0
        %v3119 = vpop.f32.mrb[0].mxu0
        %3120 = vdwg.mxu0
        %3122 = vrot.lane.b32.xlu0 %v2853, 96
        %v3123 = vpop.permute.xlu0 %3122
        %3125 = vrot.lane.b32.xlu0 %v2855, 96
        %v3126 = vpop.permute.xlu0 %3125
        %v3128 = vsel %vm2856, %v3123, 0
        %v3131 = vsel %vm2856, %v3126, 0
        %3133 = vmatprep.subr.bf16.mxu0 0
        %3134 = vmatpush1.bf16.xpose.msra.mxu0 %v3131
        %3135 = vmatprep.subr.bf16.mxu0 0
        %3136 = vmatpush1.bf16.xpose.msra.mxu0 0
        %3137 = vmatprep.subr.bf16.mxu0 0
        %3138 = vmatpush1.bf16.xpose.msra.mxu0 0
        %3139 = vmatprep.subr.bf16.mxu0 0
        %3140 = vmatpush1.bf16.xpose.msra.mxu0 0
        %3141 = vmatprep.subr.bf16.mxu0 0
        %3142 = vmatpush1.bf16.xpose.msra.mxu0 0
        %3143 = vmatprep.subr.bf16.mxu0 0
        %3144 = vmatpush1.bf16.xpose.msra.mxu0 0
        %3145 = vmatprep.subr.bf16.mxu0 0
        %3146 = vmatpush1.bf16.xpose.msra.mxu0 0
        %3147 = vmatprep.subr.bf16.mxu0 0
        %3148 = vmatpush1.bf16.xpose.msra.mxu0 0
        %3149 = vmatprep.subr.bf16.mxu0 0
        %3150 = vmatpush1.bf16.xpose.msra.mxu0 0
        %3151 = vmatprep.subr.bf16.mxu0 0
        %3152 = vmatpush1.bf16.xpose.msra.mxu0 0
        %3153 = vmatprep.subr.bf16.mxu0 0
        %3154 = vmatpush1.bf16.xpose.msra.mxu0 0
        %3155 = vmatprep.subr.bf16.mxu0 0
        %3156 = vmatpush1.bf16.xpose.msra.mxu0 0
        %3157 = vmatprep.subr.bf16.mxu0 0
        %3158 = vmatpush1.bf16.xpose.msra.mxu0 0
        %3159 = vmatprep.subr.bf16.mxu0 0
        %3160 = vmatpush1.bf16.xpose.msra.mxu0 0
        %3161 = vmatprep.subr.bf16.mxu0 0
        %3162 = vmatpush1.bf16.xpose.msra.mxu0 0
        %3163 = vmatprep.subr.bf16.mxu0 0
        %3164 = vmatpush1.bf16.xpose.msra.mxu0 0
        %3165 = vmatprep.mubr.bf16.mxu0 0
        %3166 = vmatmul.mubr.bf16.gmra.mrb[0].mxu0 %v3128
        %v3167 = vpop.f32.mrb[0].mxu0
        %v3168 = vadd.f32 %v1795, %v3167
        %v3169 = vpop.f32.mrb[0].mxu0
        %v3170 = vpop.f32.mrb[0].mxu0
        %v3171 = vpop.f32.mrb[0].mxu0
        %3172 = vdwg.mxu0
        %v3173 = vsel %vm2949, %v3116, -inf
        %3174 = vmax.xlane.f32.xlu0 %v3173
        %v3175 = vpop.xlane.xlu0 %3174
        %v3176 = vsel %vm2949, %v3168, -inf
        %3177 = vmax.xlane.f32.xlu0 %v3176
        %v3178 = vpop.xlane.xlu0 %3177
        %v3179 = vsub.f32 %v3116, %v3175
        %v3180 = vsub.f32 %v3168, %v3178
        %v3181 = vmul.f32 %v3179, 1.442695
        %v3182 = vpow.pop %v3181
        %v3183 = vmul.f32 %v3180, 1.442695
        %v3184 = vpow.pop %v3183
        %v3185 = vsel %vm2949, %v3182, 0.0
        %3186 = vadd.xlane.f32.xlu0 %v3185
        %v3187 = vpop.xlane.xlu0 %3186
        %v3188 = vsel %vm2949, %v3184, 0.0
        %3189 = vadd.xlane.f32.xlu0 %v3188
        %v3190 = vpop.xlane.xlu0 %3189
        %v3191 = vrcp.pop %v3187
        %v3192 = vmul.f32 %v3182, %v3191
        %v3193 = vrcp.pop %v3190
        %v3194 = vmul.f32 %v3184, %v3193
        %v3195 = vpack.c.bf16 %v3192, %v3192
        %v3196 = vpack.c.bf16 %v3194, %v3194
        %3198 = vrot.lane.b32.xlu0 %v2974, 96
        %v3199 = vpop.permute.xlu0 %3198
        %v3201 = vsel %vm2949, %v3195, 0
        %v3204 = vsel %vm2979, %v3199, 0
        %3206 = vmatprep.subr.bf16.mxu0 0
        %3207 = vmatpush1.bf16.msra.mxu0 %v3204
        %3208 = vmatprep.subr.bf16.mxu0 0
        %3209 = vmatpush1.bf16.msra.mxu0 0
        %3210 = vmatprep.subr.bf16.mxu0 0
        %3211 = vmatpush1.bf16.msra.mxu0 0
        %3212 = vmatprep.subr.bf16.mxu0 0
        %3213 = vmatpush1.bf16.msra.mxu0 0
        %3214 = vmatprep.subr.bf16.mxu0 0
        %3215 = vmatpush1.bf16.msra.mxu0 0
        %3216 = vmatprep.subr.bf16.mxu0 0
        %3217 = vmatpush1.bf16.msra.mxu0 0
        %3218 = vmatprep.subr.bf16.mxu0 0
        %3219 = vmatpush1.bf16.msra.mxu0 0
        %3220 = vmatprep.subr.bf16.mxu0 0
        %3221 = vmatpush1.bf16.msra.mxu0 0
        %3222 = vmatprep.subr.bf16.mxu0 0
        %3223 = vmatpush1.bf16.msra.mxu0 0
        %3224 = vmatprep.subr.bf16.mxu0 0
        %3225 = vmatpush1.bf16.msra.mxu0 0
        %3226 = vmatprep.subr.bf16.mxu0 0
        %3227 = vmatpush1.bf16.msra.mxu0 0
        %3228 = vmatprep.subr.bf16.mxu0 0
        %3229 = vmatpush1.bf16.msra.mxu0 0
        %3230 = vmatprep.subr.bf16.mxu0 0
        %3231 = vmatpush1.bf16.msra.mxu0 0
        %3232 = vmatprep.subr.bf16.mxu0 0
        %3233 = vmatpush1.bf16.msra.mxu0 0
        %3234 = vmatprep.subr.bf16.mxu0 0
        %3235 = vmatpush1.bf16.msra.mxu0 0
        %3236 = vmatprep.subr.bf16.mxu0 0
        %3237 = vmatpush1.bf16.msra.mxu0 0
        %3238 = vmatprep.mubr.bf16.mxu0 0
        %3239 = vmatmul.mubr.bf16.gmra.mrb[0].mxu0 %v3201
        %v3240 = vpop.f32.mrb[0].mxu0
        %v3241 = vadd.f32 0.0, %v3240
        %v3242 = vpop.f32.mrb[0].mxu0
        %v3243 = vpop.f32.mrb[0].mxu0
        %v3244 = vpop.f32.mrb[0].mxu0
        %3245 = vdwg.mxu0
        %3247 = vrot.lane.b32.xlu0 %v2975, 96
        %v3248 = vpop.permute.xlu0 %3247
        %v3250 = vsel %vm2949, %v3196, 0
        %v3253 = vsel %vm2979, %v3248, 0
        %3255 = vmatprep.subr.bf16.mxu0 0
        %3256 = vmatpush1.bf16.msra.mxu0 %v3253
        %3257 = vmatprep.subr.bf16.mxu0 0
        %3258 = vmatpush1.bf16.msra.mxu0 0
        %3259 = vmatprep.subr.bf16.mxu0 0
        %3260 = vmatpush1.bf16.msra.mxu0 0
        %3261 = vmatprep.subr.bf16.mxu0 0
        %3262 = vmatpush1.bf16.msra.mxu0 0
        %3263 = vmatprep.subr.bf16.mxu0 0
        %3264 = vmatpush1.bf16.msra.mxu0 0
        %3265 = vmatprep.subr.bf16.mxu0 0
        %3266 = vmatpush1.bf16.msra.mxu0 0
        %3267 = vmatprep.subr.bf16.mxu0 0
        %3268 = vmatpush1.bf16.msra.mxu0 0
        %3269 = vmatprep.subr.bf16.mxu0 0
        %3270 = vmatpush1.bf16.msra.mxu0 0
        %3271 = vmatprep.subr.bf16.mxu0 0
        %3272 = vmatpush1.bf16.msra.mxu0 0
        %3273 = vmatprep.subr.bf16.mxu0 0
        %3274 = vmatpush1.bf16.msra.mxu0 0
        %3275 = vmatprep.subr.bf16.mxu0 0
        %3276 = vmatpush1.bf16.msra.mxu0 0
        %3277 = vmatprep.subr.bf16.mxu0 0
        %3278 = vmatpush1.bf16.msra.mxu0 0
        %3279 = vmatprep.subr.bf16.mxu0 0
        %3280 = vmatpush1.bf16.msra.mxu0 0
        %3281 = vmatprep.subr.bf16.mxu0 0
        %3282 = vmatpush1.bf16.msra.mxu0 0
        %3283 = vmatprep.subr.bf16.mxu0 0
        %3284 = vmatpush1.bf16.msra.mxu0 0
        %3285 = vmatprep.subr.bf16.mxu0 0
        %3286 = vmatpush1.bf16.msra.mxu0 0
        %3287 = vmatprep.mubr.bf16.mxu0 0
        %3288 = vmatmul.mubr.bf16.gmra.mrb[0].mxu0 %v3250
        %v3289 = vpop.f32.mrb[0].mxu0
        %v3290 = vadd.f32 0.0, %v3289
        %v3291 = vpop.f32.mrb[0].mxu0
        %v3292 = vpop.f32.mrb[0].mxu0
        %v3293 = vpop.f32.mrb[0].mxu0
        %3294 = vdwg.mxu0
        %3295 = vrot.lane.b32.xlu0 %v2852, 64
        %v3296 = vpop.permute.xlu0 %3295
        %3297 = vrot.lane.b32.xlu0 %v2854, 64
        %v3298 = vpop.permute.xlu0 %3297
        %v3300 = vsel %vm2856, %v3296, 0
        %v3303 = vsel %vm2856, %v3298, 0
        %3305 = vmatprep.subr.bf16.mxu0 0
        %3306 = vmatpush1.bf16.xpose.msra.mxu0 %v3303
        %3307 = vmatprep.subr.bf16.mxu0 0
        %3308 = vmatpush1.bf16.xpose.msra.mxu0 0
        %3309 = vmatprep.subr.bf16.mxu0 0
        %3310 = vmatpush1.bf16.xpose.msra.mxu0 0
        %3311 = vmatprep.subr.bf16.mxu0 0
        %3312 = vmatpush1.bf16.xpose.msra.mxu0 0
        %3313 = vmatprep.subr.bf16.mxu0 0
        %3314 = vmatpush1.bf16.xpose.msra.mxu0 0
        %3315 = vmatprep.subr.bf16.mxu0 0
        %3316 = vmatpush1.bf16.xpose.msra.mxu0 0
        %3317 = vmatprep.subr.bf16.mxu0 0
        %3318 = vmatpush1.bf16.xpose.msra.mxu0 0
        %3319 = vmatprep.subr.bf16.mxu0 0
        %3320 = vmatpush1.bf16.xpose.msra.mxu0 0
        %3321 = vmatprep.subr.bf16.mxu0 0
        %3322 = vmatpush1.bf16.xpose.msra.mxu0 0
        %3323 = vmatprep.subr.bf16.mxu0 0
        %3324 = vmatpush1.bf16.xpose.msra.mxu0 0
        %3325 = vmatprep.subr.bf16.mxu0 0
        %3326 = vmatpush1.bf16.xpose.msra.mxu0 0
        %3327 = vmatprep.subr.bf16.mxu0 0
        %3328 = vmatpush1.bf16.xpose.msra.mxu0 0
        %3329 = vmatprep.subr.bf16.mxu0 0
        %3330 = vmatpush1.bf16.xpose.msra.mxu0 0
        %3331 = vmatprep.subr.bf16.mxu0 0
        %3332 = vmatpush1.bf16.xpose.msra.mxu0 0
        %3333 = vmatprep.subr.bf16.mxu0 0
        %3334 = vmatpush1.bf16.xpose.msra.mxu0 0
        %3335 = vmatprep.subr.bf16.mxu0 0
        %3336 = vmatpush1.bf16.xpose.msra.mxu0 0
        %3337 = vmatprep.mubr.bf16.mxu0 0
        %3338 = vmatmul.mubr.bf16.gmra.mrb[0].mxu0 %v3300
        %v3339 = vpop.f32.mrb[0].mxu0
        %v3340 = vadd.f32 %v1787, %v3339
        %v3341 = vpop.f32.mrb[0].mxu0
        %v3342 = vpop.f32.mrb[0].mxu0
        %v3343 = vpop.f32.mrb[0].mxu0
        %3344 = vdwg.mxu0
        %3345 = vrot.lane.b32.xlu0 %v2853, 64
        %v3346 = vpop.permute.xlu0 %3345
        %3347 = vrot.lane.b32.xlu0 %v2855, 64
        %v3348 = vpop.permute.xlu0 %3347
        %v3350 = vsel %vm2856, %v3346, 0
        %v3353 = vsel %vm2856, %v3348, 0
        %3355 = vmatprep.subr.bf16.mxu0 0
        %3356 = vmatpush1.bf16.xpose.msra.mxu0 %v3353
        %3357 = vmatprep.subr.bf16.mxu0 0
        %3358 = vmatpush1.bf16.xpose.msra.mxu0 0
        %3359 = vmatprep.subr.bf16.mxu0 0
        %3360 = vmatpush1.bf16.xpose.msra.mxu0 0
        %3361 = vmatprep.subr.bf16.mxu0 0
        %3362 = vmatpush1.bf16.xpose.msra.mxu0 0
        %3363 = vmatprep.subr.bf16.mxu0 0
        %3364 = vmatpush1.bf16.xpose.msra.mxu0 0
        %3365 = vmatprep.subr.bf16.mxu0 0
        %3366 = vmatpush1.bf16.xpose.msra.mxu0 0
        %3367 = vmatprep.subr.bf16.mxu0 0
        %3368 = vmatpush1.bf16.xpose.msra.mxu0 0
        %3369 = vmatprep.subr.bf16.mxu0 0
        %3370 = vmatpush1.bf16.xpose.msra.mxu0 0
        %3371 = vmatprep.subr.bf16.mxu0 0
        %3372 = vmatpush1.bf16.xpose.msra.mxu0 0
        %3373 = vmatprep.subr.bf16.mxu0 0
        %3374 = vmatpush1.bf16.xpose.msra.mxu0 0
        %3375 = vmatprep.subr.bf16.mxu0 0
        %3376 = vmatpush1.bf16.xpose.msra.mxu0 0
        %3377 = vmatprep.subr.bf16.mxu0 0
        %3378 = vmatpush1.bf16.xpose.msra.mxu0 0
        %3379 = vmatprep.subr.bf16.mxu0 0
        %3380 = vmatpush1.bf16.xpose.msra.mxu0 0
        %3381 = vmatprep.subr.bf16.mxu0 0
        %3382 = vmatpush1.bf16.xpose.msra.mxu0 0
        %3383 = vmatprep.subr.bf16.mxu0 0
        %3384 = vmatpush1.bf16.xpose.msra.mxu0 0
        %3385 = vmatprep.subr.bf16.mxu0 0
        %3386 = vmatpush1.bf16.xpose.msra.mxu0 0
        %3387 = vmatprep.mubr.bf16.mxu0 0
        %3388 = vmatmul.mubr.bf16.gmra.mrb[0].mxu0 %v3350
        %v3389 = vpop.f32.mrb[0].mxu0
        %v3390 = vadd.f32 %v1795, %v3389
        %v3391 = vpop.f32.mrb[0].mxu0
        %v3392 = vpop.f32.mrb[0].mxu0
        %v3393 = vpop.f32.mrb[0].mxu0
        %3394 = vdwg.mxu0
        %v3395 = vsel %vm2949, %v3340, -inf
        %3396 = vmax.xlane.f32.xlu0 %v3395
        %v3397 = vpop.xlane.xlu0 %3396
        %v3398 = vsel %vm2949, %v3390, -inf
        %3399 = vmax.xlane.f32.xlu0 %v3398
        %v3400 = vpop.xlane.xlu0 %3399
        %v3401 = vsub.f32 %v3340, %v3397
        %v3402 = vsub.f32 %v3390, %v3400
        %v3403 = vmul.f32 %v3401, 1.442695
        %v3404 = vpow.pop %v3403
        %v3405 = vmul.f32 %v3402, 1.442695
        %v3406 = vpow.pop %v3405
        %v3407 = vsel %vm2949, %v3404, 0.0
        %3408 = vadd.xlane.f32.xlu0 %v3407
        %v3409 = vpop.xlane.xlu0 %3408
        %v3410 = vsel %vm2949, %v3406, 0.0
        %3411 = vadd.xlane.f32.xlu0 %v3410
        %v3412 = vpop.xlane.xlu0 %3411
        %v3413 = vrcp.pop %v3409
        %v3414 = vmul.f32 %v3404, %v3413
        %v3415 = vrcp.pop %v3412
        %v3416 = vmul.f32 %v3406, %v3415
        %v3417 = vpack.c.bf16 %v3414, %v3414
        %v3418 = vpack.c.bf16 %v3416, %v3416
        %3419 = vrot.lane.b32.xlu0 %v2974, 64
        %v3420 = vpop.permute.xlu0 %3419
        %v3422 = vsel %vm2949, %v3417, 0
        %v3425 = vsel %vm2979, %v3420, 0
        %3427 = vmatprep.subr.bf16.mxu0 0
        %3428 = vmatpush1.bf16.msra.mxu0 %v3425
        %3429 = vmatprep.subr.bf16.mxu0 0
        %3430 = vmatpush1.bf16.msra.mxu0 0
        %3431 = vmatprep.subr.bf16.mxu0 0
        %3432 = vmatpush1.bf16.msra.mxu0 0
        %3433 = vmatprep.subr.bf16.mxu0 0
        %3434 = vmatpush1.bf16.msra.mxu0 0
        %3435 = vmatprep.subr.bf16.mxu0 0
        %3436 = vmatpush1.bf16.msra.mxu0 0
        %3437 = vmatprep.subr.bf16.mxu0 0
        %3438 = vmatpush1.bf16.msra.mxu0 0
        %3439 = vmatprep.subr.bf16.mxu0 0
        %3440 = vmatpush1.bf16.msra.mxu0 0
        %3441 = vmatprep.subr.bf16.mxu0 0
        %3442 = vmatpush1.bf16.msra.mxu0 0
        %3443 = vmatprep.subr.bf16.mxu0 0
        %3444 = vmatpush1.bf16.msra.mxu0 0
        %3445 = vmatprep.subr.bf16.mxu0 0
        %3446 = vmatpush1.bf16.msra.mxu0 0
        %3447 = vmatprep.subr.bf16.mxu0 0
        %3448 = vmatpush1.bf16.msra.mxu0 0
        %3449 = vmatprep.subr.bf16.mxu0 0
        %3450 = vmatpush1.bf16.msra.mxu0 0
        %3451 = vmatprep.subr.bf16.mxu0 0
        %3452 = vmatpush1.bf16.msra.mxu0 0
        %3453 = vmatprep.subr.bf16.mxu0 0
        %3454 = vmatpush1.bf16.msra.mxu0 0
        %3455 = vmatprep.subr.bf16.mxu0 0
        %3456 = vmatpush1.bf16.msra.mxu0 0
        %3457 = vmatprep.subr.bf16.mxu0 0
        %3458 = vmatpush1.bf16.msra.mxu0 0
        %3459 = vmatprep.mubr.bf16.mxu0 0
        %3460 = vmatmul.mubr.bf16.gmra.mrb[0].mxu0 %v3422
        %v3461 = vpop.f32.mrb[0].mxu0
        %v3462 = vadd.f32 0.0, %v3461
        %v3463 = vpop.f32.mrb[0].mxu0
        %v3464 = vpop.f32.mrb[0].mxu0
        %v3465 = vpop.f32.mrb[0].mxu0
        %3466 = vdwg.mxu0
        %3467 = vrot.lane.b32.xlu0 %v2975, 64
        %v3468 = vpop.permute.xlu0 %3467
        %v3470 = vsel %vm2949, %v3418, 0
        %v3473 = vsel %vm2979, %v3468, 0
        %3475 = vmatprep.subr.bf16.mxu0 0
        %3476 = vmatpush1.bf16.msra.mxu0 %v3473
        %3477 = vmatprep.subr.bf16.mxu0 0
        %3478 = vmatpush1.bf16.msra.mxu0 0
        %3479 = vmatprep.subr.bf16.mxu0 0
        %3480 = vmatpush1.bf16.msra.mxu0 0
        %3481 = vmatprep.subr.bf16.mxu0 0
        %3482 = vmatpush1.bf16.msra.mxu0 0
        %3483 = vmatprep.subr.bf16.mxu0 0
        %3484 = vmatpush1.bf16.msra.mxu0 0
        %3485 = vmatprep.subr.bf16.mxu0 0
        %3486 = vmatpush1.bf16.msra.mxu0 0
        %3487 = vmatprep.subr.bf16.mxu0 0
        %3488 = vmatpush1.bf16.msra.mxu0 0
        %3489 = vmatprep.subr.bf16.mxu0 0
        %3490 = vmatpush1.bf16.msra.mxu0 0
        %3491 = vmatprep.subr.bf16.mxu0 0
        %3492 = vmatpush1.bf16.msra.mxu0 0
        %3493 = vmatprep.subr.bf16.mxu0 0
        %3494 = vmatpush1.bf16.msra.mxu0 0
        %3495 = vmatprep.subr.bf16.mxu0 0
        %3496 = vmatpush1.bf16.msra.mxu0 0
        %3497 = vmatprep.subr.bf16.mxu0 0
        %3498 = vmatpush1.bf16.msra.mxu0 0
        %3499 = vmatprep.subr.bf16.mxu0 0
        %3500 = vmatpush1.bf16.msra.mxu0 0
        %3501 = vmatprep.subr.bf16.mxu0 0
        %3502 = vmatpush1.bf16.msra.mxu0 0
        %3503 = vmatprep.subr.bf16.mxu0 0
        %3504 = vmatpush1.bf16.msra.mxu0 0
        %3505 = vmatprep.subr.bf16.mxu0 0
        %3506 = vmatpush1.bf16.msra.mxu0 0
        %3507 = vmatprep.mubr.bf16.mxu0 0
        %3508 = vmatmul.mubr.bf16.gmra.mrb[0].mxu0 %v3470
        %v3509 = vpop.f32.mrb[0].mxu0
        %v3510 = vadd.f32 0.0, %v3509
        %v3511 = vpop.f32.mrb[0].mxu0
        %v3512 = vpop.f32.mrb[0].mxu0
        %v3513 = vpop.f32.mrb[0].mxu0
        %3514 = vdwg.mxu0
        %3515 = vrot.lane.b32.xlu0 %v2852, 32
        %v3516 = vpop.permute.xlu0 %3515
        %3517 = vrot.lane.b32.xlu0 %v2854, 32
        %v3518 = vpop.permute.xlu0 %3517
        %v3520 = vsel %vm2856, %v3516, 0
        %v3523 = vsel %vm2856, %v3518, 0
        %3525 = vmatprep.subr.bf16.mxu0 0
        %3526 = vmatpush1.bf16.xpose.msra.mxu0 %v3523
        %3527 = vmatprep.subr.bf16.mxu0 0
        %3528 = vmatpush1.bf16.xpose.msra.mxu0 0
        %3529 = vmatprep.subr.bf16.mxu0 0
        %3530 = vmatpush1.bf16.xpose.msra.mxu0 0
        %3531 = vmatprep.subr.bf16.mxu0 0
        %3532 = vmatpush1.bf16.xpose.msra.mxu0 0
        %3533 = vmatprep.subr.bf16.mxu0 0
        %3534 = vmatpush1.bf16.xpose.msra.mxu0 0
        %3535 = vmatprep.subr.bf16.mxu0 0
        %3536 = vmatpush1.bf16.xpose.msra.mxu0 0
        %3537 = vmatprep.subr.bf16.mxu0 0
        %3538 = vmatpush1.bf16.xpose.msra.mxu0 0
        %3539 = vmatprep.subr.bf16.mxu0 0
        %3540 = vmatpush1.bf16.xpose.msra.mxu0 0
        %3541 = vmatprep.subr.bf16.mxu0 0
        %3542 = vmatpush1.bf16.xpose.msra.mxu0 0
        %3543 = vmatprep.subr.bf16.mxu0 0
        %3544 = vmatpush1.bf16.xpose.msra.mxu0 0
        %3545 = vmatprep.subr.bf16.mxu0 0
        %3546 = vmatpush1.bf16.xpose.msra.mxu0 0
        %3547 = vmatprep.subr.bf16.mxu0 0
        %3548 = vmatpush1.bf16.xpose.msra.mxu0 0
        %3549 = vmatprep.subr.bf16.mxu0 0
        %3550 = vmatpush1.bf16.xpose.msra.mxu0 0
        %3551 = vmatprep.subr.bf16.mxu0 0
        %3552 = vmatpush1.bf16.xpose.msra.mxu0 0
        %3553 = vmatprep.subr.bf16.mxu0 0
        %3554 = vmatpush1.bf16.xpose.msra.mxu0 0
        %3555 = vmatprep.subr.bf16.mxu0 0
        %3556 = vmatpush1.bf16.xpose.msra.mxu0 0
        %3557 = vmatprep.mubr.bf16.mxu0 0
        %3558 = vmatmul.mubr.bf16.gmra.mrb[0].mxu0 %v3520
        %v3559 = vpop.f32.mrb[0].mxu0
        %v3560 = vadd.f32 %v1787, %v3559
        %v3561 = vpop.f32.mrb[0].mxu0
        %v3562 = vpop.f32.mrb[0].mxu0
        %v3563 = vpop.f32.mrb[0].mxu0
        %3564 = vdwg.mxu0
        %3565 = vrot.lane.b32.xlu0 %v2853, 32
        %v3566 = vpop.permute.xlu0 %3565
        %3567 = vrot.lane.b32.xlu0 %v2855, 32
        %v3568 = vpop.permute.xlu0 %3567
        %v3570 = vsel %vm2856, %v3566, 0
        %v3573 = vsel %vm2856, %v3568, 0
        %3575 = vmatprep.subr.bf16.mxu0 0
        %3576 = vmatpush1.bf16.xpose.msra.mxu0 %v3573
        %3577 = vmatprep.subr.bf16.mxu0 0
        %3578 = vmatpush1.bf16.xpose.msra.mxu0 0
        %3579 = vmatprep.subr.bf16.mxu0 0
        %3580 = vmatpush1.bf16.xpose.msra.mxu0 0
        %3581 = vmatprep.subr.bf16.mxu0 0
        %3582 = vmatpush1.bf16.xpose.msra.mxu0 0
        %3583 = vmatprep.subr.bf16.mxu0 0
        %3584 = vmatpush1.bf16.xpose.msra.mxu0 0
        %3585 = vmatprep.subr.bf16.mxu0 0
        %3586 = vmatpush1.bf16.xpose.msra.mxu0 0
        %3587 = vmatprep.subr.bf16.mxu0 0
        %3588 = vmatpush1.bf16.xpose.msra.mxu0 0
        %3589 = vmatprep.subr.bf16.mxu0 0
        %3590 = vmatpush1.bf16.xpose.msra.mxu0 0
        %3591 = vmatprep.subr.bf16.mxu0 0
        %3592 = vmatpush1.bf16.xpose.msra.mxu0 0
        %3593 = vmatprep.subr.bf16.mxu0 0
        %3594 = vmatpush1.bf16.xpose.msra.mxu0 0
        %3595 = vmatprep.subr.bf16.mxu0 0
        %3596 = vmatpush1.bf16.xpose.msra.mxu0 0
        %3597 = vmatprep.subr.bf16.mxu0 0
        %3598 = vmatpush1.bf16.xpose.msra.mxu0 0
        %3599 = vmatprep.subr.bf16.mxu0 0
        %3600 = vmatpush1.bf16.xpose.msra.mxu0 0
        %3601 = vmatprep.subr.bf16.mxu0 0
        %3602 = vmatpush1.bf16.xpose.msra.mxu0 0
        %3603 = vmatprep.subr.bf16.mxu0 0
        %3604 = vmatpush1.bf16.xpose.msra.mxu0 0
        %3605 = vmatprep.subr.bf16.mxu0 0
        %3606 = vmatpush1.bf16.xpose.msra.mxu0 0
        %3607 = vmatprep.mubr.bf16.mxu0 0
        %3608 = vmatmul.mubr.bf16.gmra.mrb[0].mxu0 %v3570
        %v3609 = vpop.f32.mrb[0].mxu0
        %v3610 = vadd.f32 %v1795, %v3609
        %v3611 = vpop.f32.mrb[0].mxu0
        %v3612 = vpop.f32.mrb[0].mxu0
        %v3613 = vpop.f32.mrb[0].mxu0
        %3614 = vdwg.mxu0
        %v3615 = vsel %vm2949, %v3560, -inf
        %3616 = vmax.xlane.f32.xlu0 %v3615
        %v3617 = vpop.xlane.xlu0 %3616
        %v3618 = vsel %vm2949, %v3610, -inf
        %3619 = vmax.xlane.f32.xlu0 %v3618
        %v3620 = vpop.xlane.xlu0 %3619
        %v3621 = vsub.f32 %v3560, %v3617
        %v3622 = vsub.f32 %v3610, %v3620
        %v3623 = vmul.f32 %v3621, 1.442695
        %v3624 = vpow.pop %v3623
        %v3625 = vmul.f32 %v3622, 1.442695
        %v3626 = vpow.pop %v3625
        %v3627 = vsel %vm2949, %v3624, 0.0
        %3628 = vadd.xlane.f32.xlu0 %v3627
        %v3629 = vpop.xlane.xlu0 %3628
        %v3630 = vsel %vm2949, %v3626, 0.0
        %3631 = vadd.xlane.f32.xlu0 %v3630
        %v3632 = vpop.xlane.xlu0 %3631
        %v3633 = vrcp.pop %v3629
        %v3634 = vmul.f32 %v3624, %v3633
        %v3635 = vrcp.pop %v3632
        %v3636 = vmul.f32 %v3626, %v3635
        %v3637 = vpack.c.bf16 %v3634, %v3634
        %v3638 = vpack.c.bf16 %v3636, %v3636
        %3639 = vrot.lane.b32.xlu0 %v2974, 32
        %v3640 = vpop.permute.xlu0 %3639
        %v3642 = vsel %vm2949, %v3637, 0
        %v3645 = vsel %vm2979, %v3640, 0
        %3647 = vmatprep.subr.bf16.mxu0 0
        %3648 = vmatpush1.bf16.msra.mxu0 %v3645
        %3649 = vmatprep.subr.bf16.mxu0 0
        %3650 = vmatpush1.bf16.msra.mxu0 0
        %3651 = vmatprep.subr.bf16.mxu0 0
        %3652 = vmatpush1.bf16.msra.mxu0 0
        %3653 = vmatprep.subr.bf16.mxu0 0
        %3654 = vmatpush1.bf16.msra.mxu0 0
        %3655 = vmatprep.subr.bf16.mxu0 0
        %3656 = vmatpush1.bf16.msra.mxu0 0
        %3657 = vmatprep.subr.bf16.mxu0 0
        %3658 = vmatpush1.bf16.msra.mxu0 0
        %3659 = vmatprep.subr.bf16.mxu0 0
        %3660 = vmatpush1.bf16.msra.mxu0 0
        %3661 = vmatprep.subr.bf16.mxu0 0
        %3662 = vmatpush1.bf16.msra.mxu0 0
        %3663 = vmatprep.subr.bf16.mxu0 0
        %3664 = vmatpush1.bf16.msra.mxu0 0
        %3665 = vmatprep.subr.bf16.mxu0 0
        %3666 = vmatpush1.bf16.msra.mxu0 0
        %3667 = vmatprep.subr.bf16.mxu0 0
        %3668 = vmatpush1.bf16.msra.mxu0 0
        %3669 = vmatprep.subr.bf16.mxu0 0
        %3670 = vmatpush1.bf16.msra.mxu0 0
        %3671 = vmatprep.subr.bf16.mxu0 0
        %3672 = vmatpush1.bf16.msra.mxu0 0
        %3673 = vmatprep.subr.bf16.mxu0 0
        %3674 = vmatpush1.bf16.msra.mxu0 0
        %3675 = vmatprep.subr.bf16.mxu0 0
        %3676 = vmatpush1.bf16.msra.mxu0 0
        %3677 = vmatprep.subr.bf16.mxu0 0
        %3678 = vmatpush1.bf16.msra.mxu0 0
        %3679 = vmatprep.mubr.bf16.mxu0 0
        %3680 = vmatmul.mubr.bf16.gmra.mrb[0].mxu0 %v3642
        %v3681 = vpop.f32.mrb[0].mxu0
        %v3682 = vadd.f32 0.0, %v3681
        %v3683 = vpop.f32.mrb[0].mxu0
        %v3684 = vpop.f32.mrb[0].mxu0
        %v3685 = vpop.f32.mrb[0].mxu0
        %3686 = vdwg.mxu0
        %3687 = vrot.lane.b32.xlu0 %v2975, 32
        %v3688 = vpop.permute.xlu0 %3687
        %v3690 = vsel %vm2949, %v3638, 0
        %v3693 = vsel %vm2979, %v3688, 0
        %3695 = vmatprep.subr.bf16.mxu0 0
        %3696 = vmatpush1.bf16.msra.mxu0 %v3693
        %3697 = vmatprep.subr.bf16.mxu0 0
        %3698 = vmatpush1.bf16.msra.mxu0 0
        %3699 = vmatprep.subr.bf16.mxu0 0
        %3700 = vmatpush1.bf16.msra.mxu0 0
        %3701 = vmatprep.subr.bf16.mxu0 0
        %3702 = vmatpush1.bf16.msra.mxu0 0
        %3703 = vmatprep.subr.bf16.mxu0 0
        %3704 = vmatpush1.bf16.msra.mxu0 0
        %3705 = vmatprep.subr.bf16.mxu0 0
        %3706 = vmatpush1.bf16.msra.mxu0 0
        %3707 = vmatprep.subr.bf16.mxu0 0
        %3708 = vmatpush1.bf16.msra.mxu0 0
        %3709 = vmatprep.subr.bf16.mxu0 0
        %3710 = vmatpush1.bf16.msra.mxu0 0
        %3711 = vmatprep.subr.bf16.mxu0 0
        %3712 = vmatpush1.bf16.msra.mxu0 0
        %3713 = vmatprep.subr.bf16.mxu0 0
        %3714 = vmatpush1.bf16.msra.mxu0 0
        %3715 = vmatprep.subr.bf16.mxu0 0
        %3716 = vmatpush1.bf16.msra.mxu0 0
        %3717 = vmatprep.subr.bf16.mxu0 0
        %3718 = vmatpush1.bf16.msra.mxu0 0
        %3719 = vmatprep.subr.bf16.mxu0 0
        %3720 = vmatpush1.bf16.msra.mxu0 0
        %3721 = vmatprep.subr.bf16.mxu0 0
        %3722 = vmatpush1.bf16.msra.mxu0 0
        %3723 = vmatprep.subr.bf16.mxu0 0
        %3724 = vmatpush1.bf16.msra.mxu0 0
        %3725 = vmatprep.subr.bf16.mxu0 0
        %3726 = vmatpush1.bf16.msra.mxu0 0
        %3727 = vmatprep.mubr.bf16.mxu0 0
        %3728 = vmatmul.mubr.bf16.gmra.mrb[0].mxu0 %v3690
        %v3729 = vpop.f32.mrb[0].mxu0
        %v3730 = vadd.f32 0.0, %v3729
        %v3731 = vpop.f32.mrb[0].mxu0
        %v3732 = vpop.f32.mrb[0].mxu0
        %v3733 = vpop.f32.mrb[0].mxu0
        %3734 = vdwg.mxu0
        %3737 = vrot.lane.b32.xlu0 %v3241, 32
        %v3738 = vpop.permute.xlu0 %3737
        %3739 = vrot.lane.b32.xlu0 %v3290, 32
        %v3740 = vpop.permute.xlu0 %3739
        %3745 = vrot.lane.b32.xlu0 %v3462, 64
        %v3746 = vpop.permute.xlu0 %3745
        %3747 = vrot.lane.b32.xlu0 %v3510, 64
        %v3748 = vpop.permute.xlu0 %3747
        %3753 = vrot.lane.b32.xlu0 %v3682, 96
        %v3754 = vpop.permute.xlu0 %3753
        %3755 = vrot.lane.b32.xlu0 %v3730, 96
        %v3756 = vpop.permute.xlu0 %3755
        %v3759 = vsel %vm2856, %v3018, %v3738
        %v3760 = vsel %vm2856, %v3064, %v3740
        %vm3761 = vcmask 523264
        %v3762 = vsel %vm3761, %v3759, %v3746
        %v3763 = vsel %vm3761, %v3760, %v3748
        %vm3764 = vcmask 785408
        %v3765 = vsel %vm3764, %v3762, %v3754
        %v3766 = vsel %vm3764, %v3763, %v3756
        %v3767 = vpack.c.bf16 %v3766, %v3765
        %v3768 = vld [vmem:[%s1423] sm:$0xf]
        %v3769 = vld [vmem:[%s1423 + $0x4] sm:$0xf]
        %v3770 = vld [vmem:[%s1423 + $0x8] sm:$0xf]
        %v3771 = vld [vmem:[%s1423 + $0xc] sm:$0xf]
        %v3772 = vld [vmem:[%s1423 + $0x10] sm:$0xf]
        %v3773 = vld [vmem:[%s1423 + $0x14] sm:$0xf]
        %v3774 = vld [vmem:[%s1423 + $0x18] sm:$0xf]
        %v3775 = vld [vmem:[%s1423 + $0x1c] sm:$0xf]
        %v3776 = vld [vmem:[%s1423 + $0x20] sm:$0xf]
        %v3777 = vld [vmem:[%s1423 + $0x24] sm:$0xf]
        %v3778 = vld [vmem:[%s1423 + $0x28] sm:$0xf]
        %v3779 = vld [vmem:[%s1423 + $0x2c] sm:$0xf]
        %v3780 = vld [vmem:[%s1423 + $0x30] sm:$0xf]
        %v3781 = vld [vmem:[%s1423 + $0x34] sm:$0xf]
        %v3782 = vld [vmem:[%s1423 + $0x38] sm:$0xf]
        %v3783 = vld [vmem:[%s1423 + $0x3c] sm:$0xf]
        %v3784 = vld [vmem:[%s1734] sm:$0x1]
        %v3786 = vlaneseq
        %v3787 = vshrl.u32 %v3786, 7
        %v3788 = vsub.s32 0, %v3787
        %v3789 = vrot.slane %v3784, %v3788
        %v3807 = vunpack.c.l.b16 %v3768
        %v3808 = vunpack.c.l.b16 %v3769
        %v3809 = vunpack.c.l.b16 %v3770
        %v3810 = vunpack.c.l.b16 %v3771
        %v3811 = vunpack.c.l.b16 %v3772
        %v3812 = vunpack.c.l.b16 %v3773
        %v3813 = vunpack.c.l.b16 %v3774
        %v3814 = vunpack.c.l.b16 %v3775
        %v3815 = vunpack.c.l.b16 %v3776
        %v3816 = vunpack.c.l.b16 %v3777
        %v3817 = vunpack.c.l.b16 %v3778
        %v3818 = vunpack.c.l.b16 %v3779
        %v3819 = vunpack.c.l.b16 %v3780
        %v3820 = vunpack.c.l.b16 %v3781
        %v3821 = vunpack.c.l.b16 %v3782
        %v3822 = vunpack.c.l.b16 %v3783
        %v3823 = vpack.c.b16 %v3808, %v3807
        %v3824 = vpack.c.b16 %v3810, %v3809
        %v3825 = vpack.c.b16 %v3812, %v3811
        %v3826 = vpack.c.b16 %v3814, %v3813
        %v3827 = vpack.c.b16 %v3816, %v3815
        %v3828 = vpack.c.b16 %v3818, %v3817
        %v3829 = vpack.c.b16 %v3820, %v3819
        %v3830 = vpack.c.b16 %v3822, %v3821
        %3839 = vmatprep.subr.bf16.mxu0 0
        %3840 = vmatpush1.bf16.msra.mxu0 %v3823
        %3841 = vmatprep.subr.bf16.mxu0 0
        %3842 = vmatpush1.bf16.msra.mxu0 %v3824
        %3843 = vmatprep.subr.bf16.mxu0 0
        %3844 = vmatpush1.bf16.msra.mxu0 %v3825
        %3845 = vmatprep.subr.bf16.mxu0 0
        %3846 = vmatpush1.bf16.msra.mxu0 %v3826
        %3847 = vmatprep.subr.bf16.mxu0 0
        %3848 = vmatpush1.bf16.msra.mxu0 %v3827
        %3849 = vmatprep.subr.bf16.mxu0 0
        %3850 = vmatpush1.bf16.msra.mxu0 %v3828
        %3851 = vmatprep.subr.bf16.mxu0 0
        %3852 = vmatpush1.bf16.msra.mxu0 %v3829
        %3853 = vmatprep.subr.bf16.mxu0 0
        %3854 = vmatpush1.bf16.msra.mxu0 %v3830
        %3855 = vmatprep.subr.bf16.mxu0 0
        %3856 = vmatpush1.bf16.msra.mxu0 0
        %3857 = vmatprep.subr.bf16.mxu0 0
        %3858 = vmatpush1.bf16.msra.mxu0 0
        %3859 = vmatprep.subr.bf16.mxu0 0
        %3860 = vmatpush1.bf16.msra.mxu0 0
        %3861 = vmatprep.subr.bf16.mxu0 0
        %3862 = vmatpush1.bf16.msra.mxu0 0
        %3863 = vmatprep.subr.bf16.mxu0 0
        %3864 = vmatpush1.bf16.msra.mxu0 0
        %3865 = vmatprep.subr.bf16.mxu0 0
        %3866 = vmatpush1.bf16.msra.mxu0 0
        %3867 = vmatprep.subr.bf16.mxu0 0
        %3868 = vmatpush1.bf16.msra.mxu0 0
        %3869 = vmatprep.subr.bf16.mxu0 0
        %3870 = vmatpush1.bf16.msra.mxu0 0
        %3871 = vmatprep.mubr.bf16.mxu0 0
        %3872 = vmatmul.mubr.bf16.gmra.mrb[0].mxu0 %v3767
        %v3873 = vpop.f32.mrb[0].mxu0
        %v3874 = vadd.f32 %v3789, %v3873
        %v3875 = vpop.f32.mrb[0].mxu0
        %v3876 = vpop.f32.mrb[0].mxu0
        %v3877 = vadd.f32 %v3789, %v3876
        %v3878 = vpop.f32.mrb[0].mxu0
        %3879 = vdwg.mxu0
        %v3880 = vadd.f32 %v2548, %v3874
        %v3881 = vadd.f32 %v2549, %v3877
        %3882 = vadd.xlane.f32.xlu0 %v3880
        %v3883 = vpop.xlane.xlu0 %3882
        %3884 = vadd.xlane.f32.xlu0 %v3881
        %v3885 = vpop.xlane.xlu0 %3884
        %v3886 = vmul.f32 %v3883, %v1803
        %v3887 = vmul.f32 %v3885, %v1803
        %v3888 = vsub.f32 %v3880, %v3886
        %v3889 = vsub.f32 %v3881, %v3887
        %v3890 = vmul.f32 %v3888, %v3888
        %v3891 = vmul.f32 %v3889, %v3889
        %3892 = vadd.xlane.f32.xlu0 %v3890
        %v3893 = vpop.xlane.xlu0 %3892
        %3894 = vadd.xlane.f32.xlu0 %v3891
        %v3895 = vpop.xlane.xlu0 %3894
        %v3896 = vmul.f32 %v3893, %v1803
        %v3897 = vmul.f32 %v3895, %v1803
        %v3898 = vadd.f32 %v3896, 1e-05
        %v3899 = vadd.f32 %v3897, 1e-05
        %v3900 = vrsqrt.pop %v3898
        %v3901 = vrsqrt.pop %v3899
        %v3902 = vmul.f32 %v3888, %v3900
        %v3903 = vmul.f32 %v3889, %v3901
        %v3904 = vld [vmem:[%s1431] sm:$0x1]
        %v3906 = vlaneseq
        %v3907 = vshrl.u32 %v3906, 7
        %v3908 = vsub.s32 0, %v3907
        %v3909 = vrot.slane %v3904, %v3908
        %v3911 = vmul.f32 %v3902, %v3909
        %v3912 = vmul.f32 %v3903, %v3909
        %v3913 = vld [vmem:[%s1439] sm:$0x1]
        %v3915 = vlaneseq
        %v3916 = vshrl.u32 %v3915, 7
        %v3917 = vsub.s32 0, %v3916
        %v3918 = vrot.slane %v3913, %v3917
        %v3920 = vadd.f32 %v3911, %v3918
        %v3921 = vadd.f32 %v3912, %v3918
        %v3922 = vpack.c.bf16 %v3921, %v3920
        %v3923 = vld [vmem:[%s1448] sm:$0xff]
        %v3924 = vld [vmem:[%s1448 + $0x8] sm:$0xff]
        %v3925 = vld [vmem:[%s1448 + $0x10] sm:$0xff]
        %v3926 = vld [vmem:[%s1448 + $0x18] sm:$0xff]
        %v3927 = vld [vmem:[%s1448 + $0x20] sm:$0xff]
        %v3928 = vld [vmem:[%s1448 + $0x28] sm:$0xff]
        %v3929 = vld [vmem:[%s1448 + $0x30] sm:$0xff]
        %v3930 = vld [vmem:[%s1448 + $0x38] sm:$0xff]
        %v3931 = vld [vmem:[%s1448 + $0x40] sm:$0xff]
        %v3932 = vld [vmem:[%s1448 + $0x48] sm:$0xff]
        %v3933 = vld [vmem:[%s1448 + $0x50] sm:$0xff]
        %v3934 = vld [vmem:[%s1448 + $0x58] sm:$0xff]
        %v3935 = vld [vmem:[%s1448 + $0x60] sm:$0xff]
        %v3936 = vld [vmem:[%s1448 + $0x68] sm:$0xff]
        %v3937 = vld [vmem:[%s1448 + $0x70] sm:$0xff]
        %v3938 = vld [vmem:[%s1448 + $0x78] sm:$0xff]
        %v3939 = vld [vmem:[%s1738] sm:$0x3]
        %v3941 = vlaneseq
        %v3942 = vshrl.u32 %v3941, 7
        %v3943 = vsub.s32 0, %v3942
        %v3944 = vrot.slane %v3939, %v3943
        %v3945 = vlaneseq
        %v3946 = vshrl.u32 %v3945, 7
        %v3947 = vsub.s32 1, %v3946
        %v3948 = vrot.slane %v3939, %v3947
        %v3967 = vunpack.c.l.b16 %v3923
        %v3968 = vunpack.c.h.b16 %v3923
        %v3969 = vunpack.c.l.b16 %v3924
        %v3970 = vunpack.c.h.b16 %v3924
        %v3971 = vunpack.c.l.b16 %v3925
        %v3972 = vunpack.c.h.b16 %v3925
        %v3973 = vunpack.c.l.b16 %v3926
        %v3974 = vunpack.c.h.b16 %v3926
        %v3975 = vunpack.c.l.b16 %v3927
        %v3976 = vunpack.c.h.b16 %v3927
        %v3977 = vunpack.c.l.b16 %v3928
        %v3978 = vunpack.c.h.b16 %v3928
        %v3979 = vunpack.c.l.b16 %v3929
        %v3980 = vunpack.c.h.b16 %v3929
        %v3981 = vunpack.c.l.b16 %v3930
        %v3982 = vunpack.c.h.b16 %v3930
        %v3983 = vunpack.c.l.b16 %v3931
        %v3984 = vunpack.c.h.b16 %v3931
        %v3985 = vunpack.c.l.b16 %v3932
        %v3986 = vunpack.c.h.b16 %v3932
        %v3987 = vunpack.c.l.b16 %v3933
        %v3988 = vunpack.c.h.b16 %v3933
        %v3989 = vunpack.c.l.b16 %v3934
        %v3990 = vunpack.c.h.b16 %v3934
        %v3991 = vunpack.c.l.b16 %v3935
        %v3992 = vunpack.c.h.b16 %v3935
        %v3993 = vunpack.c.l.b16 %v3936
        %v3994 = vunpack.c.h.b16 %v3936
        %v3995 = vunpack.c.l.b16 %v3937
        %v3996 = vunpack.c.h.b16 %v3937
        %v3997 = vunpack.c.l.b16 %v3938
        %v3998 = vunpack.c.h.b16 %v3938
        %v3999 = vpack.c.b16 %v3969, %v3967
        %v4000 = vpack.c.b16 %v3970, %v3968
        %v4001 = vpack.c.b16 %v3973, %v3971
        %v4002 = vpack.c.b16 %v3974, %v3972
        %v4003 = vpack.c.b16 %v3977, %v3975
        %v4004 = vpack.c.b16 %v3978, %v3976
        %v4005 = vpack.c.b16 %v3981, %v3979
        %v4006 = vpack.c.b16 %v3982, %v3980
        %v4007 = vpack.c.b16 %v3985, %v3983
        %v4008 = vpack.c.b16 %v3986, %v3984
        %v4009 = vpack.c.b16 %v3989, %v3987
        %v4010 = vpack.c.b16 %v3990, %v3988
        %v4011 = vpack.c.b16 %v3993, %v3991
        %v4012 = vpack.c.b16 %v3994, %v3992
        %v4013 = vpack.c.b16 %v3997, %v3995
        %v4014 = vpack.c.b16 %v3998, %v3996
        %4031 = vmatprep.subr.bf16.mxu0 %v4000
        %4032 = vmatpush1.bf16.msra.mxu0 %v3999
        %4033 = vmatprep.subr.bf16.mxu0 %v4002
        %4034 = vmatpush1.bf16.msra.mxu0 %v4001
        %4035 = vmatprep.subr.bf16.mxu0 %v4004
        %4036 = vmatpush1.bf16.msra.mxu0 %v4003
        %4037 = vmatprep.subr.bf16.mxu0 %v4006
        %4038 = vmatpush1.bf16.msra.mxu0 %v4005
        %4039 = vmatprep.subr.bf16.mxu0 %v4008
        %4040 = vmatpush1.bf16.msra.mxu0 %v4007
        %4041 = vmatprep.subr.bf16.mxu0 %v4010
        %4042 = vmatpush1.bf16.msra.mxu0 %v4009
        %4043 = vmatprep.subr.bf16.mxu0 %v4012
        %4044 = vmatpush1.bf16.msra.mxu0 %v4011
        %4045 = vmatprep.subr.bf16.mxu0 %v4014
        %4046 = vmatpush1.bf16.msra.mxu0 %v4013
        %4047 = vmatprep.subr.bf16.mxu0 0
        %4048 = vmatpush1.bf16.msra.mxu0 0
        %4049 = vmatprep.subr.bf16.mxu0 0
        %4050 = vmatpush1.bf16.msra.mxu0 0
        %4051 = vmatprep.subr.bf16.mxu0 0
        %4052 = vmatpush1.bf16.msra.mxu0 0
        %4053 = vmatprep.subr.bf16.mxu0 0
        %4054 = vmatpush1.bf16.msra.mxu0 0
        %4055 = vmatprep.subr.bf16.mxu0 0
        %4056 = vmatpush1.bf16.msra.mxu0 0
        %4057 = vmatprep.subr.bf16.mxu0 0
        %4058 = vmatpush1.bf16.msra.mxu0 0
        %4059 = vmatprep.subr.bf16.mxu0 0
        %4060 = vmatpush1.bf16.msra.mxu0 0
        %4061 = vmatprep.subr.bf16.mxu0 0
        %4062 = vmatpush1.bf16.msra.mxu0 0
        %4063 = vmatprep.mubr.bf16.mxu0 0
        %4064 = vmatmul.mubr.bf16.gmra.mrb[0].mxu0 %v3922
        %v4065 = vpop.f32.mrb[0].mxu0
        %v4066 = vadd.f32 %v3944, %v4065
        %v4067 = vpop.f32.mrb[0].mxu0
        %v4068 = vadd.f32 %v3948, %v4067
        %v4069 = vpop.f32.mrb[0].mxu0
        %v4070 = vadd.f32 %v3944, %v4069
        %v4071 = vpop.f32.mrb[0].mxu0
        %v4072 = vadd.f32 %v3948, %v4071
        %4073 = vdwg.mxu0
        %v4074 = vxor.u32 %v4068, 2147483648
        %v4075 = vxor.u32 %v4072, 2147483648
        %v4076 = vmul.f32 %v4074, 1.442695
        %v4077 = vpow.pop %v4076
        %v4078 = vmul.f32 %v4075, 1.442695
        %v4079 = vpow.pop %v4078
        %v4080 = vadd.f32 %v4077, 1.0
        %v4081 = vadd.f32 %v4079, 1.0
        %v4082 = vrcp.pop %v4080
        %v4083 = vmul.f32 1.0, %v4082
        %v4084 = vrcp.pop %v4081
        %v4085 = vmul.f32 1.0, %v4084
        %v4086 = vmul.f32 %v4066, %v4083
        %v4087 = vmul.f32 %v4070, %v4085
        %4089 = vset.pattern.permute.xlu0 0
        %4090 = vperm.xlu0 %4089, %v1790
        %v4091 = vpop.permute.xlu0 %4090
        %4094 = vset.pattern.permute.xlu0 0
        %4095 = vperm.xlu0 %4094, %v1798
        %v4096 = vpop.permute.xlu0 %4095
        %v4098 = vmul.f32 %v4086, %v4091
        %v4099 = vmul.f32 %v4087, %v4096
        %v4100 = vld [vmem:[%s1742] sm:$0x7f]
        %v4101 = vrot.slane %v4098, 5
        %v4102 = vrot.slane %v4099, 5
        %v4103 = vadd.s32 %v1782, 4294967293
        %vm4104 = vcmp.ge.s32.totalorder %v4103, 0
        %vm4105 = vcmp.lt.s32.totalorder %v4103, 8
        %vm4106 = vmand %vm4104, %vm4105
        %v4107 = vsel %vm4106, %v4101, 0.0
        %v4108 = vsel %vm4106, %v4102, 0.0
        %v4109 = vlaneseq
        %v4110 = vshrl.u32 %v4109, 7
        %v4111 = vsub.s32 0, %v4110
        %v4112 = vrot.slane %v4100, %v4111
        %v4113 = vmul.f32 %v4107, %v4112
        %v4114 = vmul.f32 %v4108, %v4112
        %v4115 = vadd.f32 %v4113, 0.0
        %v4116 = vadd.f32 %v4114, 0.0
        %v4117 = vrot.slane %v4098, 6
        %v4118 = vrot.slane %v4099, 6
        %v4119 = vadd.s32 %v1782, 4294967294
        %vm4120 = vcmp.ge.s32.totalorder %v4119, 0
        %vm4121 = vcmp.lt.s32.totalorder %v4119, 8
        %vm4122 = vmand %vm4120, %vm4121
        %v4123 = vsel %vm4122, %v4117, 0.0
        %v4124 = vsel %vm4122, %v4118, 0.0
        %v4125 = vlaneseq
        %v4126 = vshrl.u32 %v4125, 7
        %v4127 = vsub.s32 1, %v4126
        %v4128 = vrot.slane %v4100, %v4127
        %v4129 = vmul.f32 %v4123, %v4128
        %v4130 = vmul.f32 %v4124, %v4128
        %v4131 = vadd.f32 %v4115, %v4129
        %v4132 = vadd.f32 %v4116, %v4130
        %v4133 = vrot.slane %v4098, 7
        %v4134 = vrot.slane %v4099, 7
        %v4135 = vadd.s32 %v1782, 4294967295
        %vm4136 = vcmp.ge.s32.totalorder %v4135, 0
        %vm4137 = vcmp.lt.s32.totalorder %v4135, 8
        %vm4138 = vmand %vm4136, %vm4137
        %v4139 = vsel %vm4138, %v4133, 0.0
        %v4140 = vsel %vm4138, %v4134, 0.0
        %v4141 = vlaneseq
        %v4142 = vshrl.u32 %v4141, 7
        %v4143 = vsub.s32 2, %v4142
        %v4144 = vrot.slane %v4100, %v4143
        %v4145 = vmul.f32 %v4139, %v4144
        %v4146 = vmul.f32 %v4140, %v4144
        %v4147 = vadd.f32 %v4131, %v4145
        %v4148 = vadd.f32 %v4132, %v4146
        %vm4149 = vcmp.ge.s32.totalorder %v1782, 0
        %vm4150 = vcmp.lt.s32.totalorder %v1782, 8
        %vm4151 = vmand %vm4149, %vm4150
        %v4152 = vsel %vm4151, %v4098, 0.0
        %v4153 = vsel %vm4151, %v4099, 0.0
        %v4154 = vlaneseq
        %v4155 = vshrl.u32 %v4154, 7
        %v4156 = vsub.s32 3, %v4155
        %v4157 = vrot.slane %v4100, %v4156
        %v4158 = vmul.f32 %v4152, %v4157
        %v4159 = vmul.f32 %v4153, %v4157
        %v4160 = vadd.f32 %v4147, %v4158
        %v4161 = vadd.f32 %v4148, %v4159
        %v4162 = vrot.slane %v4098, 1
        %v4163 = vrot.slane %v4099, 1
        %v4164 = vadd.s32 %v1782, 1
        %vm4165 = vcmp.ge.s32.totalorder %v4164, 0
        %vm4166 = vcmp.lt.s32.totalorder %v4164, 8
        %vm4167 = vmand %vm4165, %vm4166
        %v4168 = vsel %vm4167, %v4162, 0.0
        %v4169 = vsel %vm4167, %v4163, 0.0
        %v4170 = vlaneseq
        %v4171 = vshrl.u32 %v4170, 7
        %v4172 = vsub.s32 4, %v4171
        %v4173 = vrot.slane %v4100, %v4172
        %v4174 = vmul.f32 %v4168, %v4173
        %v4175 = vmul.f32 %v4169, %v4173
        %v4176 = vadd.f32 %v4160, %v4174
        %v4177 = vadd.f32 %v4161, %v4175
        %v4178 = vrot.slane %v4098, 2
        %v4179 = vrot.slane %v4099, 2
        %v4180 = vadd.s32 %v1782, 2
        %vm4181 = vcmp.ge.s32.totalorder %v4180, 0
        %vm4182 = vcmp.lt.s32.totalorder %v4180, 8
        %vm4183 = vmand %vm4181, %vm4182
        %v4184 = vsel %vm4183, %v4178, 0.0
        %v4185 = vsel %vm4183, %v4179, 0.0
        %v4186 = vlaneseq
        %v4187 = vshrl.u32 %v4186, 7
        %v4188 = vsub.s32 5, %v4187
        %v4189 = vrot.slane %v4100, %v4188
        %v4190 = vmul.f32 %v4184, %v4189
        %v4191 = vmul.f32 %v4185, %v4189
        %v4192 = vadd.f32 %v4176, %v4190
        %v4193 = vadd.f32 %v4177, %v4191
        %v4194 = vrot.slane %v4098, 3
        %v4195 = vrot.slane %v4099, 3
        %v4196 = vadd.s32 %v1782, 3
        %vm4197 = vcmp.ge.s32.totalorder %v4196, 0
        %vm4198 = vcmp.lt.s32.totalorder %v4196, 8
        %vm4199 = vmand %vm4197, %vm4198
        %v4200 = vsel %vm4199, %v4194, 0.0
        %v4201 = vsel %vm4199, %v4195, 0.0
        %v4202 = vlaneseq
        %v4203 = vshrl.u32 %v4202, 7
        %v4204 = vsub.s32 6, %v4203
        %v4205 = vrot.slane %v4100, %v4204
        %v4206 = vmul.f32 %v4200, %v4205
        %v4207 = vmul.f32 %v4201, %v4205
        %v4208 = vadd.f32 %v4192, %v4206
        %v4209 = vadd.f32 %v4193, %v4207
        %v4210 = vld [vmem:[%s1745] sm:$0x1]
        %v4212 = vlaneseq
        %v4213 = vshrl.u32 %v4212, 7
        %v4214 = vsub.s32 0, %v4213
        %v4215 = vrot.slane %v4210, %v4214
        %v4217 = vmul.f32 %v4208, %v4215
        %v4218 = vmul.f32 %v4209, %v4215
        %v4219 = vld [vmem:[%s1748] sm:$0x1]
        %v4221 = vlaneseq
        %v4222 = vshrl.u32 %v4221, 7
        %v4223 = vsub.s32 0, %v4222
        %v4224 = vrot.slane %v4219, %v4223
        %v4226 = vadd.f32 %v4217, %v4224
        %v4227 = vadd.f32 %v4218, %v4224
        %v4228 = vxor.u32 %v4226, 2147483648
        %v4229 = vxor.u32 %v4227, 2147483648
        %v4230 = vmul.f32 %v4228, 1.442695
        %v4231 = vpow.pop %v4230
        %v4232 = vmul.f32 %v4229, 1.442695
        %v4233 = vpow.pop %v4232
        %v4234 = vadd.f32 %v4231, 1.0
        %v4235 = vadd.f32 %v4233, 1.0
        %v4236 = vrcp.pop %v4234
        %v4237 = vmul.f32 1.0, %v4236
        %v4238 = vrcp.pop %v4235
        %v4239 = vmul.f32 1.0, %v4238
        %v4240 = vmul.f32 %v4226, %v4237
        %v4241 = vmul.f32 %v4227, %v4239
        %v4242 = vpack.c.bf16 %v4241, %v4240
        %v4243 = vld [vmem:[%s1457] sm:$0xf]
        %v4244 = vld [vmem:[%s1457 + $0x4] sm:$0xf]
        %v4245 = vld [vmem:[%s1457 + $0x8] sm:$0xf]
        %v4246 = vld [vmem:[%s1457 + $0xc] sm:$0xf]
        %v4247 = vld [vmem:[%s1457 + $0x10] sm:$0xf]
        %v4248 = vld [vmem:[%s1457 + $0x14] sm:$0xf]
        %v4249 = vld [vmem:[%s1457 + $0x18] sm:$0xf]
        %v4250 = vld [vmem:[%s1457 + $0x1c] sm:$0xf]
        %v4251 = vld [vmem:[%s1457 + $0x20] sm:$0xf]
        %v4252 = vld [vmem:[%s1457 + $0x24] sm:$0xf]
        %v4253 = vld [vmem:[%s1457 + $0x28] sm:$0xf]
        %v4254 = vld [vmem:[%s1457 + $0x2c] sm:$0xf]
        %v4255 = vld [vmem:[%s1457 + $0x30] sm:$0xf]
        %v4256 = vld [vmem:[%s1457 + $0x34] sm:$0xf]
        %v4257 = vld [vmem:[%s1457 + $0x38] sm:$0xf]
        %v4258 = vld [vmem:[%s1457 + $0x3c] sm:$0xf]
        %v4259 = vld [vmem:[%s1465] sm:$0x1]
        %v4261 = vlaneseq
        %v4262 = vshrl.u32 %v4261, 7
        %v4263 = vsub.s32 0, %v4262
        %v4264 = vrot.slane %v4259, %v4263
        %v4282 = vunpack.c.l.b16 %v4243
        %v4283 = vunpack.c.l.b16 %v4244
        %v4284 = vunpack.c.l.b16 %v4245
        %v4285 = vunpack.c.l.b16 %v4246
        %v4286 = vunpack.c.l.b16 %v4247
        %v4287 = vunpack.c.l.b16 %v4248
        %v4288 = vunpack.c.l.b16 %v4249
        %v4289 = vunpack.c.l.b16 %v4250
        %v4290 = vunpack.c.l.b16 %v4251
        %v4291 = vunpack.c.l.b16 %v4252
        %v4292 = vunpack.c.l.b16 %v4253
        %v4293 = vunpack.c.l.b16 %v4254
        %v4294 = vunpack.c.l.b16 %v4255
        %v4295 = vunpack.c.l.b16 %v4256
        %v4296 = vunpack.c.l.b16 %v4257
        %v4297 = vunpack.c.l.b16 %v4258
        %v4298 = vpack.c.b16 %v4283, %v4282
        %v4299 = vpack.c.b16 %v4285, %v4284
        %v4300 = vpack.c.b16 %v4287, %v4286
        %v4301 = vpack.c.b16 %v4289, %v4288
        %v4302 = vpack.c.b16 %v4291, %v4290
        %v4303 = vpack.c.b16 %v4293, %v4292
        %v4304 = vpack.c.b16 %v4295, %v4294
        %v4305 = vpack.c.b16 %v4297, %v4296
        %4314 = vmatprep.subr.bf16.mxu0 0
        %4315 = vmatpush1.bf16.msra.mxu0 %v4298
        %4316 = vmatprep.subr.bf16.mxu0 0
        %4317 = vmatpush1.bf16.msra.mxu0 %v4299
        %4318 = vmatprep.subr.bf16.mxu0 0
        %4319 = vmatpush1.bf16.msra.mxu0 %v4300
        %4320 = vmatprep.subr.bf16.mxu0 0
        %4321 = vmatpush1.bf16.msra.mxu0 %v4301
        %4322 = vmatprep.subr.bf16.mxu0 0
        %4323 = vmatpush1.bf16.msra.mxu0 %v4302
        %4324 = vmatprep.subr.bf16.mxu0 0
        %4325 = vmatpush1.bf16.msra.mxu0 %v4303
        %4326 = vmatprep.subr.bf16.mxu0 0
        %4327 = vmatpush1.bf16.msra.mxu0 %v4304
        %4328 = vmatprep.subr.bf16.mxu0 0
        %4329 = vmatpush1.bf16.msra.mxu0 %v4305
        %4330 = vmatprep.subr.bf16.mxu0 0
        %4331 = vmatpush1.bf16.msra.mxu0 0
        %4332 = vmatprep.subr.bf16.mxu0 0
        %4333 = vmatpush1.bf16.msra.mxu0 0
        %4334 = vmatprep.subr.bf16.mxu0 0
        %4335 = vmatpush1.bf16.msra.mxu0 0
        %4336 = vmatprep.subr.bf16.mxu0 0
        %4337 = vmatpush1.bf16.msra.mxu0 0
        %4338 = vmatprep.subr.bf16.mxu0 0
        %4339 = vmatpush1.bf16.msra.mxu0 0
        %4340 = vmatprep.subr.bf16.mxu0 0
        %4341 = vmatpush1.bf16.msra.mxu0 0
        %4342 = vmatprep.subr.bf16.mxu0 0
        %4343 = vmatpush1.bf16.msra.mxu0 0
        %4344 = vmatprep.subr.bf16.mxu0 0
        %4345 = vmatpush1.bf16.msra.mxu0 0
        %4346 = vmatprep.mubr.bf16.mxu0 0
        %4347 = vmatmul.mubr.bf16.gmra.mrb[0].mxu0 %v4242
        %v4348 = vpop.f32.mrb[0].mxu0
        %v4349 = vadd.f32 %v4264, %v4348
        %v4350 = vpop.f32.mrb[0].mxu0
        %v4351 = vpop.f32.mrb[0].mxu0
        %v4352 = vadd.f32 %v4264, %v4351
        %v4353 = vpop.f32.mrb[0].mxu0
        %4354 = vdwg.mxu0
        %v4355 = vadd.f32 %v3880, %v4349
        %v4356 = vadd.f32 %v3881, %v4352
        %4357 = vadd.xlane.f32.xlu0 %v4355
        %v4358 = vpop.xlane.xlu0 %4357
        %4359 = vadd.xlane.f32.xlu0 %v4356
        %v4360 = vpop.xlane.xlu0 %4359
        %v4361 = vmul.f32 %v4358, %v1803
        %v4362 = vmul.f32 %v4360, %v1803
        %v4363 = vsub.f32 %v4355, %v4361
        %v4364 = vsub.f32 %v4356, %v4362
        %v4365 = vmul.f32 %v4363, %v4363
        %v4366 = vmul.f32 %v4364, %v4364
        %4367 = vadd.xlane.f32.xlu0 %v4365
        %v4368 = vpop.xlane.xlu0 %4367
        %4369 = vadd.xlane.f32.xlu0 %v4366
        %v4370 = vpop.xlane.xlu0 %4369
        %v4371 = vmul.f32 %v4368, %v1803
        %v4372 = vmul.f32 %v4370, %v1803
        %v4373 = vadd.f32 %v4371, 1e-05
        %v4374 = vadd.f32 %v4372, 1e-05
        %v4375 = vrsqrt.pop %v4373
        %v4376 = vrsqrt.pop %v4374
        %v4377 = vmul.f32 %v4363, %v4375
        %v4378 = vmul.f32 %v4364, %v4376
        %v4379 = vld [vmem:[%s1473] sm:$0x1]
        %v4381 = vlaneseq
        %v4382 = vshrl.u32 %v4381, 7
        %v4383 = vsub.s32 0, %v4382
        %v4384 = vrot.slane %v4379, %v4383
        %v4386 = vmul.f32 %v4377, %v4384
        %v4387 = vmul.f32 %v4378, %v4384
        %v4388 = vld [vmem:[%s1751] sm:$0x1]
        %v4390 = vlaneseq
        %v4391 = vshrl.u32 %v4390, 7
        %v4392 = vsub.s32 0, %v4391
        %v4393 = vrot.slane %v4388, %v4392
        %v4395 = vadd.f32 %v4386, %v4393
        %v4396 = vadd.f32 %v4387, %v4393
        %v4397 = vpack.c.bf16 %v4396, %v4395
        %v4398 = vld [vmem:[%s1482] sm:$0xff]
        %v4399 = vld [vmem:[%s1482 + $0x8] sm:$0xff]
        %v4400 = vld [vmem:[%s1482 + $0x10] sm:$0xff]
        %v4401 = vld [vmem:[%s1482 + $0x18] sm:$0xff]
        %v4402 = vld [vmem:[%s1482 + $0x20] sm:$0xff]
        %v4403 = vld [vmem:[%s1482 + $0x28] sm:$0xff]
        %v4404 = vld [vmem:[%s1482 + $0x30] sm:$0xff]
        %v4405 = vld [vmem:[%s1482 + $0x38] sm:$0xff]
        %v4406 = vld [vmem:[%s1482 + $0x40] sm:$0xff]
        %v4407 = vld [vmem:[%s1482 + $0x48] sm:$0xff]
        %v4408 = vld [vmem:[%s1482 + $0x50] sm:$0xff]
        %v4409 = vld [vmem:[%s1482 + $0x58] sm:$0xff]
        %v4410 = vld [vmem:[%s1482 + $0x60] sm:$0xff]
        %v4411 = vld [vmem:[%s1482 + $0x68] sm:$0xff]
        %v4412 = vld [vmem:[%s1482 + $0x70] sm:$0xff]
        %v4413 = vld [vmem:[%s1482 + $0x78] sm:$0xff]
        %v4414 = vld [vmem:[%s1482 + $0x80] sm:$0xff]
        %v4415 = vld [vmem:[%s1482 + $0x88] sm:$0xff]
        %v4416 = vld [vmem:[%s1482 + $0x90] sm:$0xff]
        %v4417 = vld [vmem:[%s1482 + $0x98] sm:$0xff]
        %v4418 = vld [vmem:[%s1482 + $0xa0] sm:$0xff]
        %v4419 = vld [vmem:[%s1482 + $0xa8] sm:$0xff]
        %v4420 = vld [vmem:[%s1482 + $0xb0] sm:$0xff]
        %v4421 = vld [vmem:[%s1482 + $0xb8] sm:$0xff]
        %v4422 = vld [vmem:[%s1482 + $0xc0] sm:$0xff]
        %v4423 = vld [vmem:[%s1482 + $0xc8] sm:$0xff]
        %v4424 = vld [vmem:[%s1482 + $0xd0] sm:$0xff]
        %v4425 = vld [vmem:[%s1482 + $0xd8] sm:$0xff]
        %v4426 = vld [vmem:[%s1482 + $0xe0] sm:$0xff]
        %v4427 = vld [vmem:[%s1482 + $0xe8] sm:$0xff]
        %v4428 = vld [vmem:[%s1482 + $0xf0] sm:$0xff]
        %v4429 = vld [vmem:[%s1482 + $0xf8] sm:$0xff]
        %v4430 = vld [vmem:[%s1755] sm:$0xf]
        %v4432 = vlaneseq
        %v4433 = vshrl.u32 %v4432, 7
        %v4434 = vsub.s32 0, %v4433
        %v4435 = vrot.slane %v4430, %v4434
        %v4436 = vlaneseq
        %v4437 = vshrl.u32 %v4436, 7
        %v4438 = vsub.s32 1, %v4437
        %v4439 = vrot.slane %v4430, %v4438
        %v4440 = vlaneseq
        %v4441 = vshrl.u32 %v4440, 7
        %v4442 = vsub.s32 2, %v4441
        %v4443 = vrot.slane %v4430, %v4442
        %v4444 = vlaneseq
        %v4445 = vshrl.u32 %v4444, 7
        %v4446 = vsub.s32 3, %v4445
        %v4447 = vrot.slane %v4430, %v4446
        %v4484 = vunpack.c.l.b16 %v4398
        %v4485 = vunpack.c.h.b16 %v4398
        %v4486 = vunpack.c.l.b16 %v4399
        %v4487 = vunpack.c.h.b16 %v4399
        %v4488 = vunpack.c.l.b16 %v4400
        %v4489 = vunpack.c.h.b16 %v4400
        %v4490 = vunpack.c.l.b16 %v4401
        %v4491 = vunpack.c.h.b16 %v4401
        %v4492 = vunpack.c.l.b16 %v4402
        %v4493 = vunpack.c.h.b16 %v4402
        %v4494 = vunpack.c.l.b16 %v4403
        %v4495 = vunpack.c.h.b16 %v4403
        %v4496 = vunpack.c.l.b16 %v4404
        %v4497 = vunpack.c.h.b16 %v4404
        %v4498 = vunpack.c.l.b16 %v4405
        %v4499 = vunpack.c.h.b16 %v4405
        %v4500 = vunpack.c.l.b16 %v4406
        %v4501 = vunpack.c.h.b16 %v4406
        %v4502 = vunpack.c.l.b16 %v4407
        %v4503 = vunpack.c.h.b16 %v4407
        %v4504 = vunpack.c.l.b16 %v4408
        %v4505 = vunpack.c.h.b16 %v4408
        %v4506 = vunpack.c.l.b16 %v4409
        %v4507 = vunpack.c.h.b16 %v4409
        %v4508 = vunpack.c.l.b16 %v4410
        %v4509 = vunpack.c.h.b16 %v4410
        %v4510 = vunpack.c.l.b16 %v4411
        %v4511 = vunpack.c.h.b16 %v4411
        %v4512 = vunpack.c.l.b16 %v4412
        %v4513 = vunpack.c.h.b16 %v4412
        %v4514 = vunpack.c.l.b16 %v4413
        %v4515 = vunpack.c.h.b16 %v4413
        %v4516 = vunpack.c.l.b16 %v4414
        %v4517 = vunpack.c.h.b16 %v4414
        %v4518 = vunpack.c.l.b16 %v4415
        %v4519 = vunpack.c.h.b16 %v4415
        %v4520 = vunpack.c.l.b16 %v4416
        %v4521 = vunpack.c.h.b16 %v4416
        %v4522 = vunpack.c.l.b16 %v4417
        %v4523 = vunpack.c.h.b16 %v4417
        %v4524 = vunpack.c.l.b16 %v4418
        %v4525 = vunpack.c.h.b16 %v4418
        %v4526 = vunpack.c.l.b16 %v4419
        %v4527 = vunpack.c.h.b16 %v4419
        %v4528 = vunpack.c.l.b16 %v4420
        %v4529 = vunpack.c.h.b16 %v4420
        %v4530 = vunpack.c.l.b16 %v4421
        %v4531 = vunpack.c.h.b16 %v4421
        %v4532 = vunpack.c.l.b16 %v4422
        %v4533 = vunpack.c.h.b16 %v4422
        %v4534 = vunpack.c.l.b16 %v4423
        %v4535 = vunpack.c.h.b16 %v4423
        %v4536 = vunpack.c.l.b16 %v4424
        %v4537 = vunpack.c.h.b16 %v4424
        %v4538 = vunpack.c.l.b16 %v4425
        %v4539 = vunpack.c.h.b16 %v4425
        %v4540 = vunpack.c.l.b16 %v4426
        %v4541 = vunpack.c.h.b16 %v4426
        %v4542 = vunpack.c.l.b16 %v4427
        %v4543 = vunpack.c.h.b16 %v4427
        %v4544 = vunpack.c.l.b16 %v4428
        %v4545 = vunpack.c.h.b16 %v4428
        %v4546 = vunpack.c.l.b16 %v4429
        %v4547 = vunpack.c.h.b16 %v4429
        %v4548 = vpack.c.b16 %v4488, %v4484
        %v4549 = vpack.c.b16 %v4489, %v4485
        %v4550 = vpack.c.b16 %v4490, %v4486
        %v4551 = vpack.c.b16 %v4491, %v4487
        %v4552 = vpack.c.b16 %v4496, %v4492
        %v4553 = vpack.c.b16 %v4497, %v4493
        %v4554 = vpack.c.b16 %v4498, %v4494
        %v4555 = vpack.c.b16 %v4499, %v4495
        %v4556 = vpack.c.b16 %v4504, %v4500
        %v4557 = vpack.c.b16 %v4505, %v4501
        %v4558 = vpack.c.b16 %v4506, %v4502
        %v4559 = vpack.c.b16 %v4507, %v4503
        %v4560 = vpack.c.b16 %v4512, %v4508
        %v4561 = vpack.c.b16 %v4513, %v4509
        %v4562 = vpack.c.b16 %v4514, %v4510
        %v4563 = vpack.c.b16 %v4515, %v4511
        %v4564 = vpack.c.b16 %v4520, %v4516
        %v4565 = vpack.c.b16 %v4521, %v4517
        %v4566 = vpack.c.b16 %v4522, %v4518
        %v4567 = vpack.c.b16 %v4523, %v4519
        %v4568 = vpack.c.b16 %v4528, %v4524
        %v4569 = vpack.c.b16 %v4529, %v4525
        %v4570 = vpack.c.b16 %v4530, %v4526
        %v4571 = vpack.c.b16 %v4531, %v4527
        %v4572 = vpack.c.b16 %v4536, %v4532
        %v4573 = vpack.c.b16 %v4537, %v4533
        %v4574 = vpack.c.b16 %v4538, %v4534
        %v4575 = vpack.c.b16 %v4539, %v4535
        %v4576 = vpack.c.b16 %v4544, %v4540
        %v4577 = vpack.c.b16 %v4545, %v4541
        %v4578 = vpack.c.b16 %v4546, %v4542
        %v4579 = vpack.c.b16 %v4547, %v4543
        %4612 = vmatprep.subr.bf16.mxu0 %v4549
        %4613 = vmatpush1.bf16.msra.mxu0 %v4548
        %4614 = vmatprep.subr.bf16.mxu0 %v4553
        %4615 = vmatpush1.bf16.msra.mxu0 %v4552
        %4616 = vmatprep.subr.bf16.mxu0 %v4557
        %4617 = vmatpush1.bf16.msra.mxu0 %v4556
        %4618 = vmatprep.subr.bf16.mxu0 %v4561
        %4619 = vmatpush1.bf16.msra.mxu0 %v4560
        %4620 = vmatprep.subr.bf16.mxu0 %v4565
        %4621 = vmatpush1.bf16.msra.mxu0 %v4564
        %4622 = vmatprep.subr.bf16.mxu0 %v4569
        %4623 = vmatpush1.bf16.msra.mxu0 %v4568
        %4624 = vmatprep.subr.bf16.mxu0 %v4573
        %4625 = vmatpush1.bf16.msra.mxu0 %v4572
        %4626 = vmatprep.subr.bf16.mxu0 %v4577
        %4627 = vmatpush1.bf16.msra.mxu0 %v4576
        %4628 = vmatprep.subr.bf16.mxu0 0
        %4629 = vmatpush1.bf16.msra.mxu0 0
        %4630 = vmatprep.subr.bf16.mxu0 0
        %4631 = vmatpush1.bf16.msra.mxu0 0
        %4632 = vmatprep.subr.bf16.mxu0 0
        %4633 = vmatpush1.bf16.msra.mxu0 0
        %4634 = vmatprep.subr.bf16.mxu0 0
        %4635 = vmatpush1.bf16.msra.mxu0 0
        %4636 = vmatprep.subr.bf16.mxu0 0
        %4637 = vmatpush1.bf16.msra.mxu0 0
        %4638 = vmatprep.subr.bf16.mxu0 0
        %4639 = vmatpush1.bf16.msra.mxu0 0
        %4640 = vmatprep.subr.bf16.mxu0 0
        %4641 = vmatpush1.bf16.msra.mxu0 0
        %4642 = vmatprep.subr.bf16.mxu0 0
        %4643 = vmatpush1.bf16.msra.mxu0 0
        %4644 = vmatprep.mubr.bf16.mxu0 0
        %4645 = vmatmul.mubr.bf16.gmra.mrb[0].mxu0 %v4397
        %v4646 = vpop.f32.mrb[0].mxu0
        %v4647 = vadd.f32 %v4435, %v4646
        %v4648 = vpop.f32.mrb[0].mxu0
        %v4649 = vadd.f32 %v4439, %v4648
        %v4650 = vpop.f32.mrb[0].mxu0
        %v4651 = vadd.f32 %v4435, %v4650
        %v4652 = vpop.f32.mrb[0].mxu0
        %v4653 = vadd.f32 %v4439, %v4652
        %4654 = vdwg.mxu0
        %4655 = vmatprep.subr.bf16.mxu0 %v4551
        %4656 = vmatpush1.bf16.msra.mxu0 %v4550
        %4657 = vmatprep.subr.bf16.mxu0 %v4555
        %4658 = vmatpush1.bf16.msra.mxu0 %v4554
        %4659 = vmatprep.subr.bf16.mxu0 %v4559
        %4660 = vmatpush1.bf16.msra.mxu0 %v4558
        %4661 = vmatprep.subr.bf16.mxu0 %v4563
        %4662 = vmatpush1.bf16.msra.mxu0 %v4562
        %4663 = vmatprep.subr.bf16.mxu0 %v4567
        %4664 = vmatpush1.bf16.msra.mxu0 %v4566
        %4665 = vmatprep.subr.bf16.mxu0 %v4571
        %4666 = vmatpush1.bf16.msra.mxu0 %v4570
        %4667 = vmatprep.subr.bf16.mxu0 %v4575
        %4668 = vmatpush1.bf16.msra.mxu0 %v4574
        %4669 = vmatprep.subr.bf16.mxu0 %v4579
        %4670 = vmatpush1.bf16.msra.mxu0 %v4578
        %4671 = vmatprep.subr.bf16.mxu0 0
        %4672 = vmatpush1.bf16.msra.mxu0 0
        %4673 = vmatprep.subr.bf16.mxu0 0
        %4674 = vmatpush1.bf16.msra.mxu0 0
        %4675 = vmatprep.subr.bf16.mxu0 0
        %4676 = vmatpush1.bf16.msra.mxu0 0
        %4677 = vmatprep.subr.bf16.mxu0 0
        %4678 = vmatpush1.bf16.msra.mxu0 0
        %4679 = vmatprep.subr.bf16.mxu0 0
        %4680 = vmatpush1.bf16.msra.mxu0 0
        %4681 = vmatprep.subr.bf16.mxu0 0
        %4682 = vmatpush1.bf16.msra.mxu0 0
        %4683 = vmatprep.subr.bf16.mxu0 0
        %4684 = vmatpush1.bf16.msra.mxu0 0
        %4685 = vmatprep.subr.bf16.mxu0 0
        %4686 = vmatpush1.bf16.msra.mxu0 0
        %4687 = vmatprep.mubr.bf16.mxu0 0
        %4688 = vmatmul.mubr.bf16.gmra.mrb[0].mxu0 %v4397
        %v4689 = vpop.f32.mrb[0].mxu0
        %v4690 = vadd.f32 %v4443, %v4689
        %v4691 = vpop.f32.mrb[0].mxu0
        %v4692 = vadd.f32 %v4447, %v4691
        %v4693 = vpop.f32.mrb[0].mxu0
        %v4694 = vadd.f32 %v4443, %v4693
        %v4695 = vpop.f32.mrb[0].mxu0
        %v4696 = vadd.f32 %v4447, %v4695
        %4697 = vdwg.mxu0
        %v4698 = vxor.u32 %v4647, 2147483648
        %v4699 = vxor.u32 %v4649, 2147483648
        %v4700 = vxor.u32 %v4690, 2147483648
        %v4701 = vxor.u32 %v4692, 2147483648
        %v4702 = vxor.u32 %v4651, 2147483648
        %v4703 = vxor.u32 %v4653, 2147483648
        %v4704 = vxor.u32 %v4694, 2147483648
        %v4705 = vxor.u32 %v4696, 2147483648
        %v4706 = vmul.f32 %v4698, 1.442695
        %v4707 = vpow.pop %v4706
        %v4708 = vmul.f32 %v4699, 1.442695
        %v4709 = vpow.pop %v4708
        %v4710 = vmul.f32 %v4700, 1.442695
        %v4711 = vpow.pop %v4710
        %v4712 = vmul.f32 %v4701, 1.442695
        %v4713 = vpow.pop %v4712
        %v4714 = vmul.f32 %v4702, 1.442695
        %v4715 = vpow.pop %v4714
        %v4716 = vmul.f32 %v4703, 1.442695
        %v4717 = vpow.pop %v4716
        %v4718 = vmul.f32 %v4704, 1.442695
        %v4719 = vpow.pop %v4718
        %v4720 = vmul.f32 %v4705, 1.442695
        %v4721 = vpow.pop %v4720
        %v4722 = vadd.f32 %v4707, 1.0
        %v4723 = vadd.f32 %v4709, 1.0
        %v4724 = vadd.f32 %v4711, 1.0
        %v4725 = vadd.f32 %v4713, 1.0
        %v4726 = vadd.f32 %v4715, 1.0
        %v4727 = vadd.f32 %v4717, 1.0
        %v4728 = vadd.f32 %v4719, 1.0
        %v4729 = vadd.f32 %v4721, 1.0
        %v4730 = vrcp.pop %v4722
        %v4731 = vmul.f32 1.0, %v4730
        %v4732 = vrcp.pop %v4723
        %v4733 = vmul.f32 1.0, %v4732
        %v4734 = vrcp.pop %v4724
        %v4735 = vmul.f32 1.0, %v4734
        %v4736 = vrcp.pop %v4725
        %v4737 = vmul.f32 1.0, %v4736
        %v4738 = vrcp.pop %v4726
        %v4739 = vmul.f32 1.0, %v4738
        %v4740 = vrcp.pop %v4727
        %v4741 = vmul.f32 1.0, %v4740
        %v4742 = vrcp.pop %v4728
        %v4743 = vmul.f32 1.0, %v4742
        %v4744 = vrcp.pop %v4729
        %v4745 = vmul.f32 1.0, %v4744
        %v4746 = vmul.f32 %v4647, %v4731
        %v4747 = vmul.f32 %v4649, %v4733
        %v4748 = vmul.f32 %v4690, %v4735
        %v4749 = vmul.f32 %v4692, %v4737
        %v4750 = vmul.f32 %v4651, %v4739
        %v4751 = vmul.f32 %v4653, %v4741
        %v4752 = vmul.f32 %v4694, %v4743
        %v4753 = vmul.f32 %v4696, %v4745
        %v4754 = vpack.c.bf16 %v4750, %v4746
        %v4755 = vpack.c.bf16 %v4751, %v4747
        %v4756 = vpack.c.bf16 %v4752, %v4748
        %v4757 = vpack.c.bf16 %v4753, %v4749
        %v4758 = vld [vmem:[%s1491] sm:$0xf]
        %v4759 = vld [vmem:[%s1491 + $0x4] sm:$0xf]
        %v4760 = vld [vmem:[%s1491 + $0x8] sm:$0xf]
        %v4761 = vld [vmem:[%s1491 + $0xc] sm:$0xf]
        %v4762 = vld [vmem:[%s1491 + $0x10] sm:$0xf]
        %v4763 = vld [vmem:[%s1491 + $0x14] sm:$0xf]
        %v4764 = vld [vmem:[%s1491 + $0x18] sm:$0xf]
        %v4765 = vld [vmem:[%s1491 + $0x1c] sm:$0xf]
        %v4766 = vld [vmem:[%s1491 + $0x20] sm:$0xf]
        %v4767 = vld [vmem:[%s1491 + $0x24] sm:$0xf]
        %v4768 = vld [vmem:[%s1491 + $0x28] sm:$0xf]
        %v4769 = vld [vmem:[%s1491 + $0x2c] sm:$0xf]
        %v4770 = vld [vmem:[%s1491 + $0x30] sm:$0xf]
        %v4771 = vld [vmem:[%s1491 + $0x34] sm:$0xf]
        %v4772 = vld [vmem:[%s1491 + $0x38] sm:$0xf]
        %v4773 = vld [vmem:[%s1491 + $0x3c] sm:$0xf]
        %v4774 = vld [vmem:[%s1491 + $0x40] sm:$0xf]
        %v4775 = vld [vmem:[%s1491 + $0x44] sm:$0xf]
        %v4776 = vld [vmem:[%s1491 + $0x48] sm:$0xf]
        %v4777 = vld [vmem:[%s1491 + $0x4c] sm:$0xf]
        %v4778 = vld [vmem:[%s1491 + $0x50] sm:$0xf]
        %v4779 = vld [vmem:[%s1491 + $0x54] sm:$0xf]
        %v4780 = vld [vmem:[%s1491 + $0x58] sm:$0xf]
        %v4781 = vld [vmem:[%s1491 + $0x5c] sm:$0xf]
        %v4782 = vld [vmem:[%s1491 + $0x60] sm:$0xf]
        %v4783 = vld [vmem:[%s1491 + $0x64] sm:$0xf]
        %v4784 = vld [vmem:[%s1491 + $0x68] sm:$0xf]
        %v4785 = vld [vmem:[%s1491 + $0x6c] sm:$0xf]
        %v4786 = vld [vmem:[%s1491 + $0x70] sm:$0xf]
        %v4787 = vld [vmem:[%s1491 + $0x74] sm:$0xf]
        %v4788 = vld [vmem:[%s1491 + $0x78] sm:$0xf]
        %v4789 = vld [vmem:[%s1491 + $0x7c] sm:$0xf]
        %v4790 = vld [vmem:[%s1491 + $0x80] sm:$0xf]
        %v4791 = vld [vmem:[%s1491 + $0x84] sm:$0xf]
        %v4792 = vld [vmem:[%s1491 + $0x88] sm:$0xf]
        %v4793 = vld [vmem:[%s1491 + $0x8c] sm:$0xf]
        %v4794 = vld [vmem:[%s1491 + $0x90] sm:$0xf]
        %v4795 = vld [vmem:[%s1491 + $0x94] sm:$0xf]
        %v4796 = vld [vmem:[%s1491 + $0x98] sm:$0xf]
        %v4797 = vld [vmem:[%s1491 + $0x9c] sm:$0xf]
        %v4798 = vld [vmem:[%s1491 + $0xa0] sm:$0xf]
        %v4799 = vld [vmem:[%s1491 + $0xa4] sm:$0xf]
        %v4800 = vld [vmem:[%s1491 + $0xa8] sm:$0xf]
        %v4801 = vld [vmem:[%s1491 + $0xac] sm:$0xf]
        %v4802 = vld [vmem:[%s1491 + $0xb0] sm:$0xf]
        %v4803 = vld [vmem:[%s1491 + $0xb4] sm:$0xf]
        %v4804 = vld [vmem:[%s1491 + $0xb8] sm:$0xf]
        %v4805 = vld [vmem:[%s1491 + $0xbc] sm:$0xf]
        %v4806 = vld [vmem:[%s1491 + $0xc0] sm:$0xf]
        %v4807 = vld [vmem:[%s1491 + $0xc4] sm:$0xf]
        %v4808 = vld [vmem:[%s1491 + $0xc8] sm:$0xf]
        %v4809 = vld [vmem:[%s1491 + $0xcc] sm:$0xf]
        %v4810 = vld [vmem:[%s1491 + $0xd0] sm:$0xf]
        %v4811 = vld [vmem:[%s1491 + $0xd4] sm:$0xf]
        %v4812 = vld [vmem:[%s1491 + $0xd8] sm:$0xf]
        %v4813 = vld [vmem:[%s1491 + $0xdc] sm:$0xf]
        %v4814 = vld [vmem:[%s1491 + $0xe0] sm:$0xf]
        %v4815 = vld [vmem:[%s1491 + $0xe4] sm:$0xf]
        %v4816 = vld [vmem:[%s1491 + $0xe8] sm:$0xf]
        %v4817 = vld [vmem:[%s1491 + $0xec] sm:$0xf]
        %v4818 = vld [vmem:[%s1491 + $0xf0] sm:$0xf]
        %v4819 = vld [vmem:[%s1491 + $0xf4] sm:$0xf]
        %v4820 = vld [vmem:[%s1491 + $0xf8] sm:$0xf]
        %v4821 = vld [vmem:[%s1491 + $0xfc] sm:$0xf]
        %v4822 = vld [vmem:[%s1758] sm:$0x1]
        %v4824 = vlaneseq
        %v4825 = vshrl.u32 %v4824, 7
        %v4826 = vsub.s32 0, %v4825
        %v4827 = vrot.slane %v4822, %v4826
        %v4893 = vunpack.c.l.b16 %v4758
        %v4894 = vunpack.c.l.b16 %v4759
        %v4895 = vunpack.c.l.b16 %v4760
        %v4896 = vunpack.c.l.b16 %v4761
        %v4897 = vunpack.c.l.b16 %v4762
        %v4898 = vunpack.c.l.b16 %v4763
        %v4899 = vunpack.c.l.b16 %v4764
        %v4900 = vunpack.c.l.b16 %v4765
        %v4901 = vunpack.c.l.b16 %v4766
        %v4902 = vunpack.c.l.b16 %v4767
        %v4903 = vunpack.c.l.b16 %v4768
        %v4904 = vunpack.c.l.b16 %v4769
        %v4905 = vunpack.c.l.b16 %v4770
        %v4906 = vunpack.c.l.b16 %v4771
        %v4907 = vunpack.c.l.b16 %v4772
        %v4908 = vunpack.c.l.b16 %v4773
        %v4909 = vunpack.c.l.b16 %v4774
        %v4910 = vunpack.c.l.b16 %v4775
        %v4911 = vunpack.c.l.b16 %v4776
        %v4912 = vunpack.c.l.b16 %v4777
        %v4913 = vunpack.c.l.b16 %v4778
        %v4914 = vunpack.c.l.b16 %v4779
        %v4915 = vunpack.c.l.b16 %v4780
        %v4916 = vunpack.c.l.b16 %v4781
        %v4917 = vunpack.c.l.b16 %v4782
        %v4918 = vunpack.c.l.b16 %v4783
        %v4919 = vunpack.c.l.b16 %v4784
        %v4920 = vunpack.c.l.b16 %v4785
        %v4921 = vunpack.c.l.b16 %v4786
        %v4922 = vunpack.c.l.b16 %v4787
        %v4923 = vunpack.c.l.b16 %v4788
        %v4924 = vunpack.c.l.b16 %v4789
        %v4925 = vunpack.c.l.b16 %v4790
        %v4926 = vunpack.c.l.b16 %v4791
        %v4927 = vunpack.c.l.b16 %v4792
        %v4928 = vunpack.c.l.b16 %v4793
        %v4929 = vunpack.c.l.b16 %v4794
        %v4930 = vunpack.c.l.b16 %v4795
        %v4931 = vunpack.c.l.b16 %v4796
        %v4932 = vunpack.c.l.b16 %v4797
        %v4933 = vunpack.c.l.b16 %v4798
        %v4934 = vunpack.c.l.b16 %v4799
        %v4935 = vunpack.c.l.b16 %v4800
        %v4936 = vunpack.c.l.b16 %v4801
        %v4937 = vunpack.c.l.b16 %v4802
        %v4938 = vunpack.c.l.b16 %v4803
        %v4939 = vunpack.c.l.b16 %v4804
        %v4940 = vunpack.c.l.b16 %v4805
        %v4941 = vunpack.c.l.b16 %v4806
        %v4942 = vunpack.c.l.b16 %v4807
        %v4943 = vunpack.c.l.b16 %v4808
        %v4944 = vunpack.c.l.b16 %v4809
        %v4945 = vunpack.c.l.b16 %v4810
        %v4946 = vunpack.c.l.b16 %v4811
        %v4947 = vunpack.c.l.b16 %v4812
        %v4948 = vunpack.c.l.b16 %v4813
        %v4949 = vunpack.c.l.b16 %v4814
        %v4950 = vunpack.c.l.b16 %v4815
        %v4951 = vunpack.c.l.b16 %v4816
        %v4952 = vunpack.c.l.b16 %v4817
        %v4953 = vunpack.c.l.b16 %v4818
        %v4954 = vunpack.c.l.b16 %v4819
        %v4955 = vunpack.c.l.b16 %v4820
        %v4956 = vunpack.c.l.b16 %v4821
        %v4957 = vpack.c.b16 %v4894, %v4893
        %v4958 = vpack.c.b16 %v4896, %v4895
        %v4959 = vpack.c.b16 %v4898, %v4897
        %v4960 = vpack.c.b16 %v4900, %v4899
        %v4961 = vpack.c.b16 %v4902, %v4901
        %v4962 = vpack.c.b16 %v4904, %v4903
        %v4963 = vpack.c.b16 %v4906, %v4905
        %v4964 = vpack.c.b16 %v4908, %v4907
        %v4965 = vpack.c.b16 %v4910, %v4909
        %v4966 = vpack.c.b16 %v4912, %v4911
        %v4967 = vpack.c.b16 %v4914, %v4913
        %v4968 = vpack.c.b16 %v4916, %v4915
        %v4969 = vpack.c.b16 %v4918, %v4917
        %v4970 = vpack.c.b16 %v4920, %v4919
        %v4971 = vpack.c.b16 %v4922, %v4921
        %v4972 = vpack.c.b16 %v4924, %v4923
        %v4973 = vpack.c.b16 %v4926, %v4925
        %v4974 = vpack.c.b16 %v4928, %v4927
        %v4975 = vpack.c.b16 %v4930, %v4929
        %v4976 = vpack.c.b16 %v4932, %v4931
        %v4977 = vpack.c.b16 %v4934, %v4933
        %v4978 = vpack.c.b16 %v4936, %v4935
        %v4979 = vpack.c.b16 %v4938, %v4937
        %v4980 = vpack.c.b16 %v4940, %v4939
        %v4981 = vpack.c.b16 %v4942, %v4941
        %v4982 = vpack.c.b16 %v4944, %v4943
        %v4983 = vpack.c.b16 %v4946, %v4945
        %v4984 = vpack.c.b16 %v4948, %v4947
        %v4985 = vpack.c.b16 %v4950, %v4949
        %v4986 = vpack.c.b16 %v4952, %v4951
        %v4987 = vpack.c.b16 %v4954, %v4953
        %v4988 = vpack.c.b16 %v4956, %v4955
        %5021 = vmatprep.subr.bf16.mxu0 0
        %5022 = vmatpush1.bf16.msra.mxu0 %v4957
        %5023 = vmatprep.subr.bf16.mxu0 0
        %5024 = vmatpush1.bf16.msra.mxu0 %v4958
        %5025 = vmatprep.subr.bf16.mxu0 0
        %5026 = vmatpush1.bf16.msra.mxu0 %v4959
        %5027 = vmatprep.subr.bf16.mxu0 0
        %5028 = vmatpush1.bf16.msra.mxu0 %v4960
        %5029 = vmatprep.subr.bf16.mxu0 0
        %5030 = vmatpush1.bf16.msra.mxu0 %v4961
        %5031 = vmatprep.subr.bf16.mxu0 0
        %5032 = vmatpush1.bf16.msra.mxu0 %v4962
        %5033 = vmatprep.subr.bf16.mxu0 0
        %5034 = vmatpush1.bf16.msra.mxu0 %v4963
        %5035 = vmatprep.subr.bf16.mxu0 0
        %5036 = vmatpush1.bf16.msra.mxu0 %v4964
        %5037 = vmatprep.subr.bf16.mxu0 0
        %5038 = vmatpush1.bf16.msra.mxu0 %v4965
        %5039 = vmatprep.subr.bf16.mxu0 0
        %5040 = vmatpush1.bf16.msra.mxu0 %v4966
        %5041 = vmatprep.subr.bf16.mxu0 0
        %5042 = vmatpush1.bf16.msra.mxu0 %v4967
        %5043 = vmatprep.subr.bf16.mxu0 0
        %5044 = vmatpush1.bf16.msra.mxu0 %v4968
        %5045 = vmatprep.subr.bf16.mxu0 0
        %5046 = vmatpush1.bf16.msra.mxu0 %v4969
        %5047 = vmatprep.subr.bf16.mxu0 0
        %5048 = vmatpush1.bf16.msra.mxu0 %v4970
        %5049 = vmatprep.subr.bf16.mxu0 0
        %5050 = vmatpush1.bf16.msra.mxu0 %v4971
        %5051 = vmatprep.subr.bf16.mxu0 0
        %5052 = vmatpush1.bf16.msra.mxu0 %v4972
        %5053 = vmatprep.mubr.bf16.mxu0 %v4755
        %5054 = vmatmul.mubr.bf16.gmra.mrb[0].mxu0 %v4754
        %v5055 = vpop.f32.mrb[0].mxu0
        %v5056 = vadd.f32 %v4827, %v5055
        %v5057 = vpop.f32.mrb[0].mxu0
        %v5058 = vpop.f32.mrb[0].mxu0
        %v5059 = vadd.f32 %v4827, %v5058
        %v5060 = vpop.f32.mrb[0].mxu0
        %5061 = vdwg.mxu0
        %5062 = vmatprep.subr.bf16.mxu0 0
        %5063 = vmatpush1.bf16.msra.mxu0 %v4973
        %5064 = vmatprep.subr.bf16.mxu0 0
        %5065 = vmatpush1.bf16.msra.mxu0 %v4974
        %5066 = vmatprep.subr.bf16.mxu0 0
        %5067 = vmatpush1.bf16.msra.mxu0 %v4975
        %5068 = vmatprep.subr.bf16.mxu0 0
        %5069 = vmatpush1.bf16.msra.mxu0 %v4976
        %5070 = vmatprep.subr.bf16.mxu0 0
        %5071 = vmatpush1.bf16.msra.mxu0 %v4977
        %5072 = vmatprep.subr.bf16.mxu0 0
        %5073 = vmatpush1.bf16.msra.mxu0 %v4978
        %5074 = vmatprep.subr.bf16.mxu0 0
        %5075 = vmatpush1.bf16.msra.mxu0 %v4979
        %5076 = vmatprep.subr.bf16.mxu0 0
        %5077 = vmatpush1.bf16.msra.mxu0 %v4980
        %5078 = vmatprep.subr.bf16.mxu0 0
        %5079 = vmatpush1.bf16.msra.mxu0 %v4981
        %5080 = vmatprep.subr.bf16.mxu0 0
        %5081 = vmatpush1.bf16.msra.mxu0 %v4982
        %5082 = vmatprep.subr.bf16.mxu0 0
        %5083 = vmatpush1.bf16.msra.mxu0 %v4983
        %5084 = vmatprep.subr.bf16.mxu0 0
        %5085 = vmatpush1.bf16.msra.mxu0 %v4984
        %5086 = vmatprep.subr.bf16.mxu0 0
        %5087 = vmatpush1.bf16.msra.mxu0 %v4985
        %5088 = vmatprep.subr.bf16.mxu0 0
        %5089 = vmatpush1.bf16.msra.mxu0 %v4986
        %5090 = vmatprep.subr.bf16.mxu0 0
        %5091 = vmatpush1.bf16.msra.mxu0 %v4987
        %5092 = vmatprep.subr.bf16.mxu0 0
        %5093 = vmatpush1.bf16.msra.mxu0 %v4988
        %5094 = vmatprep.mubr.bf16.mxu0 %v4757
        %5095 = vmatmul.mubr.bf16.gmra.mrb[0].mxu0 %v4756
        %v5096 = vpop.f32.mrb[0].mxu0
        %v5097 = vadd.f32 %v5056, %v5096
        %v5098 = vpop.f32.mrb[0].mxu0
        %v5099 = vpop.f32.mrb[0].mxu0
        %v5100 = vadd.f32 %v5059, %v5099
        %v5101 = vpop.f32.mrb[0].mxu0
        %5102 = vdwg.mxu0
        %v5103 = vmul.f32 %v5097, 0.5
        %v5104 = vmul.f32 %v5100, 0.5
        %v5105 = vadd.f32 %v4355, %v5103
        %v5106 = vadd.f32 %v4356, %v5104
        %5107 = vadd.xlane.f32.xlu0 %v5105
        %v5108 = vpop.xlane.xlu0 %5107
        %5109 = vadd.xlane.f32.xlu0 %v5106
        %v5110 = vpop.xlane.xlu0 %5109
        %v5111 = vmul.f32 %v5108, %v1803
        %v5112 = vmul.f32 %v5110, %v1803
        %v5113 = vsub.f32 %v5105, %v5111
        %v5114 = vsub.f32 %v5106, %v5112
        %v5115 = vmul.f32 %v5113, %v5113
        %v5116 = vmul.f32 %v5114, %v5114
        %5117 = vadd.xlane.f32.xlu0 %v5115
        %v5118 = vpop.xlane.xlu0 %5117
        %5119 = vadd.xlane.f32.xlu0 %v5116
        %v5120 = vpop.xlane.xlu0 %5119
        %v5121 = vmul.f32 %v5118, %v1803
        %v5122 = vmul.f32 %v5120, %v1803
        %v5123 = vadd.f32 %v5121, 1e-05
        %v5124 = vadd.f32 %v5122, 1e-05
        %v5125 = vrsqrt.pop %v5123
        %v5126 = vrsqrt.pop %v5124
        %v5127 = vmul.f32 %v5113, %v5125
        %v5128 = vmul.f32 %v5114, %v5126
        %v5129 = vld [vmem:[%s1499] sm:$0x1]
        %v5131 = vlaneseq
        %v5132 = vshrl.u32 %v5131, 7
        %v5133 = vsub.s32 0, %v5132
        %v5134 = vrot.slane %v5129, %v5133
        %v5136 = vmul.f32 %v5127, %v5134
        %v5137 = vmul.f32 %v5128, %v5134
        %v5138 = vld [vmem:[%s1507] sm:$0x1]
        %v5140 = vlaneseq
        %v5141 = vshrl.u32 %v5140, 7
        %v5142 = vsub.s32 0, %v5141
        %v5143 = vrot.slane %v5138, %v5142
        %v5145 = vadd.f32 %v5136, %v5143
        %v5146 = vadd.f32 %v5137, %v5143
        %5147 = vst [vmem:[#allocation2] sm:$0xff] %v5145
        %5148 = vst [vmem:[#allocation2 + $0x8] sm:$0xff] %v5146
        %p5149 = scmp.eq.s32.totalorder %s106, 1
        // Predicated region
        $region217: #{conformer_forward.1} parent=147 // pred_check
          %p5150 = pneg %p5149
        $region218: #{conformer_forward.1} parent=147 // pred_check_branch
          %5152 = sbr.rel (%p5150) target = $region220
        $region219: #{conformer_forward.1} parent=147 // pred_region
          %5153 = vst [vmem:[%s1763] sm:$0xff] %v5145
          %5154 = vst [vmem:[%s1763 + $0x8] sm:$0xff] %v5146
        $region220: #{conformer_forward.1} parent=147 // pred_fallthru
          _
        %s5155 = smul.u32 2, %s105
        %p5156 = scmp.lt.s32.totalorder %s5155, 1
        %s5157 = scalar_select %p5156, %s5155, 1
        %s5158 = smul.addr %s5157, 8
        %s5159 = scalar_lea.vmem %s65, %s5158
        // Predicated region
        $region221: #{conformer_forward.1} parent=147 // pred_check
          %p5160 = pneg %p953
        $region222: #{conformer_forward.1} parent=147 // pred_check_branch
          %5162 = sbr.rel (%p5160) target = $region224
        $region223: #{conformer_forward.1} parent=147 // pred_region
          %s5163 = smul.u32 2, %s105
        $region224: #{conformer_forward.1} parent=147 // pred_fallthru
          _
        // Predicated region
        $region225: #{conformer_forward.1} parent=147 // pred_check
          %p5164 = pneg %p953
        $region226: #{conformer_forward.1} parent=147 // pred_check_branch
          %5166 = sbr.rel (%p5164) target = $region228
        $region227: #{conformer_forward.1} parent=147 // pred_region
          %s5167 = smul.u32 2, %s105
          %p5168 = scmp.lt.s32.totalorder %s5167, 1
          %s5169 = scalar_select %p5168, %s5167, 1
          %s5170 = smul.addr %s5169, 8
          %s5171 = scalar_lea.vmem %s65, %s5170
        $region228: #{conformer_forward.1} parent=147 // pred_fallthru
          _
      $region148: #{conformer_forward.1} parent=5 // pred_fallthru
        _
      %p5172 = scmp.le.s32.totalorder 2, %s96
      // Predicated region
      $region229: #{conformer_forward.1} parent=5 // pred_check
        %p5173 = pneg %p5172
      $region230: #{conformer_forward.1} parent=5 // pred_check_branch
        %5175 = sbr.rel (%p5173) target = $region232
      $region231: #{conformer_forward.1} parent=5 // pred_region
        %s5176 = ssub.s32 %s96, 2
      $region232: #{conformer_forward.1} parent=5 // pred_fallthru
        _
    $region6: #{conformer_forward.1} parent=1 // loop_footer
      %s100 = sadd.s32 1, %s96
    $region7: #{conformer_forward.1} parent=1 // loop_footer_branch
      %95 = sbr.rel target = $region3
    $region8: #{conformer_forward.1} parent=1 // loop_exit
      _
    %5177 = vsyncpa [#allocation4], 1
    %s5178 = scalar_lea.sflag [#allocation4], 1
    %5179 = vsyncpa %s5178, 1
    %5180 = vsyncpa [#allocation8], 1
    %s5181 = scalar_lea.sflag [#allocation8], 1
    %5182 = vsyncpa %s5181, 1
    %5183 = vsyncpa [#allocation11], 1
    %s5184 = scalar_lea.sflag [#allocation11], 1
    %5185 = vsyncpa %s5184, 1
    %5186 = vsyncpa [#allocation14], 1
    %s5187 = scalar_lea.sflag [#allocation14], 1
    %5188 = vsyncpa %s5187, 1
    %5189 = vsyncpa [#allocation17], 1
    %s5190 = scalar_lea.sflag [#allocation17], 1
    %5191 = vsyncpa %s5190, 1
    %5192 = vsyncpa [#allocation20], 1
    %s5193 = scalar_lea.sflag [#allocation20], 1
    %5194 = vsyncpa %s5193, 1
    %5195 = vsyncpa [#allocation23], 1
    %s5196 = scalar_lea.sflag [#allocation23], 1
    %5197 = vsyncpa %s5196, 1
    %5198 = vsyncpa [#allocation26], 1
    %s5199 = scalar_lea.sflag [#allocation26], 1
    %5200 = vsyncpa %s5199, 1
    %5201 = vsyncpa [#allocation5], 1
    %s5202 = scalar_lea.sflag [#allocation5], 1
    %5203 = vsyncpa %s5202, 1

</llo_original>
